<compile_context>
chip_gen: v7x
topology: tpu7x:2x2x1
jax: 0.10.0
libtpu: 0.0.40
codegen_flags: <defaults>
</compile_context>

<pallas_src>
import functools

import jax
import jax.numpy as jnp
from jax import lax
from jax.experimental import pallas as pl
from jax.experimental.pallas import tpu as pltpu

_BN_EPS = 1e-5


def _round_up(x, m):
    return (x + m - 1) // m * m


def _vmem_limit_bytes(estimate_bytes):
    """Pick a VMEM scoped limit from the device capacity (v5e/v6e 128MiB, v7x 64MiB)."""
    cap = 128 * 1024 * 1024
    try:
        info = pltpu.get_tpu_info()
        cap = int(getattr(info, "vmem_capacity_bytes", cap) or cap)
    except Exception:
        pass
    want = max(32 * 1024 * 1024, 2 * int(estimate_bytes))
    return int(min(want, cap * 3 // 4))


# ---------------------------------------------------------------------------
# Pass 1: grouped conv (tap-decomposed MXU matmuls) + per-(g, n) BN statistics
# ---------------------------------------------------------------------------
def _make_conv_stats_kernel(KH, KW, Wp, M_v, stride, Cr):
    T = KH * KW

    def kernel(x_ref, w_ref, mask_ref, y_ref, psum_ref, pssq_ref, acc_ref):
        # x_ref:    (1, 1, Lp, Cin_gp)  bf16  flat zero-padded image of (group g, image n)
        # w_ref:    (1, T, Cin_gp, Cgp) bf16  per-tap weights of group g
        # mask_ref: (M_v, 1)            f32   1.0 on valid virtual rows, 0.0 on garbage
        # y_ref:    (1, 1, M_v, Cr)     bf16  conv output (virtual-row layout, Cr lanes)
        # psum_ref: (1, 1, 1, Cgp)      f32   per-(g, n) channel sum
        # pssq_ref: (1, 1, 1, Cgp)      f32   per-(g, n) channel sum of squares
        # acc_ref:  (M_v, Cgp)          f32   VMEM accumulator across taps
        for t in range(T):
            kh, kw = divmod(t, KW)
            start = kh * Wp + kw                      # static flat-shift of this tap
            if stride == 1:
                rows = pl.ds(start, M_v)
            else:
                rows = pl.ds(start, M_v, stride)      # strided sublane read for s > 1
            xt = x_ref[0, 0, rows, :]                 # (M_v, Cin_gp) bf16
            part = jnp.dot(xt, w_ref[0, t], preferred_element_type=jnp.float32)
            if t == 0:
                acc_ref[...] = part
            else:
                acc_ref[...] += part

        yb = acc_ref[...].astype(jnp.bfloat16)        # bf16 y intermediate (review #2)
        y_ref[0, 0] = yb[:, :Cr]                      # store only the valid-ish lanes
        # Stats in f32 from the same bf16-rounded values that get normalized later;
        # garbage virtual rows (wrap-around columns / row padding) are masked out.
        yf = yb.astype(jnp.float32) * mask_ref[...]
        psum_ref[0, 0] = jnp.sum(yf, axis=0, keepdims=True)
        pssq_ref[0, 0] = jnp.sum(yf * yf, axis=0, keepdims=True)

    return kernel


def conv_block(x_nchw, weight, gamma, beta, *, stride, padding, groups=1):
    """Pallas ConvBlock forward. x_nchw: (N, Cin, H, W); weight: (Cout, Cin//groups, KH, KW)."""
    N, Cin, H, W = x_nchw.shape
    Cout, Cin_g, KH, KW = weight.shape
    G = groups
    assert Cin % G == 0 and Cout % G == 0 and Cin_g == Cin // G
    s, p = int(stride), int(padding)
    Hp, Wp = H + 2 * p, W + 2 * p
    OH = (Hp - KH) // s + 1
    OW = (Wp - KW) // s + 1
    assert OH > 0 and OW > 0
    Cg = Cout // G

    # Derived / padded sizes.
    Cin_gp = _round_up(Cin_g, 8)            # tap contraction dim (small K is intended)
    Cgp = _round_up(Cg, 128)                # lane-dense MXU output dim
    Cr = min(Cgp, _round_up(Cg, 8))         # lanes actually stored to HBM for y
    T = KH * KW
    M_v = _round_up(OH * Wp, 16)            # virtual rows: OH rows of width Wp (OW valid)
    max_shift = (KH - 1) * Wp + (KW - 1)
    Lp = _round_up(max(Hp * Wp, max_shift + s * (M_v - 1) + 1), 16)

    # ---- cheap wrapper-side layout prep (bf16 up front, jnp.pad only) ---------------
    xb = jnp.transpose(x_nchw.astype(jnp.bfloat16), (0, 2, 3, 1))            # (N,H,W,Cin)
    xb = jnp.pad(xb, ((0, 0), (p, p), (p, p), (0, 0)))                       # (N,Hp,Wp,Cin)
    xb = xb.reshape(N, Hp, Wp, G, Cin_g).transpose(3, 0, 1, 2, 4)            # (G,N,Hp,Wp,Cin_g)
    xflat = xb.reshape(G, N, Hp * Wp, Cin_g)
    xflat = jnp.pad(xflat, ((0, 0), (0, 0), (0, Lp - Hp * Wp), (0, Cin_gp - Cin_g)))

    wt = weight.astype(jnp.bfloat16).reshape(G, Cg, Cin_g, KH, KW)
    wt = jnp.transpose(wt, (0, 3, 4, 2, 1)).reshape(G, T, Cin_g, Cg)         # (G,T,Cin_g,Cg)
    wt = jnp.pad(wt, ((0, 0), (0, 0), (0, Cin_gp - Cin_g), (0, Cgp - Cg)))

    jv = jnp.arange(M_v, dtype=jnp.int32)
    mask = (((jv % Wp) < OW) & ((jv // Wp) < OH)).astype(jnp.float32).reshape(M_v, 1)

    # ---- Pass 1 (Pallas): grouped conv + per-(g, n) BN partial statistics -----------
    kernel = _make_conv_stats_kernel(KH, KW, Wp, M_v, s, Cr)
    lane = lambda c: _round_up(max(c, 1), 128)
    est_vmem = (2 * (Lp * lane(Cin_gp) * 2 + T * _round_up(Cin_gp, 16) * Cgp * 2
                     + M_v * lane(1) * 4 + M_v * lane(Cr) * 2)
                + M_v * Cgp * 4 + (1 << 20))
    cost = pl.CostEstimate(
        flops=2 * G * N * T * M_v * Cin_gp * Cgp,
        transcendentals=0,
        bytes_accessed=(G * N * Lp * Cin_gp * 2 + G * T * Cin_gp * Cgp * 2
                        + G * N * M_v * Cr * 2 + 2 * G * N * Cgp * 4),
    )

    y_pad, psum, pssq = pl.pallas_call(
        kernel,
        grid=(G, N),
        in_specs=[
            pl.BlockSpec((1, 1, Lp, Cin_gp), lambda g, n: (g, n, 0, 0)),
            pl.BlockSpec((1, T, Cin_gp, Cgp), lambda g, n: (g, 0, 0, 0)),
            pl.BlockSpec((M_v, 1), lambda g, n: (0, 0)),
        ],
        out_specs=[
            pl.BlockSpec((1, 1, M_v, Cr), lambda g, n: (g, n, 0, 0)),
            pl.BlockSpec((1, 1, 1, Cgp), lambda g, n: (g, n, 0, 0)),
            pl.BlockSpec((1, 1, 1, Cgp), lambda g, n: (g, n, 0, 0)),
        ],
        out_shape=(
            jax.ShapeDtypeStruct((G, N, M_v, Cr), jnp.bfloat16),
            jax.ShapeDtypeStruct((G, N, 1, Cgp), jnp.float32),
            jax.ShapeDtypeStruct((G, N, 1, Cgp), jnp.float32),
        ),
        scratch_shapes=[pltpu.VMEM((M_v, Cgp), jnp.float32)],
        compiler_params=pltpu.CompilerParams(
            dimension_semantics=("parallel", "parallel"),
            vmem_limit_bytes=_vmem_limit_bytes(est_vmem),
        ),
        cost_estimate=cost,
    )(xflat, wt, mask)

    # ---- Fold BN (batch stats, biased var, eps) with gamma/beta into scale/shift ----
    cnt = jnp.float32(N * OH * OW)
    sum_c = jnp.sum(psum[:, :, 0, :Cg], axis=1)              # (G, Cg) f32
    ssq_c = jnp.sum(pssq[:, :, 0, :Cg], axis=1)
    mean = sum_c / cnt
    var = jnp.maximum(ssq_c / cnt - mean * mean, 0.0)
    inv = lax.rsqrt(var + _BN_EPS)
    gamma_g = gamma.astype(jnp.float32).reshape(G, Cg)
    beta_g = beta.astype(jnp.float32).reshape(G, Cg)
    scale = gamma_g * inv                                    # (G, Cg)
    shift = beta_g - mean * scale

    # ---- Tail: one fused XLA elementwise pass over bf16 y: BN apply + SiLU +
    #      valid-column / channel extraction + NCHW layout restore (review item 8) ----
    yv = y_pad[:, :, :OH * Wp, :Cg].reshape(G, N, OH, Wp, Cg)[:, :, :, :OW, :]
    z = (yv.astype(jnp.float32) * scale[:, None, None, None, :]
         + shift[:, None, None, None, :])
    z = z * jax.nn.sigmoid(z)
    out = jnp.transpose(z, (1, 0, 4, 2, 3)).reshape(N, Cout, OH, OW)
    return out


# ---------------------------------------------------------------------------
# Pure-JAX reference mirroring PyTorch ConvBlock.forward (train-mode BN).
# ---------------------------------------------------------------------------
def _reference(x_nchw, weight, gamma, beta, *, stride, padding, groups=1,
               conv_dtype=jnp.float32, round_y_to_bf16=False):
    y = lax.conv_general_dilated(
        x_nchw.astype(conv_dtype), weight.astype(conv_dtype),
        window_strides=(stride, stride),
        padding=((padding, padding), (padding, padding)),
        dimension_numbers=("NCHW", "OIHW", "NCHW"),
        feature_group_count=groups,
        preferred_element_type=jnp.float32)
    if round_y_to_bf16:
        y = y.astype(jnp.bfloat16).astype(jnp.float32)
    mean = jnp.mean(y, axis=(0, 2, 3), keepdims=True)
    var = jnp.mean(jnp.square(y - mean), axis=(0, 2, 3), keepdims=True)
    z = (y - mean) * lax.rsqrt(var + _BN_EPS)
    z = z * gamma.reshape(1, -1, 1, 1) + beta.reshape(1, -1, 1, 1)
    return z * jax.nn.sigmoid(z)


if __name__ == "__main__":
    def run_case(N, Cin, H, W, Cout, K, stride, padding, groups, key):
        kx, kw, kg, kb = jax.random.split(key, 4)
        x = jax.random.normal(kx, (N, Cin, H, W), dtype=jnp.float32)
        fan_in = (Cin // groups) * K * K
        weight = jax.random.normal(kw, (Cout, Cin // groups, K, K),
                                   dtype=jnp.float32) / jnp.sqrt(fan_in)
        gamma = 0.5 + jax.random.uniform(kg, (Cout,), dtype=jnp.float32)   # BN weight
        beta = 0.1 * jax.random.normal(kb, (Cout,), dtype=jnp.float32)     # BN bias

        fn = jax.jit(functools.partial(conv_block, stride=stride, padding=padding,
                                       groups=groups))
        out = jax.block_until_ready(fn(x, weight, gamma, beta))
        OH = (H + 2 * padding - K) // stride + 1
        OW = (W + 2 * padding - K) // stride + 1
        assert out.shape == (N, Cout, OH, OW)

        # Tight check vs a reference in the same rounding regime (bf16 conv operands,
        # conv output rounded to bf16 before BN), loose check vs the full-f32 reference.
        ref_b = _reference(x, weight, gamma, beta, stride=stride, padding=padding,
                           groups=groups, conv_dtype=jnp.bfloat16, round_y_to_bf16=True)
        ref_f = _reference(x, weight, gamma, beta, stride=stride, padding=padding,
                           groups=groups, conv_dtype=jnp.float32)
        assert jnp.allclose(out, ref_b, rtol=1e-2, atol=1e-2), "mismatch vs bf16 reference"
        assert jnp.allclose(out, ref_f, rtol=5e-2, atol=5e-2), "mismatch vs f32 reference"

    key = jax.random.PRNGKey(0)
    k1, k2 = jax.random.split(key)
    # ConvBlock(4 -> 8, k=3, s=1, p=1, groups=1)
    run_case(2, 4, 16, 16, 8, 3, 1, 1, 1, k1)
    # Grouped ConvBlock(4 -> 8, k=3, s=1, p=1, groups=2) — exercises the group axis.
    run_case(2, 4, 16, 16, 8, 3, 1, 1, 2, k2)
    print("KERNEL_OK")
</pallas_src>

<mosaic_0001>
module attributes {stable_mosaic.version = 11 : i64} {
  func.func @kernel(%arg0: i32, %arg1: i32, %arg2: memref<1x1x336x8xbf16, #tpu.memory_space<vmem>>, %arg3: memref<1x9x8x128xbf16, #tpu.memory_space<vmem>>, %arg4: memref<288x1xf32, #tpu.memory_space<vmem>>, %arg5: memref<1x1x288x8xbf16, #tpu.memory_space<vmem>>, %arg6: memref<1x1x1x128xf32, #tpu.memory_space<vmem>>, %arg7: memref<1x1x1x128xf32, #tpu.memory_space<vmem>>, %arg8: memref<288x128xf32, #tpu.memory_space<vmem>>) attributes {dimension_semantics = [#tpu.dimension_semantics<parallel>, #tpu.dimension_semantics<parallel>], iteration_bounds = array<i64: 1, 2>, scalar_prefetch = 0 : i64, scratch_operands = 1 : i64, tpu.core_type = #tpu.core_type<tc>, window_params = [{transform_indices = @transform_0, window_bounds = array<i64: 1, 1, 336, 8>}, {transform_indices = @transform_1, window_bounds = array<i64: 1, 9, 8, 128>}, {pipeline_mode = #tpu.pipeline_mode<synchronous>, transform_indices = @transform_2, window_bounds = array<i64: 288, 1>}, {transform_indices = @transform_3, window_bounds = array<i64: 1, 1, 288, 8>}, {transform_indices = @transform_4, window_bounds = array<i64: 1, 1, 1, 128>}, {transform_indices = @transform_5, window_bounds = array<i64: 1, 1, 1, 128>}]} {
    %c0 = arith.constant 0 : index
    %c0_0 = arith.constant 0 : index
    %c0_1 = arith.constant 0 : index
    %c0_2 = arith.constant 0 : index
    %0 = vector.load %arg2[%c0, %c0_0, %c0_1, %c0_2] : memref<1x1x336x8xbf16, #tpu.memory_space<vmem>>, vector<1x1x288x8xbf16>
    %1 = vector.shape_cast %0 : vector<1x1x288x8xbf16> to vector<288x8xbf16>
    %c0_3 = arith.constant 0 : index
    %c0_4 = arith.constant 0 : index
    %c0_5 = arith.constant 0 : index
    %c0_6 = arith.constant 0 : index
    %2 = vector.load %arg3[%c0_3, %c0_4, %c0_5, %c0_6] : memref<1x9x8x128xbf16, #tpu.memory_space<vmem>>, vector<1x1x8x128xbf16>
    %3 = vector.shape_cast %2 : vector<1x1x8x128xbf16> to vector<8x128xbf16>
    %cst = arith.constant dense<0.000000e+00> : vector<288x128xf32>
    %4 = tpu.matmul %1, %3, %cst {dimension_numbers = #tpu.dot_dimension_numbers<[1], [0], [0], [1], [0, 0, 1, 1], [], []>} : vector<288x8xbf16>, vector<8x128xbf16>, vector<288x128xf32> -> vector<288x128xf32>
    %c0_7 = arith.constant 0 : index
    %c0_8 = arith.constant 0 : index
    %5 = vector.load %arg8[%c0_7, %c0_8] : memref<288x128xf32, #tpu.memory_space<vmem>>, vector<288x128xf32>
    tpu.vector_store %arg8[%c0_7, %c0_8], %4 {strides = array<i32>} : memref<288x128xf32, #tpu.memory_space<vmem>>, vector<288x128xf32>,
    %c0_9 = arith.constant 0 : index
    %c0_10 = arith.constant 0 : index
    %c1 = arith.constant 1 : index
    %c0_11 = arith.constant 0 : index
    %6 = vector.load %arg2[%c0_9, %c0_10, %c1, %c0_11] : memref<1x1x336x8xbf16, #tpu.memory_space<vmem>>, vector<1x1x288x8xbf16>
    %7 = vector.shape_cast %6 : vector<1x1x288x8xbf16> to vector<288x8xbf16>
    %c0_12 = arith.constant 0 : index
    %c1_13 = arith.constant 1 : index
    %c0_14 = arith.constant 0 : index
    %c0_15 = arith.constant 0 : index
    %8 = vector.load %arg3[%c0_12, %c1_13, %c0_14, %c0_15] : memref<1x9x8x128xbf16, #tpu.memory_space<vmem>>, vector<1x1x8x128xbf16>
    %9 = vector.shape_cast %8 : vector<1x1x8x128xbf16> to vector<8x128xbf16>
    %cst_16 = arith.constant dense<0.000000e+00> : vector<288x128xf32>
    %10 = tpu.matmul %7, %9, %cst_16 {dimension_numbers = #tpu.dot_dimension_numbers<[1], [0], [0], [1], [0, 0, 1, 1], [], []>} : vector<288x8xbf16>, vector<8x128xbf16>, vector<288x128xf32> -> vector<288x128xf32>
    %c0_17 = arith.constant 0 : index
    %c0_18 = arith.constant 0 : index
    %11 = vector.load %arg8[%c0_17, %c0_18] : memref<288x128xf32, #tpu.memory_space<vmem>>, vector<288x128xf32>
    %12 = arith.addf %11, %10 : vector<288x128xf32>
    %c0_19 = arith.constant 0 : index
    %c0_20 = arith.constant 0 : index
    %13 = vector.load %arg8[%c0_19, %c0_20] : memref<288x128xf32, #tpu.memory_space<vmem>>, vector<288x128xf32>
    tpu.vector_store %arg8[%c0_19, %c0_20], %12 {strides = array<i32>} : memref<288x128xf32, #tpu.memory_space<vmem>>, vector<288x128xf32>,
    %c0_21 = arith.constant 0 : index
    %c0_22 = arith.constant 0 : index
    %c2 = arith.constant 2 : index
    %c0_23 = arith.constant 0 : index
    %14 = vector.load %arg2[%c0_21, %c0_22, %c2, %c0_23] : memref<1x1x336x8xbf16, #tpu.memory_space<vmem>>, vector<1x1x288x8xbf16>
    %15 = vector.shape_cast %14 : vector<1x1x288x8xbf16> to vector<288x8xbf16>
    %c0_24 = arith.constant 0 : index
    %c2_25 = arith.constant 2 : index
    %c0_26 = arith.constant 0 : index
    %c0_27 = arith.constant 0 : index
    %16 = vector.load %arg3[%c0_24, %c2_25, %c0_26, %c0_27] : memref<1x9x8x128xbf16, #tpu.memory_space<vmem>>, vector<1x1x8x128xbf16>
    %17 = vector.shape_cast %16 : vector<1x1x8x128xbf16> to vector<8x128xbf16>
    %cst_28 = arith.constant dense<0.000000e+00> : vector<288x128xf32>
    %18 = tpu.matmul %15, %17, %cst_28 {dimension_numbers = #tpu.dot_dimension_numbers<[1], [0], [0], [1], [0, 0, 1, 1], [], []>} : vector<288x8xbf16>, vector<8x128xbf16>, vector<288x128xf32> -> vector<288x128xf32>
    %c0_29 = arith.constant 0 : index
    %c0_30 = arith.constant 0 : index
    %19 = vector.load %arg8[%c0_29, %c0_30] : memref<288x128xf32, #tpu.memory_space<vmem>>, vector<288x128xf32>
    %20 = arith.addf %19, %18 : vector<288x128xf32>
    %c0_31 = arith.constant 0 : index
    %c0_32 = arith.constant 0 : index
    %21 = vector.load %arg8[%c0_31, %c0_32] : memref<288x128xf32, #tpu.memory_space<vmem>>, vector<288x128xf32>
    tpu.vector_store %arg8[%c0_31, %c0_32], %20 {strides = array<i32>} : memref<288x128xf32, #tpu.memory_space<vmem>>, vector<288x128xf32>,
    %c0_33 = arith.constant 0 : index
    %c0_34 = arith.constant 0 : index
    %c18 = arith.constant 18 : index
    %c0_35 = arith.constant 0 : index
    %22 = vector.load %arg2[%c0_33, %c0_34, %c18, %c0_35] : memref<1x1x336x8xbf16, #tpu.memory_space<vmem>>, vector<1x1x288x8xbf16>
    %23 = vector.shape_cast %22 : vector<1x1x288x8xbf16> to vector<288x8xbf16>
    %c0_36 = arith.constant 0 : index
    %c3 = arith.constant 3 : index
    %c0_37 = arith.constant 0 : index
    %c0_38 = arith.constant 0 : index
    %24 = vector.load %arg3[%c0_36, %c3, %c0_37, %c0_38] : memref<1x9x8x128xbf16, #tpu.memory_space<vmem>>, vector<1x1x8x128xbf16>
    %25 = vector.shape_cast %24 : vector<1x1x8x128xbf16> to vector<8x128xbf16>
    %cst_39 = arith.constant dense<0.000000e+00> : vector<288x128xf32>
    %26 = tpu.matmul %23, %25, %cst_39 {dimension_numbers = #tpu.dot_dimension_numbers<[1], [0], [0], [1], [0, 0, 1, 1], [], []>} : vector<288x8xbf16>, vector<8x128xbf16>, vector<288x128xf32> -> vector<288x128xf32>
    %c0_40 = arith.constant 0 : index
    %c0_41 = arith.constant 0 : index
    %27 = vector.load %arg8[%c0_40, %c0_41] : memref<288x128xf32, #tpu.memory_space<vmem>>, vector<288x128xf32>
    %28 = arith.addf %27, %26 : vector<288x128xf32>
    %c0_42 = arith.constant 0 : index
    %c0_43 = arith.constant 0 : index
    %29 = vector.load %arg8[%c0_42, %c0_43] : memref<288x128xf32, #tpu.memory_space<vmem>>, vector<288x128xf32>
    tpu.vector_store %arg8[%c0_42, %c0_43], %28 {strides = array<i32>} : memref<288x128xf32, #tpu.memory_space<vmem>>, vector<288x128xf32>,
    %c0_44 = arith.constant 0 : index
    %c0_45 = arith.constant 0 : index
    %c19 = arith.constant 19 : index
    %c0_46 = arith.constant 0 : index
    %30 = vector.load %arg2[%c0_44, %c0_45, %c19, %c0_46] : memref<1x1x336x8xbf16, #tpu.memory_space<vmem>>, vector<1x1x288x8xbf16>
    %31 = vector.shape_cast %30 : vector<1x1x288x8xbf16> to vector<288x8xbf16>
    %c0_47 = arith.constant 0 : index
    %c4 = arith.constant 4 : index
    %c0_48 = arith.constant 0 : index
    %c0_49 = arith.constant 0 : index
    %32 = vector.load %arg3[%c0_47, %c4, %c0_48, %c0_49] : memref<1x9x8x128xbf16, #tpu.memory_space<vmem>>, vector<1x1x8x128xbf16>
    %33 = vector.shape_cast %32 : vector<1x1x8x128xbf16> to vector<8x128xbf16>
    %cst_50 = arith.constant dense<0.000000e+00> : vector<288x128xf32>
    %34 = tpu.matmul %31, %33, %cst_50 {dimension_numbers = #tpu.dot_dimension_numbers<[1], [0], [0], [1], [0, 0, 1, 1], [], []>} : vector<288x8xbf16>, vector<8x128xbf16>, vector<288x128xf32> -> vector<288x128xf32>
    %c0_51 = arith.constant 0 : index
    %c0_52 = arith.constant 0 : index
    %35 = vector.load %arg8[%c0_51, %c0_52] : memref<288x128xf32, #tpu.memory_space<vmem>>, vector<288x128xf32>
    %36 = arith.addf %35, %34 : vector<288x128xf32>
    %c0_53 = arith.constant 0 : index
    %c0_54 = arith.constant 0 : index
    %37 = vector.load %arg8[%c0_53, %c0_54] : memref<288x128xf32, #tpu.memory_space<vmem>>, vector<288x128xf32>
    tpu.vector_store %arg8[%c0_53, %c0_54], %36 {strides = array<i32>} : memref<288x128xf32, #tpu.memory_space<vmem>>, vector<288x128xf32>,
    %c0_55 = arith.constant 0 : index
    %c0_56 = arith.constant 0 : index
    %c20 = arith.constant 20 : index
    %c0_57 = arith.constant 0 : index
    %38 = vector.load %arg2[%c0_55, %c0_56, %c20, %c0_57] : memref<1x1x336x8xbf16, #tpu.memory_space<vmem>>, vector<1x1x288x8xbf16>
    %39 = vector.shape_cast %38 : vector<1x1x288x8xbf16> to vector<288x8xbf16>
    %c0_58 = arith.constant 0 : index
    %c5 = arith.constant 5 : index
    %c0_59 = arith.constant 0 : index
    %c0_60 = arith.constant 0 : index
    %40 = vector.load %arg3[%c0_58, %c5, %c0_59, %c0_60] : memref<1x9x8x128xbf16, #tpu.memory_space<vmem>>, vector<1x1x8x128xbf16>
    %41 = vector.shape_cast %40 : vector<1x1x8x128xbf16> to vector<8x128xbf16>
    %cst_61 = arith.constant dense<0.000000e+00> : vector<288x128xf32>
    %42 = tpu.matmul %39, %41, %cst_61 {dimension_numbers = #tpu.dot_dimension_numbers<[1], [0], [0], [1], [0, 0, 1, 1], [], []>} : vector<288x8xbf16>, vector<8x128xbf16>, vector<288x128xf32> -> vector<288x128xf32>
    %c0_62 = arith.constant 0 : index
    %c0_63 = arith.constant 0 : index
    %43 = vector.load %arg8[%c0_62, %c0_63] : memref<288x128xf32, #tpu.memory_space<vmem>>, vector<288x128xf32>
    %44 = arith.addf %43, %42 : vector<288x128xf32>
    %c0_64 = arith.constant 0 : index
    %c0_65 = arith.constant 0 : index
    %45 = vector.load %arg8[%c0_64, %c0_65] : memref<288x128xf32, #tpu.memory_space<vmem>>, vector<288x128xf32>
    tpu.vector_store %arg8[%c0_64, %c0_65], %44 {strides = array<i32>} : memref<288x128xf32, #tpu.memory_space<vmem>>, vector<288x128xf32>,
    %c0_66 = arith.constant 0 : index
    %c0_67 = arith.constant 0 : index
    %c36 = arith.constant 36 : index
    %c0_68 = arith.constant 0 : index
    %46 = vector.load %arg2[%c0_66, %c0_67, %c36, %c0_68] : memref<1x1x336x8xbf16, #tpu.memory_space<vmem>>, vector<1x1x288x8xbf16>
    %47 = vector.shape_cast %46 : vector<1x1x288x8xbf16> to vector<288x8xbf16>
    %c0_69 = arith.constant 0 : index
    %c6 = arith.constant 6 : index
    %c0_70 = arith.constant 0 : index
    %c0_71 = arith.constant 0 : index
    %48 = vector.load %arg3[%c0_69, %c6, %c0_70, %c0_71] : memref<1x9x8x128xbf16, #tpu.memory_space<vmem>>, vector<1x1x8x128xbf16>
    %49 = vector.shape_cast %48 : vector<1x1x8x128xbf16> to vector<8x128xbf16>
    %cst_72 = arith.constant dense<0.000000e+00> : vector<288x128xf32>
    %50 = tpu.matmul %47, %49, %cst_72 {dimension_numbers = #tpu.dot_dimension_numbers<[1], [0], [0], [1], [0, 0, 1, 1], [], []>} : vector<288x8xbf16>, vector<8x128xbf16>, vector<288x128xf32> -> vector<288x128xf32>
    %c0_73 = arith.constant 0 : index
    %c0_74 = arith.constant 0 : index
    %51 = vector.load %arg8[%c0_73, %c0_74] : memref<288x128xf32, #tpu.memory_space<vmem>>, vector<288x128xf32>
    %52 = arith.addf %51, %50 : vector<288x128xf32>
    %c0_75 = arith.constant 0 : index
    %c0_76 = arith.constant 0 : index
    %53 = vector.load %arg8[%c0_75, %c0_76] : memref<288x128xf32, #tpu.memory_space<vmem>>, vector<288x128xf32>
    tpu.vector_store %arg8[%c0_75, %c0_76], %52 {strides = array<i32>} : memref<288x128xf32, #tpu.memory_space<vmem>>, vector<288x128xf32>,
    %c0_77 = arith.constant 0 : index
    %c0_78 = arith.constant 0 : index
    %c37 = arith.constant 37 : index
    %c0_79 = arith.constant 0 : index
    %54 = vector.load %arg2[%c0_77, %c0_78, %c37, %c0_79] : memref<1x1x336x8xbf16, #tpu.memory_space<vmem>>, vector<1x1x288x8xbf16>
    %55 = vector.shape_cast %54 : vector<1x1x288x8xbf16> to vector<288x8xbf16>
    %c0_80 = arith.constant 0 : index
    %c7 = arith.constant 7 : index
    %c0_81 = arith.constant 0 : index
    %c0_82 = arith.constant 0 : index
    %56 = vector.load %arg3[%c0_80, %c7, %c0_81, %c0_82] : memref<1x9x8x128xbf16, #tpu.memory_space<vmem>>, vector<1x1x8x128xbf16>
    %57 = vector.shape_cast %56 : vector<1x1x8x128xbf16> to vector<8x128xbf16>
    %cst_83 = arith.constant dense<0.000000e+00> : vector<288x128xf32>
    %58 = tpu.matmul %55, %57, %cst_83 {dimension_numbers = #tpu.dot_dimension_numbers<[1], [0], [0], [1], [0, 0, 1, 1], [], []>} : vector<288x8xbf16>, vector<8x128xbf16>, vector<288x128xf32> -> vector<288x128xf32>
    %c0_84 = arith.constant 0 : index
    %c0_85 = arith.constant 0 : index
    %59 = vector.load %arg8[%c0_84, %c0_85] : memref<288x128xf32, #tpu.memory_space<vmem>>, vector<288x128xf32>
    %60 = arith.addf %59, %58 : vector<288x128xf32>
    %c0_86 = arith.constant 0 : index
    %c0_87 = arith.constant 0 : index
    %61 = vector.load %arg8[%c0_86, %c0_87] : memref<288x128xf32, #tpu.memory_space<vmem>>, vector<288x128xf32>
    tpu.vector_store %arg8[%c0_86, %c0_87], %60 {strides = array<i32>} : memref<288x128xf32, #tpu.memory_space<vmem>>, vector<288x128xf32>,
    %c0_88 = arith.constant 0 : index
    %c0_89 = arith.constant 0 : index
    %c38 = arith.constant 38 : index
    %c0_90 = arith.constant 0 : index
    %62 = vector.load %arg2[%c0_88, %c0_89, %c38, %c0_90] : memref<1x1x336x8xbf16, #tpu.memory_space<vmem>>, vector<1x1x288x8xbf16>
    %63 = vector.shape_cast %62 : vector<1x1x288x8xbf16> to vector<288x8xbf16>
    %c0_91 = arith.constant 0 : index
    %c8 = arith.constant 8 : index
    %c0_92 = arith.constant 0 : index
    %c0_93 = arith.constant 0 : index
    %64 = vector.load %arg3[%c0_91, %c8, %c0_92, %c0_93] : memref<1x9x8x128xbf16, #tpu.memory_space<vmem>>, vector<1x1x8x128xbf16>
    %65 = vector.shape_cast %64 : vector<1x1x8x128xbf16> to vector<8x128xbf16>
    %cst_94 = arith.constant dense<0.000000e+00> : vector<288x128xf32>
    %66 = tpu.matmul %63, %65, %cst_94 {dimension_numbers = #tpu.dot_dimension_numbers<[1], [0], [0], [1], [0, 0, 1, 1], [], []>} : vector<288x8xbf16>, vector<8x128xbf16>, vector<288x128xf32> -> vector<288x128xf32>
    %c0_95 = arith.constant 0 : index
    %c0_96 = arith.constant 0 : index
    %67 = vector.load %arg8[%c0_95, %c0_96] : memref<288x128xf32, #tpu.memory_space<vmem>>, vector<288x128xf32>
    %68 = arith.addf %67, %66 : vector<288x128xf32>
    %c0_97 = arith.constant 0 : index
    %c0_98 = arith.constant 0 : index
    %69 = vector.load %arg8[%c0_97, %c0_98] : memref<288x128xf32, #tpu.memory_space<vmem>>, vector<288x128xf32>
    tpu.vector_store %arg8[%c0_97, %c0_98], %68 {strides = array<i32>} : memref<288x128xf32, #tpu.memory_space<vmem>>, vector<288x128xf32>,
    %c0_99 = arith.constant 0 : index
    %c0_100 = arith.constant 0 : index
    %70 = vector.load %arg8[%c0_99, %c0_100] : memref<288x128xf32, #tpu.memory_space<vmem>>, vector<288x128xf32>
    %71 = arith.truncf %70 : vector<288x128xf32> to vector<288x128xbf16>
    %72 = vector.extract_strided_slice %71 {offsets = [0, 0], sizes = [288, 8], strides = [1, 1]} : vector<288x128xbf16> to vector<288x8xbf16>
    %c0_101 = arith.constant 0 : index
    %c0_102 = arith.constant 0 : index
    %c0_103 = arith.constant 0 : index
    %c0_104 = arith.constant 0 : index
    %73 = vector.load %arg5[%c0_101, %c0_102, %c0_103, %c0_104] : memref<1x1x288x8xbf16, #tpu.memory_space<vmem>>, vector<1x1x288x8xbf16>
    %74 = vector.shape_cast %73 : vector<1x1x288x8xbf16> to vector<288x8xbf16>
    %75 = vector.shape_cast %72 : vector<288x8xbf16> to vector<1x1x288x8xbf16>
    tpu.vector_store %arg5[%c0_101, %c0_102, %c0_103, %c0_104], %75 {strides = array<i32>} : memref<1x1x288x8xbf16, #tpu.memory_space<vmem>>, vector<1x1x288x8xbf16>,
    %76 = arith.extf %71 : vector<288x128xbf16> to vector<288x128xf32>
    %c0_105 = arith.constant 0 : index
    %c0_106 = arith.constant 0 : index
    %77 = vector.load %arg4[%c0_105, %c0_106] : memref<288x1xf32, #tpu.memory_space<vmem>>, vector<288x1xf32>
    %78 = vector.broadcast %77 : vector<288x1xf32> to vector<288x128xf32>
    %79 = arith.mulf %76, %78 : vector<288x128xf32>
    %cst_107 = arith.constant dense<0.000000e+00> : vector<128xf32>
    %80 = vector.multi_reduction <add>, %79, %cst_107 [0] : vector<288x128xf32> to vector<128xf32>
    %81 = vector.shape_cast %80 : vector<128xf32> to vector<1x128xf32>
    %c0_108 = arith.constant 0 : index
    %c0_109 = arith.constant 0 : index
    %c0_110 = arith.constant 0 : index
    %c0_111 = arith.constant 0 : index
    %82 = vector.load %arg6[%c0_108, %c0_109, %c0_110, %c0_111] : memref<1x1x1x128xf32, #tpu.memory_space<vmem>>, vector<1x1x1x128xf32>
    %83 = vector.shape_cast %82 : vector<1x1x1x128xf32> to vector<1x128xf32>
    %84 = vector.shape_cast %81 : vector<1x128xf32> to vector<1x1x1x128xf32>
    tpu.vector_store %arg6[%c0_108, %c0_109, %c0_110, %c0_111], %84 {strides = array<i32>} : memref<1x1x1x128xf32, #tpu.memory_space<vmem>>, vector<1x1x1x128xf32>,
    %85 = arith.mulf %79, %79 : vector<288x128xf32>
    %cst_112 = arith.constant dense<0.000000e+00> : vector<128xf32>
    %86 = vector.multi_reduction <add>, %85, %cst_112 [0] : vector<288x128xf32> to vector<128xf32>
    %87 = vector.shape_cast %86 : vector<128xf32> to vector<1x128xf32>
    %c0_113 = arith.constant 0 : index
    %c0_114 = arith.constant 0 : index
    %c0_115 = arith.constant 0 : index
    %c0_116 = arith.constant 0 : index
    %88 = vector.load %arg7[%c0_113, %c0_114, %c0_115, %c0_116] : memref<1x1x1x128xf32, #tpu.memory_space<vmem>>, vector<1x1x1x128xf32>
    %89 = vector.shape_cast %88 : vector<1x1x1x128xf32> to vector<1x128xf32>
    %90 = vector.shape_cast %87 : vector<1x128xf32> to vector<1x1x1x128xf32>
    tpu.vector_store %arg7[%c0_113, %c0_114, %c0_115, %c0_116], %90 {strides = array<i32>} : memref<1x1x1x128xf32, #tpu.memory_space<vmem>>, vector<1x1x1x128xf32>,
    return
  }
  func.func @transform_0(%arg0: i32, %arg1: i32) -> (i32, i32, i32, i32) {
    %c0_i32 = arith.constant 0 : i32
    %c0_i32_0 = arith.constant 0 : i32
    %c0_i32_1 = arith.constant 0 : i32
    return %arg0, %arg1, %c0_i32, %c0_i32_0 : i32, i32, i32, i32
  }
  func.func @transform_1(%arg0: i32, %arg1: i32) -> (i32, i32, i32, i32) {
    %c0_i32 = arith.constant 0 : i32
    %c0_i32_0 = arith.constant 0 : i32
    %c0_i32_1 = arith.constant 0 : i32
    %c0_i32_2 = arith.constant 0 : i32
    return %arg0, %c0_i32, %c0_i32_0, %c0_i32_1 : i32, i32, i32, i32
  }
  func.func @transform_2(%arg0: i32, %arg1: i32) -> (i32, i32) {
    %c0_i32 = arith.constant 0 : i32
    %c0_i32_0 = arith.constant 0 : i32
    %c0_i32_1 = arith.constant 0 : i32
    return %c0_i32, %c0_i32_0 : i32, i32
  }
  func.func @transform_3(%arg0: i32, %arg1: i32) -> (i32, i32, i32, i32) {
    %c0_i32 = arith.constant 0 : i32
    %c0_i32_0 = arith.constant 0 : i32
    %c0_i32_1 = arith.constant 0 : i32
    return %arg0, %arg1, %c0_i32, %c0_i32_0 : i32, i32, i32, i32
  }
  func.func @transform_4(%arg0: i32, %arg1: i32) -> (i32, i32, i32, i32) {
    %c0_i32 = arith.constant 0 : i32
    %c0_i32_0 = arith.constant 0 : i32
    %c0_i32_1 = arith.constant 0 : i32
    return %arg0, %arg1, %c0_i32, %c0_i32_0 : i32, i32, i32, i32
  }
  func.func @transform_5(%arg0: i32, %arg1: i32) -> (i32, i32, i32, i32) {
    %c0_i32 = arith.constant 0 : i32
    %c0_i32_0 = arith.constant 0 : i32
    %c0_i32_1 = arith.constant 0 : i32
    return %arg0, %arg1, %c0_i32, %c0_i32_0 : i32, i32, i32, i32
  }
}

</mosaic_0001>

<llo_original>
// kernel: conv_block.1
$region0: #{conv_block.1}
  #allocation0 [shape = 'u32[]', space=smem, size = 0x4, offset = 0x4, fixed_abs, tag = 'smem constant byte address 0x4 - core index']
  #allocation1 [shape = 'u32[144,128]{1,0:T(1,128)}', space=vmem, size = 0x12000, scoped, tag = 'internal scratch']
  #allocation2 [shape = 'f32[288,128]{1,0:T(8,128)}', space=vmem, size = 0x24000, scoped, tag = 'scratch operand']
  %s0 = inlined_call_operand.vmem [shape: bf16[1,2,336,8], index: 0, kind: input, shape index: {}]
  %s1 = inlined_call_operand.vmem [shape: bf16[1,9,8,128], index: 1, kind: input, shape index: {}]
  %s2 = inlined_call_operand.vmem [shape: f32[288,1], index: 2, kind: input, shape index: {}]
  %s3 = inlined_call_operand.vmem [shape: bf16[1,2,288,8], index: 3, kind: output, shape index: {0}]
  %s4 = inlined_call_operand.vmem [shape: f32[1,2,1,128], index: 4, kind: output, shape index: {1}]
  %s5 = inlined_call_operand.vmem [shape: f32[1,2,1,128], index: 5, kind: output, shape index: {2}]
  %6 = xla_tuple %s3, %s4, %s5
  %s7 = sld [smem:[#allocation0]]
  $region61: #{conv_block.1} parent=0
    _
  %s9 = ssub.s32 1, %s7
  %s10 = scalar_select 0, %s9, %s7
  loop: start=0, step=1, limit=4
  $region2: #{conv_block.1} parent=0 // loop_pre_header
    _
  $region3: #{conv_block.1} parent=0 // loop_header
    %s12 = sphi 0, %s16
    %p13 = scmp.ge.s32.totalorder %s12, 4
    %s19 = sphi 0, %s31
    %s20 = sphi 0, %s27
    %s21 = sphi 0, %s19
    %s22 = sphi 0, %s20
    %s23 = sphi 0, %s21
    %s24 = sphi 0, %s22
    %s36 = sphi 0, %s38
    %s39 = sphi 0, %s36
    %s40 = sphi 0, %s39
    %s56 = sphi 0, %s40
    %s62 = sphi 0, %s64
    %s65 = sphi 0, %s62
    %s66 = sphi 0, %s65
    %s82 = sphi 0, %s66
    %s86 = sphi 0, %s86
    %s88 = sphi 0, %s86
    %s89 = sphi 0, %s88
    %s103 = sphi 0, %s89
    %s111 = sphi 0, %s113
    %s114 = sphi 0, %s111
    %s115 = sphi 0, %s114
    %s131 = sphi 0, %s115
    %s139 = sphi 0, %s141
    %s142 = sphi 0, %s139
    %s143 = sphi 0, %s142
    %s159 = sphi 0, %s143
    %s167 = sphi 0, %s169
    %s170 = sphi 0, %s167
    %s171 = sphi 0, %s170
    %s187 = sphi 0, %s171
  $region4: #{conv_block.1} parent=0 // loop_header_branch
    %15 = sbr.rel (%p13) target = $region8
  $region5: #{conv_block.1} parent=0 // loop_body
    %s17 = ssub.s32 %s12, 1
    %s18 = ssub.s32 %s12, 2
    %s25 = sadd.s32 1, %s20
    %p26 = scmp.ge.s32.totalorder %s25, 2
    %s27 = scalar_select %p26, 0, %s25
    %s28 = sadd.s32 1, %s19
    %s29 = scalar_select %p26, %s28, %s19
    %p30 = scmp.ge.s32.totalorder %s29, 1
    %s31 = scalar_select %p30, 0, %s29
    %s32 = ssub.s32 %s19, %s31
    %s33 = ssub.s32 %s20, %s27
    %s34 = sor.u32 %s32, %s33
    %p35 = scmp.eq.s32.totalorder %s34, 0
    %s37 = sadd.s32 %s36, 1
    %s38 = scalar_select %p35, %s36, %s37
    %p41 = pneg %p35
    %p42 = scmp.eq.s32.totalorder %s12, 1
    %p43 = por %p41, %p42
    %p44 = scmp.ne.s32.totalorder %s36, %s39
    %p45 = scmp.eq.s32.totalorder %s12, 0
    %p46 = por %p44, %p45
    %p47 = scmp.ne.s32.totalorder %s36, %s39
    %p48 = scmp.eq.s32.totalorder %s17, 1
    %p49 = por %p47, %p48
    %p50 = scmp.ne.s32.totalorder %s39, %s40
    %p51 = scmp.eq.s32.totalorder %s17, 0
    %p52 = por %p50, %p51
    %p53 = scmp.ne.s32.totalorder %s39, %s40
    %p54 = scmp.eq.s32.totalorder %s18, 1
    %p55 = por %p53, %p54
    %p57 = scmp.ne.s32.totalorder %s40, %s56
    %p58 = scmp.eq.s32.totalorder %s18, 0
    %p59 = por %p57, %p58
    %s60 = ssub.s32 %s19, %s31
    %p61 = scmp.eq.s32.totalorder %s60, 0
    %s63 = sadd.s32 %s62, 1
    %s64 = scalar_select %p61, %s62, %s63
    %p67 = pneg %p61
    %p68 = scmp.eq.s32.totalorder %s12, 1
    %p69 = por %p67, %p68
    %p70 = scmp.ne.s32.totalorder %s62, %s65
    %p71 = scmp.eq.s32.totalorder %s12, 0
    %p72 = por %p70, %p71
    %p73 = scmp.ne.s32.totalorder %s62, %s65
    %p74 = scmp.eq.s32.totalorder %s17, 1
    %p75 = por %p73, %p74
    %p76 = scmp.ne.s32.totalorder %s65, %s66
    %p77 = scmp.eq.s32.totalorder %s17, 0
    %p78 = por %p76, %p77
    %p79 = scmp.ne.s32.totalorder %s65, %s66
    %p80 = scmp.eq.s32.totalorder %s18, 1
    %p81 = por %p79, %p80
    %p83 = scmp.ne.s32.totalorder %s66, %s82
    %p84 = scmp.eq.s32.totalorder %s18, 0
    %p85 = por %p83, %p84
    %s87 = sadd.s32 %s86, 1
    %p90 = scmp.eq.s32.totalorder %s12, 1
    %p91 = scmp.ne.s32.totalorder %s86, %s88
    %p92 = scmp.eq.s32.totalorder %s12, 0
    %p93 = por %p91, %p92
    %p94 = scmp.ne.s32.totalorder %s86, %s88
    %p95 = scmp.eq.s32.totalorder %s17, 1
    %p96 = por %p94, %p95
    %p97 = scmp.ne.s32.totalorder %s88, %s89
    %p98 = scmp.eq.s32.totalorder %s17, 0
    %p99 = por %p97, %p98
    %p100 = scmp.ne.s32.totalorder %s88, %s89
    %p101 = scmp.eq.s32.totalorder %s18, 1
    %p102 = por %p100, %p101
    %p104 = scmp.ne.s32.totalorder %s89, %s103
    %p105 = scmp.eq.s32.totalorder %s18, 0
    %p106 = por %p104, %p105
    %s107 = ssub.s32 %s19, %s31
    %s108 = ssub.s32 %s20, %s27
    %s109 = sor.u32 %s107, %s108
    %p110 = scmp.eq.s32.totalorder %s109, 0
    %s112 = sadd.s32 %s111, 1
    %s113 = scalar_select %p110, %s111, %s112
    %p116 = pneg %p110
    %p117 = scmp.eq.s32.totalorder %s12, 1
    %p118 = por %p116, %p117
    %p119 = scmp.ne.s32.totalorder %s111, %s114
    %p120 = scmp.eq.s32.totalorder %s12, 0
    %p121 = por %p119, %p120
    %p122 = scmp.ne.s32.totalorder %s111, %s114
    %p123 = scmp.eq.s32.totalorder %s17, 1
    %p124 = por %p122, %p123
    %p125 = scmp.ne.s32.totalorder %s114, %s115
    %p126 = scmp.eq.s32.totalorder %s17, 0
    %p127 = por %p125, %p126
    %p128 = scmp.ne.s32.totalorder %s114, %s115
    %p129 = scmp.eq.s32.totalorder %s18, 1
    %p130 = por %p128, %p129
    %p132 = scmp.ne.s32.totalorder %s115, %s131
    %p133 = scmp.eq.s32.totalorder %s18, 0
    %p134 = por %p132, %p133
    %s135 = ssub.s32 %s19, %s31
    %s136 = ssub.s32 %s20, %s27
    %s137 = sor.u32 %s135, %s136
    %p138 = scmp.eq.s32.totalorder %s137, 0
    %s140 = sadd.s32 %s139, 1
    %s141 = scalar_select %p138, %s139, %s140
    %p144 = pneg %p138
    %p145 = scmp.eq.s32.totalorder %s12, 1
    %p146 = por %p144, %p145
    %p147 = scmp.ne.s32.totalorder %s139, %s142
    %p148 = scmp.eq.s32.totalorder %s12, 0
    %p149 = por %p147, %p148
    %p150 = scmp.ne.s32.totalorder %s139, %s142
    %p151 = scmp.eq.s32.totalorder %s17, 1
    %p152 = por %p150, %p151
    %p153 = scmp.ne.s32.totalorder %s142, %s143
    %p154 = scmp.eq.s32.totalorder %s17, 0
    %p155 = por %p153, %p154
    %p156 = scmp.ne.s32.totalorder %s142, %s143
    %p157 = scmp.eq.s32.totalorder %s18, 1
    %p158 = por %p156, %p157
    %p160 = scmp.ne.s32.totalorder %s143, %s159
    %p161 = scmp.eq.s32.totalorder %s18, 0
    %p162 = por %p160, %p161
    %s163 = ssub.s32 %s19, %s31
    %s164 = ssub.s32 %s20, %s27
    %s165 = sor.u32 %s163, %s164
    %p166 = scmp.eq.s32.totalorder %s165, 0
    %s168 = sadd.s32 %s167, 1
    %s169 = scalar_select %p166, %s167, %s168
    %p172 = pneg %p166
    %p173 = scmp.eq.s32.totalorder %s12, 1
    %p174 = por %p172, %p173
    %p175 = scmp.ne.s32.totalorder %s167, %s170
    %p176 = scmp.eq.s32.totalorder %s12, 0
    %p177 = por %p175, %p176
    %p178 = scmp.ne.s32.totalorder %s167, %s170
    %p179 = scmp.eq.s32.totalorder %s17, 1
    %p180 = por %p178, %p179
    %p181 = scmp.ne.s32.totalorder %s170, %s171
    %p182 = scmp.eq.s32.totalorder %s17, 0
    %p183 = por %p181, %p182
    %p184 = scmp.ne.s32.totalorder %s170, %s171
    %p185 = scmp.eq.s32.totalorder %s18, 1
    %p186 = por %p184, %p185
    %p188 = scmp.ne.s32.totalorder %s171, %s187
    %p189 = scmp.eq.s32.totalorder %s18, 0
    %p190 = por %p188, %p189
    %p191 = scmp.le.s32.totalorder 1, %s12
    %p192 = scmp.lt.s32.totalorder %s12, 3
    %p193 = pnand %p191, %p192
    %p194 = pneg %p193
    // Predicated region
    $region9: #{conv_block.1} parent=5 // pred_check
      _
    $region10: #{conv_block.1} parent=5 // pred_check_branch
      %196 = sbr.rel (%p193) target = $region12
    $region11: #{conv_block.1} parent=5 // pred_region
      %s197 = ssub.s32 %s12, 1
      // Predicated region
      $region13: #{conv_block.1} parent=11 // pred_check
        %p198 = pneg %p78
      $region14: #{conv_block.1} parent=11 // pred_check_branch
        %200 = sbr.rel (%p198) target = $region16
      $region15: #{conv_block.1} parent=11 // pred_region
        %p201 = scmp.lt.s32.totalorder %s21, 0
        %s202 = scalar_select %p201, %s21, 0
        %s203 = smul.addr %s202, 9
        %s204 = smul.addr %s203, 4
        %s205 = scalar_lea.vmem %s1, %s204
      $region16: #{conv_block.1} parent=11 // pred_fallthru
        _
      // Predicated region
      $region17: #{conv_block.1} parent=11 // pred_check
        %p206 = pneg %p99
      $region18: #{conv_block.1} parent=11 // pred_check_branch
        %208 = sbr.rel (%p206) target = $region20
      $region19: #{conv_block.1} parent=11 // pred_region
        _
      $region20: #{conv_block.1} parent=11 // pred_fallthru
        _
    $region12: #{conv_block.1} parent=5 // pred_fallthru
      _
    %p209 = scmp.lt.s32.totalorder %s12, 2
    // Predicated region
    $region21: #{conv_block.1} parent=5 // pred_check
      %p210 = pneg %p209
    $region22: #{conv_block.1} parent=5 // pred_check_branch
      %212 = sbr.rel (%p210) target = $region24
    $region23: #{conv_block.1} parent=5 // pred_region
      // Predicated region
      $region25: #{conv_block.1} parent=23 // pred_check
        %p213 = pneg %p46
      $region26: #{conv_block.1} parent=23 // pred_check_branch
        %215 = sbr.rel (%p213) target = $region28
      $region27: #{conv_block.1} parent=23 // pred_region
        %p216 = scmp.lt.s32.totalorder %s19, 0
        %s217 = scalar_select %p216, %s19, 0
        %p218 = scmp.lt.s32.totalorder %s20, 1
        %s219 = scalar_select %p218, %s20, 1
        %s220 = smul.addr %s219, 42
        %s221 = smul.addr %s217, 84
        %s222 = sadd.s32 %s220, %s221
        %s223 = smul.addr %s222, 4
        %s224 = scalar_lea.vmem %s0, %s223
      $region28: #{conv_block.1} parent=23 // pred_fallthru
        _
    $region24: #{conv_block.1} parent=5 // pred_fallthru
      _
    %p225 = scmp.le.s32.totalorder 1, %s12
    %p226 = scmp.lt.s32.totalorder %s12, 3
    %p227 = pnand %p225, %p226
    %p228 = pneg %p227
    // Predicated region
    $region29: #{conv_block.1} parent=5 // pred_check
      _
    $region30: #{conv_block.1} parent=5 // pred_check_branch
      %230 = sbr.rel (%p227) target = $region32
    $region31: #{conv_block.1} parent=5 // pred_region
      %s231 = ssub.s32 %s12, 1
      %p232 = scmp.lt.s32.totalorder %s21, 0
      %s233 = scalar_select %p232, %s21, 0
      %p234 = scmp.lt.s32.totalorder %s22, 1
      %s235 = scalar_select %p234, %s22, 1
      %s236 = smul.addr %s235, 42
      %s237 = smul.addr %s233, 84
      %s238 = sadd.s32 %s236, %s237
      %s239 = smul.addr %s238, 4
      %s240 = scalar_lea.vmem %s0, %s239
      %p241 = pneg %p52
      %p242 = pneg %p49
      %p243 = scmp.lt.s32.totalorder %s21, 0
      %s244 = scalar_select %p243, %s21, 0
      %s245 = smul.addr %s244, 9
      %s246 = smul.addr %s245, 4
      %s247 = scalar_lea.vmem %s1, %s246
      %p248 = pneg %p78
      %p249 = pneg %p75
      %p250 = pneg %p99
      %p251 = pneg %p96
      %p252 = pneg %p127
      %p253 = pneg %p124
      %p254 = scmp.lt.s32.totalorder %s21, 0
      %s255 = scalar_select %p254, %s21, 0
      %p256 = scmp.lt.s32.totalorder %s22, 1
      %s257 = scalar_select %p256, %s22, 1
      %s258 = smul.addr %s257, 36
      %s259 = smul.addr %s255, 72
      %s260 = sadd.s32 %s258, %s259
      %s261 = smul.addr %s260, 4
      %s262 = scalar_lea.vmem %s3, %s261
      %p263 = pneg %p155
      %p264 = pneg %p152
      %p265 = scmp.lt.s32.totalorder %s21, 0
      %s266 = scalar_select %p265, %s21, 0
      %p267 = scmp.lt.s32.totalorder %s22, 1
      %s268 = scalar_select %p267, %s22, 1
      %s269 = smul.addr %s266, 2
      %s270 = sadd.s32 %s268, %s269
      %s271 = scalar_lea.vmem %s4, %s270
      %p272 = pneg %p183
      %p273 = pneg %p180
      %p274 = scmp.lt.s32.totalorder %s21, 0
      %s275 = scalar_select %p274, %s21, 0
      %p276 = scmp.lt.s32.totalorder %s22, 1
      %s277 = scalar_select %p276, %s22, 1
      %s278 = smul.addr %s275, 2
      %s279 = sadd.s32 %s277, %s278
      %s280 = scalar_lea.vmem %s5, %s279
      %p281 = scmp.lt.s32.totalorder %s21, 0
      %s282 = scalar_select %p281, %s21, 0
      %p283 = scmp.lt.s32.totalorder %s22, 1
      %s284 = scalar_select %p283, %s22, 1
      %s285 = smul.addr %s284, 42
      %s286 = smul.addr %s282, 84
      %s287 = sadd.s32 %s285, %s286
      %s288 = smul.addr %s287, 4
      %s289 = scalar_lea.vmem %s0, %s288
      %p290 = scmp.lt.s32.totalorder %s21, 0
      %s291 = scalar_select %p290, %s21, 0
      %s292 = smul.addr %s291, 9
      %s293 = smul.addr %s292, 4
      %s294 = scalar_lea.vmem %s1, %s293
      %p295 = scmp.lt.s32.totalorder %s21, 0
      %s296 = scalar_select %p295, %s21, 0
      %p297 = scmp.lt.s32.totalorder %s22, 1
      %s298 = scalar_select %p297, %s22, 1
      %s299 = smul.addr %s298, 36
      %s300 = smul.addr %s296, 72
      %s301 = sadd.s32 %s299, %s300
      %s302 = smul.addr %s301, 4
      %s303 = scalar_lea.vmem %s3, %s302
      %p304 = scmp.lt.s32.totalorder %s21, 0
      %s305 = scalar_select %p304, %s21, 0
      %p306 = scmp.lt.s32.totalorder %s22, 1
      %s307 = scalar_select %p306, %s22, 1
      %s308 = smul.addr %s305, 2
      %s309 = sadd.s32 %s307, %s308
      %s310 = scalar_lea.vmem %s4, %s309
      %p311 = scmp.lt.s32.totalorder %s21, 0
      %s312 = scalar_select %p311, %s21, 0
      %p313 = scmp.lt.s32.totalorder %s22, 1
      %s314 = scalar_select %p313, %s22, 1
      %s315 = smul.addr %s312, 2
      %s316 = sadd.s32 %s314, %s315
      %s317 = scalar_lea.vmem %s5, %s316
      %v319 = vld [vmem:[%s289] sm:$0xf]
      %v320 = vld [vmem:[%s289 + $0x4] sm:$0xf]
      %v321 = vld [vmem:[%s289 + $0x8] sm:$0xf]
      %v322 = vld [vmem:[%s289 + $0xc] sm:$0xf]
      %v323 = vld [vmem:[%s289 + $0x10] sm:$0xf]
      %v324 = vld [vmem:[%s289 + $0x14] sm:$0xf]
      %v325 = vld [vmem:[%s289 + $0x18] sm:$0xf]
      %v326 = vld [vmem:[%s289 + $0x1c] sm:$0xf]
      %v327 = vld [vmem:[%s289 + $0x20] sm:$0xf]
      %v328 = vld [vmem:[%s289 + $0x24] sm:$0xf]
      %v329 = vld [vmem:[%s289 + $0x28] sm:$0xf]
      %v330 = vld [vmem:[%s289 + $0x2c] sm:$0xf]
      %v331 = vld [vmem:[%s289 + $0x30] sm:$0xf]
      %v332 = vld [vmem:[%s289 + $0x34] sm:$0xf]
      %v333 = vld [vmem:[%s289 + $0x38] sm:$0xf]
      %v334 = vld [vmem:[%s289 + $0x3c] sm:$0xf]
      %v335 = vld [vmem:[%s289 + $0x40] sm:$0xf]
      %v336 = vld [vmem:[%s289 + $0x44] sm:$0xf]
      %v337 = vld [vmem:[%s289 + $0x48] sm:$0xf]
      %v338 = vld [vmem:[%s289 + $0x4c] sm:$0xf]
      %v339 = vld [vmem:[%s289 + $0x50] sm:$0xf]
      %v340 = vld [vmem:[%s289 + $0x54] sm:$0xf]
      %v341 = vld [vmem:[%s289 + $0x58] sm:$0xf]
      %v342 = vld [vmem:[%s289 + $0x5c] sm:$0xf]
      %v343 = vld [vmem:[%s289 + $0x60] sm:$0xf]
      %v344 = vld [vmem:[%s289 + $0x64] sm:$0xf]
      %v345 = vld [vmem:[%s289 + $0x68] sm:$0xf]
      %v346 = vld [vmem:[%s289 + $0x6c] sm:$0xf]
      %v347 = vld [vmem:[%s289 + $0x70] sm:$0xf]
      %v348 = vld [vmem:[%s289 + $0x74] sm:$0xf]
      %v349 = vld [vmem:[%s289 + $0x78] sm:$0xf]
      %v350 = vld [vmem:[%s289 + $0x7c] sm:$0xf]
      %v351 = vld [vmem:[%s289 + $0x80] sm:$0xf]
      %v352 = vld [vmem:[%s289 + $0x84] sm:$0xf]
      %v353 = vld [vmem:[%s289 + $0x88] sm:$0xf]
      %v354 = vld [vmem:[%s289 + $0x8c] sm:$0xf]
      %v355 = vld [vmem:[%s294] sm:$0xf]
      %v392 = vunpack.c.l.b16 %v319
      %v393 = vunpack.c.l.b16 %v320
      %v394 = vunpack.c.l.b16 %v321
      %v395 = vunpack.c.l.b16 %v322
      %v396 = vunpack.c.l.b16 %v323
      %v397 = vunpack.c.l.b16 %v324
      %v398 = vunpack.c.l.b16 %v325
      %v399 = vunpack.c.l.b16 %v326
      %v400 = vunpack.c.l.b16 %v327
      %v401 = vunpack.c.l.b16 %v328
      %v402 = vunpack.c.l.b16 %v329
      %v403 = vunpack.c.l.b16 %v330
      %v404 = vunpack.c.l.b16 %v331
      %v405 = vunpack.c.l.b16 %v332
      %v406 = vunpack.c.l.b16 %v333
      %v407 = vunpack.c.l.b16 %v334
      %v408 = vunpack.c.l.b16 %v335
      %v409 = vunpack.c.l.b16 %v336
      %v410 = vunpack.c.l.b16 %v337
      %v411 = vunpack.c.l.b16 %v338
      %v412 = vunpack.c.l.b16 %v339
      %v413 = vunpack.c.l.b16 %v340
      %v414 = vunpack.c.l.b16 %v341
      %v415 = vunpack.c.l.b16 %v342
      %v416 = vunpack.c.l.b16 %v343
      %v417 = vunpack.c.l.b16 %v344
      %v418 = vunpack.c.l.b16 %v345
      %v419 = vunpack.c.l.b16 %v346
      %v420 = vunpack.c.l.b16 %v347
      %v421 = vunpack.c.l.b16 %v348
      %v422 = vunpack.c.l.b16 %v349
      %v423 = vunpack.c.l.b16 %v350
      %v424 = vunpack.c.l.b16 %v351
      %v425 = vunpack.c.l.b16 %v352
      %v426 = vunpack.c.l.b16 %v353
      %v427 = vunpack.c.l.b16 %v354
      %v428 = vpack.c.b16 %v393, %v392
      %v429 = vpack.c.b16 %v395, %v394
      %v430 = vpack.c.b16 %v397, %v396
      %v431 = vpack.c.b16 %v399, %v398
      %v432 = vpack.c.b16 %v401, %v400
      %v433 = vpack.c.b16 %v403, %v402
      %v434 = vpack.c.b16 %v405, %v404
      %v435 = vpack.c.b16 %v407, %v406
      %v436 = vpack.c.b16 %v409, %v408
      %v437 = vpack.c.b16 %v411, %v410
      %v438 = vpack.c.b16 %v413, %v412
      %v439 = vpack.c.b16 %v415, %v414
      %v440 = vpack.c.b16 %v417, %v416
      %v441 = vpack.c.b16 %v419, %v418
      %v442 = vpack.c.b16 %v421, %v420
      %v443 = vpack.c.b16 %v423, %v422
      %v444 = vpack.c.b16 %v425, %v424
      %v445 = vpack.c.b16 %v427, %v426
      %vm446 = vcmask 64512
      %v448 = vsel %vm446, %v428, 0
      %v451 = vsel %vm446, %v429, 0
      %v454 = vsel %vm446, %v430, 0
      %v457 = vsel %vm446, %v431, 0
      %v460 = vsel %vm446, %v432, 0
      %v463 = vsel %vm446, %v433, 0
      %v466 = vsel %vm446, %v434, 0
      %v469 = vsel %vm446, %v435, 0
      %v472 = vsel %vm446, %v436, 0
      %v475 = vsel %vm446, %v437, 0
      %v478 = vsel %vm446, %v438, 0
      %v481 = vsel %vm446, %v439, 0
      %v484 = vsel %vm446, %v440, 0
      %v487 = vsel %vm446, %v441, 0
      %v490 = vsel %vm446, %v442, 0
      %v493 = vsel %vm446, %v443, 0
      %v496 = vsel %vm446, %v444, 0
      %v499 = vsel %vm446, %v445, 0
      %vm501 = vcmask 1043456
      %v503 = vsel %vm501, %v355, 0
      %505 = vmatprep.subr.bf16.mxu0 0
      %506 = vmatpush1.bf16.msra.mxu0 %v503
      %507 = vmatprep.subr.bf16.mxu0 0
      %508 = vmatpush1.bf16.msra.mxu0 0
      %509 = vmatprep.subr.bf16.mxu0 0
      %510 = vmatpush1.bf16.msra.mxu0 0
      %511 = vmatprep.subr.bf16.mxu0 0
      %512 = vmatpush1.bf16.msra.mxu0 0
      %513 = vmatprep.subr.bf16.mxu0 0
      %514 = vmatpush1.bf16.msra.mxu0 0
      %515 = vmatprep.subr.bf16.mxu0 0
      %516 = vmatpush1.bf16.msra.mxu0 0
      %517 = vmatprep.subr.bf16.mxu0 0
      %518 = vmatpush1.bf16.msra.mxu0 0
      %519 = vmatprep.subr.bf16.mxu0 0
      %520 = vmatpush1.bf16.msra.mxu0 0
      %521 = vmatprep.subr.bf16.mxu0 0
      %522 = vmatpush1.bf16.msra.mxu0 0
      %523 = vmatprep.subr.bf16.mxu0 0
      %524 = vmatpush1.bf16.msra.mxu0 0
      %525 = vmatprep.subr.bf16.mxu0 0
      %526 = vmatpush1.bf16.msra.mxu0 0
      %527 = vmatprep.subr.bf16.mxu0 0
      %528 = vmatpush1.bf16.msra.mxu0 0
      %529 = vmatprep.subr.bf16.mxu0 0
      %530 = vmatpush1.bf16.msra.mxu0 0
      %531 = vmatprep.subr.bf16.mxu0 0
      %532 = vmatpush1.bf16.msra.mxu0 0
      %533 = vmatprep.subr.bf16.mxu0 0
      %534 = vmatpush1.bf16.msra.mxu0 0
      %535 = vmatprep.subr.bf16.mxu0 0
      %536 = vmatpush1.bf16.msra.mxu0 0
      %537 = vmatprep.mubr.bf16.mxu0 0
      %538 = vmatmul.mubr.bf16.gmra.mrb[0].mxu0 %v448
      %v539 = vpop.f32.mrb[0].mxu0
      %v540 = vadd.f32 0.0, %v539
      %v541 = vpop.f32.mrb[0].mxu0
      %v542 = vpop.f32.mrb[0].mxu0
      %v543 = vadd.f32 0.0, %v542
      %v544 = vpop.f32.mrb[0].mxu0
      %545 = vmatprep.mubr.bf16.mxu0 0
      %546 = vmatmul.mubr.bf16.gmra.mrb[0].mxu0 %v451
      %v547 = vpop.f32.mrb[0].mxu0
      %v548 = vadd.f32 0.0, %v547
      %v549 = vpop.f32.mrb[0].mxu0
      %v550 = vpop.f32.mrb[0].mxu0
      %v551 = vadd.f32 0.0, %v550
      %v552 = vpop.f32.mrb[0].mxu0
      %553 = vmatprep.mubr.bf16.mxu0 0
      %554 = vmatmul.mubr.bf16.gmra.mrb[0].mxu0 %v454
      %v555 = vpop.f32.mrb[0].mxu0
      %v556 = vadd.f32 0.0, %v555
      %v557 = vpop.f32.mrb[0].mxu0
      %v558 = vpop.f32.mrb[0].mxu0
      %v559 = vadd.f32 0.0, %v558
      %v560 = vpop.f32.mrb[0].mxu0
      %561 = vmatprep.mubr.bf16.mxu0 0
      %562 = vmatmul.mubr.bf16.gmra.mrb[0].mxu0 %v457
      %v563 = vpop.f32.mrb[0].mxu0
      %v564 = vadd.f32 0.0, %v563
      %v565 = vpop.f32.mrb[0].mxu0
      %v566 = vpop.f32.mrb[0].mxu0
      %v567 = vadd.f32 0.0, %v566
      %v568 = vpop.f32.mrb[0].mxu0
      %569 = vmatprep.mubr.bf16.mxu0 0
      %570 = vmatmul.mubr.bf16.gmra.mrb[0].mxu0 %v460
      %v571 = vpop.f32.mrb[0].mxu0
      %v572 = vadd.f32 0.0, %v571
      %v573 = vpop.f32.mrb[0].mxu0
      %v574 = vpop.f32.mrb[0].mxu0
      %v575 = vadd.f32 0.0, %v574
      %v576 = vpop.f32.mrb[0].mxu0
      %577 = vmatprep.mubr.bf16.mxu0 0
      %578 = vmatmul.mubr.bf16.gmra.mrb[0].mxu0 %v463
      %v579 = vpop.f32.mrb[0].mxu0
      %v580 = vadd.f32 0.0, %v579
      %v581 = vpop.f32.mrb[0].mxu0
      %v582 = vpop.f32.mrb[0].mxu0
      %v583 = vadd.f32 0.0, %v582
      %v584 = vpop.f32.mrb[0].mxu0
      %585 = vmatprep.mubr.bf16.mxu0 0
      %586 = vmatmul.mubr.bf16.gmra.mrb[0].mxu0 %v466
      %v587 = vpop.f32.mrb[0].mxu0
      %v588 = vadd.f32 0.0, %v587
      %v589 = vpop.f32.mrb[0].mxu0
      %v590 = vpop.f32.mrb[0].mxu0
      %v591 = vadd.f32 0.0, %v590
      %v592 = vpop.f32.mrb[0].mxu0
      %593 = vmatprep.mubr.bf16.mxu0 0
      %594 = vmatmul.mubr.bf16.gmra.mrb[0].mxu0 %v469
      %v595 = vpop.f32.mrb[0].mxu0
      %v596 = vadd.f32 0.0, %v595
      %v597 = vpop.f32.mrb[0].mxu0
      %v598 = vpop.f32.mrb[0].mxu0
      %v599 = vadd.f32 0.0, %v598
      %v600 = vpop.f32.mrb[0].mxu0
      %601 = vmatprep.mubr.bf16.mxu0 0
      %602 = vmatmul.mubr.bf16.gmra.mrb[0].mxu0 %v472
      %v603 = vpop.f32.mrb[0].mxu0
      %v604 = vadd.f32 0.0, %v603
      %v605 = vpop.f32.mrb[0].mxu0
      %v606 = vpop.f32.mrb[0].mxu0
      %v607 = vadd.f32 0.0, %v606
      %v608 = vpop.f32.mrb[0].mxu0
      %609 = vmatprep.mubr.bf16.mxu0 0
      %610 = vmatmul.mubr.bf16.gmra.mrb[0].mxu0 %v475
      %v611 = vpop.f32.mrb[0].mxu0
      %v612 = vadd.f32 0.0, %v611
      %v613 = vpop.f32.mrb[0].mxu0
      %v614 = vpop.f32.mrb[0].mxu0
      %v615 = vadd.f32 0.0, %v614
      %v616 = vpop.f32.mrb[0].mxu0
      %617 = vmatprep.mubr.bf16.mxu0 0
      %618 = vmatmul.mubr.bf16.gmra.mrb[0].mxu0 %v478
      %v619 = vpop.f32.mrb[0].mxu0
      %v620 = vadd.f32 0.0, %v619
      %v621 = vpop.f32.mrb[0].mxu0
      %v622 = vpop.f32.mrb[0].mxu0
      %v623 = vadd.f32 0.0, %v622
      %v624 = vpop.f32.mrb[0].mxu0
      %625 = vmatprep.mubr.bf16.mxu0 0
      %626 = vmatmul.mubr.bf16.gmra.mrb[0].mxu0 %v481
      %v627 = vpop.f32.mrb[0].mxu0
      %v628 = vadd.f32 0.0, %v627
      %v629 = vpop.f32.mrb[0].mxu0
      %v630 = vpop.f32.mrb[0].mxu0
      %v631 = vadd.f32 0.0, %v630
      %v632 = vpop.f32.mrb[0].mxu0
      %633 = vmatprep.mubr.bf16.mxu0 0
      %634 = vmatmul.mubr.bf16.gmra.mrb[0].mxu0 %v484
      %v635 = vpop.f32.mrb[0].mxu0
      %v636 = vadd.f32 0.0, %v635
      %v637 = vpop.f32.mrb[0].mxu0
      %v638 = vpop.f32.mrb[0].mxu0
      %v639 = vadd.f32 0.0, %v638
      %v640 = vpop.f32.mrb[0].mxu0
      %641 = vmatprep.mubr.bf16.mxu0 0
      %642 = vmatmul.mubr.bf16.gmra.mrb[0].mxu0 %v487
      %v643 = vpop.f32.mrb[0].mxu0
      %v644 = vadd.f32 0.0, %v643
      %v645 = vpop.f32.mrb[0].mxu0
      %v646 = vpop.f32.mrb[0].mxu0
      %v647 = vadd.f32 0.0, %v646
      %v648 = vpop.f32.mrb[0].mxu0
      %649 = vmatprep.mubr.bf16.mxu0 0
      %650 = vmatmul.mubr.bf16.gmra.mrb[0].mxu0 %v490
      %v651 = vpop.f32.mrb[0].mxu0
      %v652 = vadd.f32 0.0, %v651
      %v653 = vpop.f32.mrb[0].mxu0
      %v654 = vpop.f32.mrb[0].mxu0
      %v655 = vadd.f32 0.0, %v654
      %v656 = vpop.f32.mrb[0].mxu0
      %657 = vmatprep.mubr.bf16.mxu0 0
      %658 = vmatmul.mubr.bf16.gmra.mrb[0].mxu0 %v493
      %v659 = vpop.f32.mrb[0].mxu0
      %v660 = vadd.f32 0.0, %v659
      %v661 = vpop.f32.mrb[0].mxu0
      %v662 = vpop.f32.mrb[0].mxu0
      %v663 = vadd.f32 0.0, %v662
      %v664 = vpop.f32.mrb[0].mxu0
      %665 = vmatprep.mubr.bf16.mxu0 0
      %666 = vmatmul.mubr.bf16.gmra.mrb[0].mxu0 %v496
      %v667 = vpop.f32.mrb[0].mxu0
      %v668 = vadd.f32 0.0, %v667
      %v669 = vpop.f32.mrb[0].mxu0
      %v670 = vpop.f32.mrb[0].mxu0
      %v671 = vadd.f32 0.0, %v670
      %v672 = vpop.f32.mrb[0].mxu0
      %673 = vmatprep.mubr.bf16.mxu0 0
      %674 = vmatmul.mubr.bf16.gmra.mrb[0].mxu0 %v499
      %v675 = vpop.f32.mrb[0].mxu0
      %v676 = vadd.f32 0.0, %v675
      %v677 = vpop.f32.mrb[0].mxu0
      %v678 = vpop.f32.mrb[0].mxu0
      %v679 = vadd.f32 0.0, %v678
      %v680 = vpop.f32.mrb[0].mxu0
      %681 = vdwg.mxu0
      %682 = vst [vmem:[#allocation2] sm:$0xff] %v540
      %683 = vst [vmem:[#allocation2 + $0x8] sm:$0xff] %v543
      %684 = vst [vmem:[#allocation2 + $0x10] sm:$0xff] %v548
      %685 = vst [vmem:[#allocation2 + $0x18] sm:$0xff] %v551
      %686 = vst [vmem:[#allocation2 + $0x20] sm:$0xff] %v556
      %687 = vst [vmem:[#allocation2 + $0x28] sm:$0xff] %v559
      %688 = vst [vmem:[#allocation2 + $0x30] sm:$0xff] %v564
      %689 = vst [vmem:[#allocation2 + $0x38] sm:$0xff] %v567
      %690 = vst [vmem:[#allocation2 + $0x40] sm:$0xff] %v572
      %691 = vst [vmem:[#allocation2 + $0x48] sm:$0xff] %v575
      %692 = vst [vmem:[#allocation2 + $0x50] sm:$0xff] %v580
      %693 = vst [vmem:[#allocation2 + $0x58] sm:$0xff] %v583
      %694 = vst [vmem:[#allocation2 + $0x60] sm:$0xff] %v588
      %695 = vst [vmem:[#allocation2 + $0x68] sm:$0xff] %v591
      %696 = vst [vmem:[#allocation2 + $0x70] sm:$0xff] %v596
      %697 = vst [vmem:[#allocation2 + $0x78] sm:$0xff] %v599
      %698 = vst [vmem:[#allocation2 + $0x80] sm:$0xff] %v604
      %699 = vst [vmem:[#allocation2 + $0x88] sm:$0xff] %v607
      %700 = vst [vmem:[#allocation2 + $0x90] sm:$0xff] %v612
      %701 = vst [vmem:[#allocation2 + $0x98] sm:$0xff] %v615
      %702 = vst [vmem:[#allocation2 + $0xa0] sm:$0xff] %v620
      %703 = vst [vmem:[#allocation2 + $0xa8] sm:$0xff] %v623
      %704 = vst [vmem:[#allocation2 + $0xb0] sm:$0xff] %v628
      %705 = vst [vmem:[#allocation2 + $0xb8] sm:$0xff] %v631
      %706 = vst [vmem:[#allocation2 + $0xc0] sm:$0xff] %v636
      %707 = vst [vmem:[#allocation2 + $0xc8] sm:$0xff] %v639
      %708 = vst [vmem:[#allocation2 + $0xd0] sm:$0xff] %v644
      %709 = vst [vmem:[#allocation2 + $0xd8] sm:$0xff] %v647
      %710 = vst [vmem:[#allocation2 + $0xe0] sm:$0xff] %v652
      %711 = vst [vmem:[#allocation2 + $0xe8] sm:$0xff] %v655
      %712 = vst [vmem:[#allocation2 + $0xf0] sm:$0xff] %v660
      %713 = vst [vmem:[#allocation2 + $0xf8] sm:$0xff] %v663
      %714 = vst [vmem:[#allocation2 + $0x100] sm:$0xff] %v668
      %715 = vst [vmem:[#allocation2 + $0x108] sm:$0xff] %v671
      %716 = vst [vmem:[#allocation2 + $0x110] sm:$0xff] %v676
      %717 = vst [vmem:[#allocation2 + $0x118] sm:$0xff] %v679
      %v718 = vld [vmem:[%s289] sm:$0xf]
      %v719 = vld [vmem:[%s289 + $0x4] sm:$0xf]
      %v720 = vld [vmem:[%s289 + $0x8] sm:$0xf]
      %v721 = vld [vmem:[%s289 + $0xc] sm:$0xf]
      %v722 = vld [vmem:[%s289 + $0x10] sm:$0xf]
      %v723 = vld [vmem:[%s289 + $0x14] sm:$0xf]
      %v724 = vld [vmem:[%s289 + $0x18] sm:$0xf]
      %v725 = vld [vmem:[%s289 + $0x1c] sm:$0xf]
      %v726 = vld [vmem:[%s289 + $0x20] sm:$0xf]
      %v727 = vld [vmem:[%s289 + $0x24] sm:$0xf]
      %v728 = vld [vmem:[%s289 + $0x28] sm:$0xf]
      %v729 = vld [vmem:[%s289 + $0x2c] sm:$0xf]
      %v730 = vld [vmem:[%s289 + $0x30] sm:$0xf]
      %v731 = vld [vmem:[%s289 + $0x34] sm:$0xf]
      %v732 = vld [vmem:[%s289 + $0x38] sm:$0xf]
      %v733 = vld [vmem:[%s289 + $0x3c] sm:$0xf]
      %v734 = vld [vmem:[%s289 + $0x40] sm:$0xf]
      %v735 = vld [vmem:[%s289 + $0x44] sm:$0xf]
      %v736 = vld [vmem:[%s289 + $0x48] sm:$0xf]
      %v737 = vld [vmem:[%s289 + $0x4c] sm:$0xf]
      %v738 = vld [vmem:[%s289 + $0x50] sm:$0xf]
      %v739 = vld [vmem:[%s289 + $0x54] sm:$0xf]
      %v740 = vld [vmem:[%s289 + $0x58] sm:$0xf]
      %v741 = vld [vmem:[%s289 + $0x5c] sm:$0xf]
      %v742 = vld [vmem:[%s289 + $0x60] sm:$0xf]
      %v743 = vld [vmem:[%s289 + $0x64] sm:$0xf]
      %v744 = vld [vmem:[%s289 + $0x68] sm:$0xf]
      %v745 = vld [vmem:[%s289 + $0x6c] sm:$0xf]
      %v746 = vld [vmem:[%s289 + $0x70] sm:$0xf]
      %v747 = vld [vmem:[%s289 + $0x74] sm:$0xf]
      %v748 = vld [vmem:[%s289 + $0x78] sm:$0xf]
      %v749 = vld [vmem:[%s289 + $0x7c] sm:$0xf]
      %v750 = vld [vmem:[%s289 + $0x80] sm:$0xf]
      %v751 = vld [vmem:[%s289 + $0x84] sm:$0xf]
      %v752 = vld [vmem:[%s289 + $0x88] sm:$0xf]
      %v753 = vld [vmem:[%s289 + $0x8c] sm:$0xf]
      %v754 = vld [vmem:[%s289 + $0x90] sm:$0x1]
      %s755 = scalar_lea.vmem %s294, 4
      %v756 = vld [vmem:[%s755] sm:$0xf]
      %v794 = vunpack.c.l.b16 %v718
      %v795 = vunpack.c.l.b16 %v719
      %v796 = vunpack.c.l.b16 %v720
      %v797 = vunpack.c.l.b16 %v721
      %v798 = vunpack.c.l.b16 %v722
      %v799 = vunpack.c.l.b16 %v723
      %v800 = vunpack.c.l.b16 %v724
      %v801 = vunpack.c.l.b16 %v725
      %v802 = vunpack.c.l.b16 %v726
      %v803 = vunpack.c.l.b16 %v727
      %v804 = vunpack.c.l.b16 %v728
      %v805 = vunpack.c.l.b16 %v729
      %v806 = vunpack.c.l.b16 %v730
      %v807 = vunpack.c.l.b16 %v731
      %v808 = vunpack.c.l.b16 %v732
      %v809 = vunpack.c.l.b16 %v733
      %v810 = vunpack.c.l.b16 %v734
      %v811 = vunpack.c.l.b16 %v735
      %v812 = vunpack.c.l.b16 %v736
      %v813 = vunpack.c.l.b16 %v737
      %v814 = vunpack.c.l.b16 %v738
      %v815 = vunpack.c.l.b16 %v739
      %v816 = vunpack.c.l.b16 %v740
      %v817 = vunpack.c.l.b16 %v741
      %v818 = vunpack.c.l.b16 %v742
      %v819 = vunpack.c.l.b16 %v743
      %v820 = vunpack.c.l.b16 %v744
      %v821 = vunpack.c.l.b16 %v745
      %v822 = vunpack.c.l.b16 %v746
      %v823 = vunpack.c.l.b16 %v747
      %v824 = vunpack.c.l.b16 %v748
      %v825 = vunpack.c.l.b16 %v749
      %v826 = vunpack.c.l.b16 %v750
      %v827 = vunpack.c.l.b16 %v751
      %v828 = vunpack.c.l.b16 %v752
      %v829 = vunpack.c.l.b16 %v753
      %v830 = vunpack.c.l.b16 %v754
      %v831 = vpack.c.b16 %v795, %v794
      %v832 = vpack.c.b16 %v797, %v796
      %v833 = vpack.c.b16 %v799, %v798
      %v834 = vpack.c.b16 %v801, %v800
      %v835 = vpack.c.b16 %v803, %v802
      %v836 = vpack.c.b16 %v805, %v804
      %v837 = vpack.c.b16 %v807, %v806
      %v838 = vpack.c.b16 %v809, %v808
      %v839 = vpack.c.b16 %v811, %v810
      %v840 = vpack.c.b16 %v813, %v812
      %v841 = vpack.c.b16 %v815, %v814
      %v842 = vpack.c.b16 %v817, %v816
      %v843 = vpack.c.b16 %v819, %v818
      %v844 = vpack.c.b16 %v821, %v820
      %v845 = vpack.c.b16 %v823, %v822
      %v846 = vpack.c.b16 %v825, %v824
      %v847 = vpack.c.b16 %v827, %v826
      %v848 = vpack.c.b16 %v829, %v828
      %v849 = vpack.c.b16 %v830, %v830
      %vm850 = vsmask.f32 7424
      %v852 = vshrl.u32 %v831, 16
      %v854 = vshll.u32 %v831, 16
      %v856 = vrot.slane %v854, 1
      %v857 = vor.u32 %v852, %v856
      %v859 = vshll.u32 %v832, 16
      %v861 = vrot.slane %v859, 1
      %v862 = vsel %vm850, %v857, %v861
      %v863 = vshrl.u32 %v832, 16
      %v865 = vor.u32 %v863, %v861
      %v867 = vshll.u32 %v833, 16
      %v869 = vrot.slane %v867, 1
      %v870 = vsel %vm850, %v865, %v869
      %v871 = vshrl.u32 %v833, 16
      %v873 = vor.u32 %v871, %v869
      %v875 = vshll.u32 %v834, 16
      %v877 = vrot.slane %v875, 1
      %v878 = vsel %vm850, %v873, %v877
      %v879 = vshrl.u32 %v834, 16
      %v881 = vor.u32 %v879, %v877
      %v883 = vshll.u32 %v835, 16
      %v885 = vrot.slane %v883, 1
      %v886 = vsel %vm850, %v881, %v885
      %v887 = vshrl.u32 %v835, 16
      %v889 = vor.u32 %v887, %v885
      %v891 = vshll.u32 %v836, 16
      %v893 = vrot.slane %v891, 1
      %v894 = vsel %vm850, %v889, %v893
      %v895 = vshrl.u32 %v836, 16
      %v897 = vor.u32 %v895, %v893
      %v899 = vshll.u32 %v837, 16
      %v901 = vrot.slane %v899, 1
      %v902 = vsel %vm850, %v897, %v901
      %v903 = vshrl.u32 %v837, 16
      %v905 = vor.u32 %v903, %v901
      %v907 = vshll.u32 %v838, 16
      %v909 = vrot.slane %v907, 1
      %v910 = vsel %vm850, %v905, %v909
      %v911 = vshrl.u32 %v838, 16
      %v913 = vor.u32 %v911, %v909
      %v915 = vshll.u32 %v839, 16
      %v917 = vrot.slane %v915, 1
      %v918 = vsel %vm850, %v913, %v917
      %v919 = vshrl.u32 %v839, 16
      %v921 = vor.u32 %v919, %v917
      %v923 = vshll.u32 %v840, 16
      %v925 = vrot.slane %v923, 1
      %v926 = vsel %vm850, %v921, %v925
      %v927 = vshrl.u32 %v840, 16
      %v929 = vor.u32 %v927, %v925
      %v931 = vshll.u32 %v841, 16
      %v933 = vrot.slane %v931, 1
      %v934 = vsel %vm850, %v929, %v933
      %v935 = vshrl.u32 %v841, 16
      %v937 = vor.u32 %v935, %v933
      %v939 = vshll.u32 %v842, 16
      %v941 = vrot.slane %v939, 1
      %v942 = vsel %vm850, %v937, %v941
      %v943 = vshrl.u32 %v842, 16
      %v945 = vor.u32 %v943, %v941
      %v947 = vshll.u32 %v843, 16
      %v949 = vrot.slane %v947, 1
      %v950 = vsel %vm850, %v945, %v949
      %v951 = vshrl.u32 %v843, 16
      %v953 = vor.u32 %v951, %v949
      %v955 = vshll.u32 %v844, 16
      %v957 = vrot.slane %v955, 1
      %v958 = vsel %vm850, %v953, %v957
      %v959 = vshrl.u32 %v844, 16
      %v961 = vor.u32 %v959, %v957
      %v963 = vshll.u32 %v845, 16
      %v965 = vrot.slane %v963, 1
      %v966 = vsel %vm850, %v961, %v965
      %v967 = vshrl.u32 %v845, 16
      %v969 = vor.u32 %v967, %v965
      %v971 = vshll.u32 %v846, 16
      %v973 = vrot.slane %v971, 1
      %v974 = vsel %vm850, %v969, %v973
      %v975 = vshrl.u32 %v846, 16
      %v977 = vor.u32 %v975, %v973
      %v979 = vshll.u32 %v847, 16
      %v981 = vrot.slane %v979, 1
      %v982 = vsel %vm850, %v977, %v981
      %v983 = vshrl.u32 %v847, 16
      %v985 = vor.u32 %v983, %v981
      %v987 = vshll.u32 %v848, 16
      %v989 = vrot.slane %v987, 1
      %v990 = vsel %vm850, %v985, %v989
      %v991 = vshrl.u32 %v848, 16
      %v993 = vor.u32 %v991, %v989
      %v995 = vshll.u32 %v849, 16
      %v997 = vrot.slane %v995, 1
      %v998 = vsel %vm850, %v993, %v997
      %v1000 = vsel %vm446, %v862, 0
      %v1003 = vsel %vm446, %v870, 0
      %v1006 = vsel %vm446, %v878, 0
      %v1009 = vsel %vm446, %v886, 0
      %v1012 = vsel %vm446, %v894, 0
      %v1015 = vsel %vm446, %v902, 0
      %v1018 = vsel %vm446, %v910, 0
      %v1021 = vsel %vm446, %v918, 0
      %v1024 = vsel %vm446, %v926, 0
      %v1027 = vsel %vm446, %v934, 0
      %v1030 = vsel %vm446, %v942, 0
      %v1033 = vsel %vm446, %v950, 0
      %v1036 = vsel %vm446, %v958, 0
      %v1039 = vsel %vm446, %v966, 0
      %v1042 = vsel %vm446, %v974, 0
      %v1045 = vsel %vm446, %v982, 0
      %v1048 = vsel %vm446, %v990, 0
      %v1051 = vsel %vm446, %v998, 0
      %v1054 = vsel %vm501, %v756, 0
      %1056 = vmatprep.subr.bf16.mxu0 0
      %1057 = vmatpush1.bf16.msra.mxu0 %v1054
      %1058 = vmatprep.subr.bf16.mxu0 0
      %1059 = vmatpush1.bf16.msra.mxu0 0
      %1060 = vmatprep.subr.bf16.mxu0 0
      %1061 = vmatpush1.bf16.msra.mxu0 0
      %1062 = vmatprep.subr.bf16.mxu0 0
      %1063 = vmatpush1.bf16.msra.mxu0 0
      %1064 = vmatprep.subr.bf16.mxu0 0
      %1065 = vmatpush1.bf16.msra.mxu0 0
      %1066 = vmatprep.subr.bf16.mxu0 0
      %1067 = vmatpush1.bf16.msra.mxu0 0
      %1068 = vmatprep.subr.bf16.mxu0 0
      %1069 = vmatpush1.bf16.msra.mxu0 0
      %1070 = vmatprep.subr.bf16.mxu0 0
      %1071 = vmatpush1.bf16.msra.mxu0 0
      %1072 = vmatprep.subr.bf16.mxu0 0
      %1073 = vmatpush1.bf16.msra.mxu0 0
      %1074 = vmatprep.subr.bf16.mxu0 0
      %1075 = vmatpush1.bf16.msra.mxu0 0
      %1076 = vmatprep.subr.bf16.mxu0 0
      %1077 = vmatpush1.bf16.msra.mxu0 0
      %1078 = vmatprep.subr.bf16.mxu0 0
      %1079 = vmatpush1.bf16.msra.mxu0 0
      %1080 = vmatprep.subr.bf16.mxu0 0
      %1081 = vmatpush1.bf16.msra.mxu0 0
      %1082 = vmatprep.subr.bf16.mxu0 0
      %1083 = vmatpush1.bf16.msra.mxu0 0
      %1084 = vmatprep.subr.bf16.mxu0 0
      %1085 = vmatpush1.bf16.msra.mxu0 0
      %1086 = vmatprep.subr.bf16.mxu0 0
      %1087 = vmatpush1.bf16.msra.mxu0 0
      %1088 = vmatprep.mubr.bf16.mxu0 0
      %1089 = vmatmul.mubr.bf16.gmra.mrb[0].mxu0 %v1000
      %v1090 = vpop.f32.mrb[0].mxu0
      %v1091 = vadd.f32 0.0, %v1090
      %v1092 = vpop.f32.mrb[0].mxu0
      %v1093 = vpop.f32.mrb[0].mxu0
      %v1094 = vadd.f32 0.0, %v1093
      %v1095 = vpop.f32.mrb[0].mxu0
      %1096 = vmatprep.mubr.bf16.mxu0 0
      %1097 = vmatmul.mubr.bf16.gmra.mrb[0].mxu0 %v1003
      %v1098 = vpop.f32.mrb[0].mxu0
      %v1099 = vadd.f32 0.0, %v1098
      %v1100 = vpop.f32.mrb[0].mxu0
      %v1101 = vpop.f32.mrb[0].mxu0
      %v1102 = vadd.f32 0.0, %v1101
      %v1103 = vpop.f32.mrb[0].mxu0
      %1104 = vmatprep.mubr.bf16.mxu0 0
      %1105 = vmatmul.mubr.bf16.gmra.mrb[0].mxu0 %v1006
      %v1106 = vpop.f32.mrb[0].mxu0
      %v1107 = vadd.f32 0.0, %v1106
      %v1108 = vpop.f32.mrb[0].mxu0
      %v1109 = vpop.f32.mrb[0].mxu0
      %v1110 = vadd.f32 0.0, %v1109
      %v1111 = vpop.f32.mrb[0].mxu0
      %1112 = vmatprep.mubr.bf16.mxu0 0
      %1113 = vmatmul.mubr.bf16.gmra.mrb[0].mxu0 %v1009
      %v1114 = vpop.f32.mrb[0].mxu0
      %v1115 = vadd.f32 0.0, %v1114
      %v1116 = vpop.f32.mrb[0].mxu0
      %v1117 = vpop.f32.mrb[0].mxu0
      %v1118 = vadd.f32 0.0, %v1117
      %v1119 = vpop.f32.mrb[0].mxu0
      %1120 = vmatprep.mubr.bf16.mxu0 0
      %1121 = vmatmul.mubr.bf16.gmra.mrb[0].mxu0 %v1012
      %v1122 = vpop.f32.mrb[0].mxu0
      %v1123 = vadd.f32 0.0, %v1122
      %v1124 = vpop.f32.mrb[0].mxu0
      %v1125 = vpop.f32.mrb[0].mxu0
      %v1126 = vadd.f32 0.0, %v1125
      %v1127 = vpop.f32.mrb[0].mxu0
      %1128 = vmatprep.mubr.bf16.mxu0 0
      %1129 = vmatmul.mubr.bf16.gmra.mrb[0].mxu0 %v1015
      %v1130 = vpop.f32.mrb[0].mxu0
      %v1131 = vadd.f32 0.0, %v1130
      %v1132 = vpop.f32.mrb[0].mxu0
      %v1133 = vpop.f32.mrb[0].mxu0
      %v1134 = vadd.f32 0.0, %v1133
      %v1135 = vpop.f32.mrb[0].mxu0
      %1136 = vmatprep.mubr.bf16.mxu0 0
      %1137 = vmatmul.mubr.bf16.gmra.mrb[0].mxu0 %v1018
      %v1138 = vpop.f32.mrb[0].mxu0
      %v1139 = vadd.f32 0.0, %v1138
      %v1140 = vpop.f32.mrb[0].mxu0
      %v1141 = vpop.f32.mrb[0].mxu0
      %v1142 = vadd.f32 0.0, %v1141
      %v1143 = vpop.f32.mrb[0].mxu0
      %1144 = vmatprep.mubr.bf16.mxu0 0
      %1145 = vmatmul.mubr.bf16.gmra.mrb[0].mxu0 %v1021
      %v1146 = vpop.f32.mrb[0].mxu0
      %v1147 = vadd.f32 0.0, %v1146
      %v1148 = vpop.f32.mrb[0].mxu0
      %v1149 = vpop.f32.mrb[0].mxu0
      %v1150 = vadd.f32 0.0, %v1149
      %v1151 = vpop.f32.mrb[0].mxu0
      %1152 = vmatprep.mubr.bf16.mxu0 0
      %1153 = vmatmul.mubr.bf16.gmra.mrb[0].mxu0 %v1024
      %v1154 = vpop.f32.mrb[0].mxu0
      %v1155 = vadd.f32 0.0, %v1154
      %v1156 = vpop.f32.mrb[0].mxu0
      %v1157 = vpop.f32.mrb[0].mxu0
      %v1158 = vadd.f32 0.0, %v1157
      %v1159 = vpop.f32.mrb[0].mxu0
      %1160 = vmatprep.mubr.bf16.mxu0 0
      %1161 = vmatmul.mubr.bf16.gmra.mrb[0].mxu0 %v1027
      %v1162 = vpop.f32.mrb[0].mxu0
      %v1163 = vadd.f32 0.0, %v1162
      %v1164 = vpop.f32.mrb[0].mxu0
      %v1165 = vpop.f32.mrb[0].mxu0
      %v1166 = vadd.f32 0.0, %v1165
      %v1167 = vpop.f32.mrb[0].mxu0
      %1168 = vmatprep.mubr.bf16.mxu0 0
      %1169 = vmatmul.mubr.bf16.gmra.mrb[0].mxu0 %v1030
      %v1170 = vpop.f32.mrb[0].mxu0
      %v1171 = vadd.f32 0.0, %v1170
      %v1172 = vpop.f32.mrb[0].mxu0
      %v1173 = vpop.f32.mrb[0].mxu0
      %v1174 = vadd.f32 0.0, %v1173
      %v1175 = vpop.f32.mrb[0].mxu0
      %1176 = vmatprep.mubr.bf16.mxu0 0
      %1177 = vmatmul.mubr.bf16.gmra.mrb[0].mxu0 %v1033
      %v1178 = vpop.f32.mrb[0].mxu0
      %v1179 = vadd.f32 0.0, %v1178
      %v1180 = vpop.f32.mrb[0].mxu0
      %v1181 = vpop.f32.mrb[0].mxu0
      %v1182 = vadd.f32 0.0, %v1181
      %v1183 = vpop.f32.mrb[0].mxu0
      %1184 = vmatprep.mubr.bf16.mxu0 0
      %1185 = vmatmul.mubr.bf16.gmra.mrb[0].mxu0 %v1036
      %v1186 = vpop.f32.mrb[0].mxu0
      %v1187 = vadd.f32 0.0, %v1186
      %v1188 = vpop.f32.mrb[0].mxu0
      %v1189 = vpop.f32.mrb[0].mxu0
      %v1190 = vadd.f32 0.0, %v1189
      %v1191 = vpop.f32.mrb[0].mxu0
      %1192 = vmatprep.mubr.bf16.mxu0 0
      %1193 = vmatmul.mubr.bf16.gmra.mrb[0].mxu0 %v1039
      %v1194 = vpop.f32.mrb[0].mxu0
      %v1195 = vadd.f32 0.0, %v1194
      %v1196 = vpop.f32.mrb[0].mxu0
      %v1197 = vpop.f32.mrb[0].mxu0
      %v1198 = vadd.f32 0.0, %v1197
      %v1199 = vpop.f32.mrb[0].mxu0
      %1200 = vmatprep.mubr.bf16.mxu0 0
      %1201 = vmatmul.mubr.bf16.gmra.mrb[0].mxu0 %v1042
      %v1202 = vpop.f32.mrb[0].mxu0
      %v1203 = vadd.f32 0.0, %v1202
      %v1204 = vpop.f32.mrb[0].mxu0
      %v1205 = vpop.f32.mrb[0].mxu0
      %v1206 = vadd.f32 0.0, %v1205
      %v1207 = vpop.f32.mrb[0].mxu0
      %1208 = vmatprep.mubr.bf16.mxu0 0
      %1209 = vmatmul.mubr.bf16.gmra.mrb[0].mxu0 %v1045
      %v1210 = vpop.f32.mrb[0].mxu0
      %v1211 = vadd.f32 0.0, %v1210
      %v1212 = vpop.f32.mrb[0].mxu0
      %v1213 = vpop.f32.mrb[0].mxu0
      %v1214 = vadd.f32 0.0, %v1213
      %v1215 = vpop.f32.mrb[0].mxu0
      %1216 = vmatprep.mubr.bf16.mxu0 0
      %1217 = vmatmul.mubr.bf16.gmra.mrb[0].mxu0 %v1048
      %v1218 = vpop.f32.mrb[0].mxu0
      %v1219 = vadd.f32 0.0, %v1218
      %v1220 = vpop.f32.mrb[0].mxu0
      %v1221 = vpop.f32.mrb[0].mxu0
      %v1222 = vadd.f32 0.0, %v1221
      %v1223 = vpop.f32.mrb[0].mxu0
      %1224 = vmatprep.mubr.bf16.mxu0 0
      %1225 = vmatmul.mubr.bf16.gmra.mrb[0].mxu0 %v1051
      %v1226 = vpop.f32.mrb[0].mxu0
      %v1227 = vadd.f32 0.0, %v1226
      %v1228 = vpop.f32.mrb[0].mxu0
      %v1229 = vpop.f32.mrb[0].mxu0
      %v1230 = vadd.f32 0.0, %v1229
      %v1231 = vpop.f32.mrb[0].mxu0
      %1232 = vdwg.mxu0
      %v1233 = vld [vmem:[#allocation2] sm:$0xff]
      %v1234 = vld [vmem:[#allocation2 + $0x8] sm:$0xff]
      %v1235 = vld [vmem:[#allocation2 + $0x10] sm:$0xff]
      %v1236 = vld [vmem:[#allocation2 + $0x18] sm:$0xff]
      %v1237 = vld [vmem:[#allocation2 + $0x20] sm:$0xff]
      %v1238 = vld [vmem:[#allocation2 + $0x28] sm:$0xff]
      %v1239 = vld [vmem:[#allocation2 + $0x30] sm:$0xff]
      %v1240 = vld [vmem:[#allocation2 + $0x38] sm:$0xff]
      %v1241 = vld [vmem:[#allocation2 + $0x40] sm:$0xff]
      %v1242 = vld [vmem:[#allocation2 + $0x48] sm:$0xff]
      %v1243 = vld [vmem:[#allocation2 + $0x50] sm:$0xff]
      %v1244 = vld [vmem:[#allocation2 + $0x58] sm:$0xff]
      %v1245 = vld [vmem:[#allocation2 + $0x60] sm:$0xff]
      %v1246 = vld [vmem:[#allocation2 + $0x68] sm:$0xff]
      %v1247 = vld [vmem:[#allocation2 + $0x70] sm:$0xff]
      %v1248 = vld [vmem:[#allocation2 + $0x78] sm:$0xff]
      %v1249 = vld [vmem:[#allocation2 + $0x80] sm:$0xff]
      %v1250 = vld [vmem:[#allocation2 + $0x88] sm:$0xff]
      %v1251 = vld [vmem:[#allocation2 + $0x90] sm:$0xff]
      %v1252 = vld [vmem:[#allocation2 + $0x98] sm:$0xff]
      %v1253 = vld [vmem:[#allocation2 + $0xa0] sm:$0xff]
      %v1254 = vld [vmem:[#allocation2 + $0xa8] sm:$0xff]
      %v1255 = vld [vmem:[#allocation2 + $0xb0] sm:$0xff]
      %v1256 = vld [vmem:[#allocation2 + $0xb8] sm:$0xff]
      %v1257 = vld [vmem:[#allocation2 + $0xc0] sm:$0xff]
      %v1258 = vld [vmem:[#allocation2 + $0xc8] sm:$0xff]
      %v1259 = vld [vmem:[#allocation2 + $0xd0] sm:$0xff]
      %v1260 = vld [vmem:[#allocation2 + $0xd8] sm:$0xff]
      %v1261 = vld [vmem:[#allocation2 + $0xe0] sm:$0xff]
      %v1262 = vld [vmem:[#allocation2 + $0xe8] sm:$0xff]
      %v1263 = vld [vmem:[#allocation2 + $0xf0] sm:$0xff]
      %v1264 = vld [vmem:[#allocation2 + $0xf8] sm:$0xff]
      %v1265 = vld [vmem:[#allocation2 + $0x100] sm:$0xff]
      %v1266 = vld [vmem:[#allocation2 + $0x108] sm:$0xff]
      %v1267 = vld [vmem:[#allocation2 + $0x110] sm:$0xff]
      %v1268 = vld [vmem:[#allocation2 + $0x118] sm:$0xff]
      %v1269 = vadd.f32 %v1233, %v1091
      %v1270 = vadd.f32 %v1234, %v1094
      %v1271 = vadd.f32 %v1235, %v1099
      %v1272 = vadd.f32 %v1236, %v1102
      %v1273 = vadd.f32 %v1237, %v1107
      %v1274 = vadd.f32 %v1238, %v1110
      %v1275 = vadd.f32 %v1239, %v1115
      %v1276 = vadd.f32 %v1240, %v1118
      %v1277 = vadd.f32 %v1241, %v1123
      %v1278 = vadd.f32 %v1242, %v1126
      %v1279 = vadd.f32 %v1243, %v1131
      %v1280 = vadd.f32 %v1244, %v1134
      %v1281 = vadd.f32 %v1245, %v1139
      %v1282 = vadd.f32 %v1246, %v1142
      %v1283 = vadd.f32 %v1247, %v1147
      %v1284 = vadd.f32 %v1248, %v1150
      %v1285 = vadd.f32 %v1249, %v1155
      %v1286 = vadd.f32 %v1250, %v1158
      %v1287 = vadd.f32 %v1251, %v1163
      %v1288 = vadd.f32 %v1252, %v1166
      %v1289 = vadd.f32 %v1253, %v1171
      %v1290 = vadd.f32 %v1254, %v1174
      %v1291 = vadd.f32 %v1255, %v1179
      %v1292 = vadd.f32 %v1256, %v1182
      %v1293 = vadd.f32 %v1257, %v1187
      %v1294 = vadd.f32 %v1258, %v1190
      %v1295 = vadd.f32 %v1259, %v1195
      %v1296 = vadd.f32 %v1260, %v1198
      %v1297 = vadd.f32 %v1261, %v1203
      %v1298 = vadd.f32 %v1262, %v1206
      %v1299 = vadd.f32 %v1263, %v1211
      %v1300 = vadd.f32 %v1264, %v1214
      %v1301 = vadd.f32 %v1265, %v1219
      %v1302 = vadd.f32 %v1266, %v1222
      %v1303 = vadd.f32 %v1267, %v1227
      %v1304 = vadd.f32 %v1268, %v1230
      %1305 = vst [vmem:[#allocation2] sm:$0xff] %v1269
      %1306 = vst [vmem:[#allocation2 + $0x8] sm:$0xff] %v1270
      %1307 = vst [vmem:[#allocation2 + $0x10] sm:$0xff] %v1271
      %1308 = vst [vmem:[#allocation2 + $0x18] sm:$0xff] %v1272
      %1309 = vst [vmem:[#allocation2 + $0x20] sm:$0xff] %v1273
      %1310 = vst [vmem:[#allocation2 + $0x28] sm:$0xff] %v1274
      %1311 = vst [vmem:[#allocation2 + $0x30] sm:$0xff] %v1275
      %1312 = vst [vmem:[#allocation2 + $0x38] sm:$0xff] %v1276
      %1313 = vst [vmem:[#allocation2 + $0x40] sm:$0xff] %v1277
      %1314 = vst [vmem:[#allocation2 + $0x48] sm:$0xff] %v1278
      %1315 = vst [vmem:[#allocation2 + $0x50] sm:$0xff] %v1279
      %1316 = vst [vmem:[#allocation2 + $0x58] sm:$0xff] %v1280
      %1317 = vst [vmem:[#allocation2 + $0x60] sm:$0xff] %v1281
      %1318 = vst [vmem:[#allocation2 + $0x68] sm:$0xff] %v1282
      %1319 = vst [vmem:[#allocation2 + $0x70] sm:$0xff] %v1283
      %1320 = vst [vmem:[#allocation2 + $0x78] sm:$0xff] %v1284
      %1321 = vst [vmem:[#allocation2 + $0x80] sm:$0xff] %v1285
      %1322 = vst [vmem:[#allocation2 + $0x88] sm:$0xff] %v1286
      %1323 = vst [vmem:[#allocation2 + $0x90] sm:$0xff] %v1287
      %1324 = vst [vmem:[#allocation2 + $0x98] sm:$0xff] %v1288
      %1325 = vst [vmem:[#allocation2 + $0xa0] sm:$0xff] %v1289
      %1326 = vst [vmem:[#allocation2 + $0xa8] sm:$0xff] %v1290
      %1327 = vst [vmem:[#allocation2 + $0xb0] sm:$0xff] %v1291
      %1328 = vst [vmem:[#allocation2 + $0xb8] sm:$0xff] %v1292
      %1329 = vst [vmem:[#allocation2 + $0xc0] sm:$0xff] %v1293
      %1330 = vst [vmem:[#allocation2 + $0xc8] sm:$0xff] %v1294
      %1331 = vst [vmem:[#allocation2 + $0xd0] sm:$0xff] %v1295
      %1332 = vst [vmem:[#allocation2 + $0xd8] sm:$0xff] %v1296
      %1333 = vst [vmem:[#allocation2 + $0xe0] sm:$0xff] %v1297
      %1334 = vst [vmem:[#allocation2 + $0xe8] sm:$0xff] %v1298
      %1335 = vst [vmem:[#allocation2 + $0xf0] sm:$0xff] %v1299
      %1336 = vst [vmem:[#allocation2 + $0xf8] sm:$0xff] %v1300
      %1337 = vst [vmem:[#allocation2 + $0x100] sm:$0xff] %v1301
      %1338 = vst [vmem:[#allocation2 + $0x108] sm:$0xff] %v1302
      %1339 = vst [vmem:[#allocation2 + $0x110] sm:$0xff] %v1303
      %1340 = vst [vmem:[#allocation2 + $0x118] sm:$0xff] %v1304
      %v1341 = vld [vmem:[%s289] sm:$0xe]
      %v1342 = vld [vmem:[%s289 + $0x4] sm:$0xf]
      %v1343 = vld [vmem:[%s289 + $0x8] sm:$0xf]
      %v1344 = vld [vmem:[%s289 + $0xc] sm:$0xf]
      %v1345 = vld [vmem:[%s289 + $0x10] sm:$0xf]
      %v1346 = vld [vmem:[%s289 + $0x14] sm:$0xf]
      %v1347 = vld [vmem:[%s289 + $0x18] sm:$0xf]
      %v1348 = vld [vmem:[%s289 + $0x1c] sm:$0xf]
      %v1349 = vld [vmem:[%s289 + $0x20] sm:$0xf]
      %v1350 = vld [vmem:[%s289 + $0x24] sm:$0xf]
      %v1351 = vld [vmem:[%s289 + $0x28] sm:$0xf]
      %v1352 = vld [vmem:[%s289 + $0x2c] sm:$0xf]
      %v1353 = vld [vmem:[%s289 + $0x30] sm:$0xf]
      %v1354 = vld [vmem:[%s289 + $0x34] sm:$0xf]
      %v1355 = vld [vmem:[%s289 + $0x38] sm:$0xf]
      %v1356 = vld [vmem:[%s289 + $0x3c] sm:$0xf]
      %v1357 = vld [vmem:[%s289 + $0x40] sm:$0xf]
      %v1358 = vld [vmem:[%s289 + $0x44] sm:$0xf]
      %v1359 = vld [vmem:[%s289 + $0x48] sm:$0xf]
      %v1360 = vld [vmem:[%s289 + $0x4c] sm:$0xf]
      %v1361 = vld [vmem:[%s289 + $0x50] sm:$0xf]
      %v1362 = vld [vmem:[%s289 + $0x54] sm:$0xf]
      %v1363 = vld [vmem:[%s289 + $0x58] sm:$0xf]
      %v1364 = vld [vmem:[%s289 + $0x5c] sm:$0xf]
      %v1365 = vld [vmem:[%s289 + $0x60] sm:$0xf]
      %v1366 = vld [vmem:[%s289 + $0x64] sm:$0xf]
      %v1367 = vld [vmem:[%s289 + $0x68] sm:$0xf]
      %v1368 = vld [vmem:[%s289 + $0x6c] sm:$0xf]
      %v1369 = vld [vmem:[%s289 + $0x70] sm:$0xf]
      %v1370 = vld [vmem:[%s289 + $0x74] sm:$0xf]
      %v1371 = vld [vmem:[%s289 + $0x78] sm:$0xf]
      %v1372 = vld [vmem:[%s289 + $0x7c] sm:$0xf]
      %v1373 = vld [vmem:[%s289 + $0x80] sm:$0xf]
      %v1374 = vld [vmem:[%s289 + $0x84] sm:$0xf]
      %v1375 = vld [vmem:[%s289 + $0x88] sm:$0xf]
      %v1376 = vld [vmem:[%s289 + $0x8c] sm:$0xf]
      %v1377 = vld [vmem:[%s289 + $0x90] sm:$0x1]
      %s1378 = scalar_lea.vmem %s294, 8
      %v1379 = vld [vmem:[%s1378] sm:$0xf]
      %v1417 = vunpack.c.l.b16 %v1341
      %v1418 = vunpack.c.l.b16 %v1342
      %v1419 = vunpack.c.l.b16 %v1343
      %v1420 = vunpack.c.l.b16 %v1344
      %v1421 = vunpack.c.l.b16 %v1345
      %v1422 = vunpack.c.l.b16 %v1346
      %v1423 = vunpack.c.l.b16 %v1347
      %v1424 = vunpack.c.l.b16 %v1348
      %v1425 = vunpack.c.l.b16 %v1349
      %v1426 = vunpack.c.l.b16 %v1350
      %v1427 = vunpack.c.l.b16 %v1351
      %v1428 = vunpack.c.l.b16 %v1352
      %v1429 = vunpack.c.l.b16 %v1353
      %v1430 = vunpack.c.l.b16 %v1354
      %v1431 = vunpack.c.l.b16 %v1355
      %v1432 = vunpack.c.l.b16 %v1356
      %v1433 = vunpack.c.l.b16 %v1357
      %v1434 = vunpack.c.l.b16 %v1358
      %v1435 = vunpack.c.l.b16 %v1359
      %v1436 = vunpack.c.l.b16 %v1360
      %v1437 = vunpack.c.l.b16 %v1361
      %v1438 = vunpack.c.l.b16 %v1362
      %v1439 = vunpack.c.l.b16 %v1363
      %v1440 = vunpack.c.l.b16 %v1364
      %v1441 = vunpack.c.l.b16 %v1365
      %v1442 = vunpack.c.l.b16 %v1366
      %v1443 = vunpack.c.l.b16 %v1367
      %v1444 = vunpack.c.l.b16 %v1368
      %v1445 = vunpack.c.l.b16 %v1369
      %v1446 = vunpack.c.l.b16 %v1370
      %v1447 = vunpack.c.l.b16 %v1371
      %v1448 = vunpack.c.l.b16 %v1372
      %v1449 = vunpack.c.l.b16 %v1373
      %v1450 = vunpack.c.l.b16 %v1374
      %v1451 = vunpack.c.l.b16 %v1375
      %v1452 = vunpack.c.l.b16 %v1376
      %v1453 = vunpack.c.l.b16 %v1377
      %v1454 = vpack.c.b16 %v1418, %v1417
      %v1455 = vpack.c.b16 %v1420, %v1419
      %v1456 = vpack.c.b16 %v1422, %v1421
      %v1457 = vpack.c.b16 %v1424, %v1423
      %v1458 = vpack.c.b16 %v1426, %v1425
      %v1459 = vpack.c.b16 %v1428, %v1427
      %v1460 = vpack.c.b16 %v1430, %v1429
      %v1461 = vpack.c.b16 %v1432, %v1431
      %v1462 = vpack.c.b16 %v1434, %v1433
      %v1463 = vpack.c.b16 %v1436, %v1435
      %v1464 = vpack.c.b16 %v1438, %v1437
      %v1465 = vpack.c.b16 %v1440, %v1439
      %v1466 = vpack.c.b16 %v1442, %v1441
      %v1467 = vpack.c.b16 %v1444, %v1443
      %v1468 = vpack.c.b16 %v1446, %v1445
      %v1469 = vpack.c.b16 %v1448, %v1447
      %v1470 = vpack.c.b16 %v1450, %v1449
      %v1471 = vpack.c.b16 %v1452, %v1451
      %v1472 = vpack.c.b16 %v1453, %v1453
      %vm1473 = vcmask 1046528
      %v1474 = vrot.slane %v1454, 1
      %v1475 = vrot.slane %v1455, 1
      %v1476 = vsel %vm1473, %v1474, %v1475
      %v1477 = vrot.slane %v1456, 1
      %v1478 = vsel %vm1473, %v1475, %v1477
      %v1479 = vrot.slane %v1457, 1
      %v1480 = vsel %vm1473, %v1477, %v1479
      %v1481 = vrot.slane %v1458, 1
      %v1482 = vsel %vm1473, %v1479, %v1481
      %v1483 = vrot.slane %v1459, 1
      %v1484 = vsel %vm1473, %v1481, %v1483
      %v1485 = vrot.slane %v1460, 1
      %v1486 = vsel %vm1473, %v1483, %v1485
      %v1487 = vrot.slane %v1461, 1
      %v1488 = vsel %vm1473, %v1485, %v1487
      %v1489 = vrot.slane %v1462, 1
      %v1490 = vsel %vm1473, %v1487, %v1489
      %v1491 = vrot.slane %v1463, 1
      %v1492 = vsel %vm1473, %v1489, %v1491
      %v1493 = vrot.slane %v1464, 1
      %v1494 = vsel %vm1473, %v1491, %v1493
      %v1495 = vrot.slane %v1465, 1
      %v1496 = vsel %vm1473, %v1493, %v1495
      %v1497 = vrot.slane %v1466, 1
      %v1498 = vsel %vm1473, %v1495, %v1497
      %v1499 = vrot.slane %v1467, 1
      %v1500 = vsel %vm1473, %v1497, %v1499
      %v1501 = vrot.slane %v1468, 1
      %v1502 = vsel %vm1473, %v1499, %v1501
      %v1503 = vrot.slane %v1469, 1
      %v1504 = vsel %vm1473, %v1501, %v1503
      %v1505 = vrot.slane %v1470, 1
      %v1506 = vsel %vm1473, %v1503, %v1505
      %v1507 = vrot.slane %v1471, 1
      %v1508 = vsel %vm1473, %v1505, %v1507
      %v1509 = vrot.slane %v1472, 1
      %v1510 = vsel %vm1473, %v1507, %v1509
      %v1512 = vsel %vm446, %v1476, 0
      %v1515 = vsel %vm446, %v1478, 0
      %v1518 = vsel %vm446, %v1480, 0
      %v1521 = vsel %vm446, %v1482, 0
      %v1524 = vsel %vm446, %v1484, 0
      %v1527 = vsel %vm446, %v1486, 0
      %v1530 = vsel %vm446, %v1488, 0
      %v1533 = vsel %vm446, %v1490, 0
      %v1536 = vsel %vm446, %v1492, 0
      %v1539 = vsel %vm446, %v1494, 0
      %v1542 = vsel %vm446, %v1496, 0
      %v1545 = vsel %vm446, %v1498, 0
      %v1548 = vsel %vm446, %v1500, 0
      %v1551 = vsel %vm446, %v1502, 0
      %v1554 = vsel %vm446, %v1504, 0
      %v1557 = vsel %vm446, %v1506, 0
      %v1560 = vsel %vm446, %v1508, 0
      %v1563 = vsel %vm446, %v1510, 0
      %v1566 = vsel %vm501, %v1379, 0
      %1568 = vmatprep.subr.bf16.mxu0 0
      %1569 = vmatpush1.bf16.msra.mxu0 %v1566
      %1570 = vmatprep.subr.bf16.mxu0 0
      %1571 = vmatpush1.bf16.msra.mxu0 0
      %1572 = vmatprep.subr.bf16.mxu0 0
      %1573 = vmatpush1.bf16.msra.mxu0 0
      %1574 = vmatprep.subr.bf16.mxu0 0
      %1575 = vmatpush1.bf16.msra.mxu0 0
      %1576 = vmatprep.subr.bf16.mxu0 0
      %1577 = vmatpush1.bf16.msra.mxu0 0
      %1578 = vmatprep.subr.bf16.mxu0 0
      %1579 = vmatpush1.bf16.msra.mxu0 0
      %1580 = vmatprep.subr.bf16.mxu0 0
      %1581 = vmatpush1.bf16.msra.mxu0 0
      %1582 = vmatprep.subr.bf16.mxu0 0
      %1583 = vmatpush1.bf16.msra.mxu0 0
      %1584 = vmatprep.subr.bf16.mxu0 0
      %1585 = vmatpush1.bf16.msra.mxu0 0
      %1586 = vmatprep.subr.bf16.mxu0 0
      %1587 = vmatpush1.bf16.msra.mxu0 0
      %1588 = vmatprep.subr.bf16.mxu0 0
      %1589 = vmatpush1.bf16.msra.mxu0 0
      %1590 = vmatprep.subr.bf16.mxu0 0
      %1591 = vmatpush1.bf16.msra.mxu0 0
      %1592 = vmatprep.subr.bf16.mxu0 0
      %1593 = vmatpush1.bf16.msra.mxu0 0
      %1594 = vmatprep.subr.bf16.mxu0 0
      %1595 = vmatpush1.bf16.msra.mxu0 0
      %1596 = vmatprep.subr.bf16.mxu0 0
      %1597 = vmatpush1.bf16.msra.mxu0 0
      %1598 = vmatprep.subr.bf16.mxu0 0
      %1599 = vmatpush1.bf16.msra.mxu0 0
      %1600 = vmatprep.mubr.bf16.mxu0 0
      %1601 = vmatmul.mubr.bf16.gmra.mrb[0].mxu0 %v1512
      %v1602 = vpop.f32.mrb[0].mxu0
      %v1603 = vadd.f32 0.0, %v1602
      %v1604 = vpop.f32.mrb[0].mxu0
      %v1605 = vpop.f32.mrb[0].mxu0
      %v1606 = vadd.f32 0.0, %v1605
      %v1607 = vpop.f32.mrb[0].mxu0
      %1608 = vmatprep.mubr.bf16.mxu0 0
      %1609 = vmatmul.mubr.bf16.gmra.mrb[0].mxu0 %v1515
      %v1610 = vpop.f32.mrb[0].mxu0
      %v1611 = vadd.f32 0.0, %v1610
      %v1612 = vpop.f32.mrb[0].mxu0
      %v1613 = vpop.f32.mrb[0].mxu0
      %v1614 = vadd.f32 0.0, %v1613
      %v1615 = vpop.f32.mrb[0].mxu0
      %1616 = vmatprep.mubr.bf16.mxu0 0
      %1617 = vmatmul.mubr.bf16.gmra.mrb[0].mxu0 %v1518
      %v1618 = vpop.f32.mrb[0].mxu0
      %v1619 = vadd.f32 0.0, %v1618
      %v1620 = vpop.f32.mrb[0].mxu0
      %v1621 = vpop.f32.mrb[0].mxu0
      %v1622 = vadd.f32 0.0, %v1621
      %v1623 = vpop.f32.mrb[0].mxu0
      %1624 = vmatprep.mubr.bf16.mxu0 0
      %1625 = vmatmul.mubr.bf16.gmra.mrb[0].mxu0 %v1521
      %v1626 = vpop.f32.mrb[0].mxu0
      %v1627 = vadd.f32 0.0, %v1626
      %v1628 = vpop.f32.mrb[0].mxu0
      %v1629 = vpop.f32.mrb[0].mxu0
      %v1630 = vadd.f32 0.0, %v1629
      %v1631 = vpop.f32.mrb[0].mxu0
      %1632 = vmatprep.mubr.bf16.mxu0 0
      %1633 = vmatmul.mubr.bf16.gmra.mrb[0].mxu0 %v1524
      %v1634 = vpop.f32.mrb[0].mxu0
      %v1635 = vadd.f32 0.0, %v1634
      %v1636 = vpop.f32.mrb[0].mxu0
      %v1637 = vpop.f32.mrb[0].mxu0
      %v1638 = vadd.f32 0.0, %v1637
      %v1639 = vpop.f32.mrb[0].mxu0
      %1640 = vmatprep.mubr.bf16.mxu0 0
      %1641 = vmatmul.mubr.bf16.gmra.mrb[0].mxu0 %v1527
      %v1642 = vpop.f32.mrb[0].mxu0
      %v1643 = vadd.f32 0.0, %v1642
      %v1644 = vpop.f32.mrb[0].mxu0
      %v1645 = vpop.f32.mrb[0].mxu0
      %v1646 = vadd.f32 0.0, %v1645
      %v1647 = vpop.f32.mrb[0].mxu0
      %1648 = vmatprep.mubr.bf16.mxu0 0
      %1649 = vmatmul.mubr.bf16.gmra.mrb[0].mxu0 %v1530
      %v1650 = vpop.f32.mrb[0].mxu0
      %v1651 = vadd.f32 0.0, %v1650
      %v1652 = vpop.f32.mrb[0].mxu0
      %v1653 = vpop.f32.mrb[0].mxu0
      %v1654 = vadd.f32 0.0, %v1653
      %v1655 = vpop.f32.mrb[0].mxu0
      %1656 = vmatprep.mubr.bf16.mxu0 0
      %1657 = vmatmul.mubr.bf16.gmra.mrb[0].mxu0 %v1533
      %v1658 = vpop.f32.mrb[0].mxu0
      %v1659 = vadd.f32 0.0, %v1658
      %v1660 = vpop.f32.mrb[0].mxu0
      %v1661 = vpop.f32.mrb[0].mxu0
      %v1662 = vadd.f32 0.0, %v1661
      %v1663 = vpop.f32.mrb[0].mxu0
      %1664 = vmatprep.mubr.bf16.mxu0 0
      %1665 = vmatmul.mubr.bf16.gmra.mrb[0].mxu0 %v1536
      %v1666 = vpop.f32.mrb[0].mxu0
      %v1667 = vadd.f32 0.0, %v1666
      %v1668 = vpop.f32.mrb[0].mxu0
      %v1669 = vpop.f32.mrb[0].mxu0
      %v1670 = vadd.f32 0.0, %v1669
      %v1671 = vpop.f32.mrb[0].mxu0
      %1672 = vmatprep.mubr.bf16.mxu0 0
      %1673 = vmatmul.mubr.bf16.gmra.mrb[0].mxu0 %v1539
      %v1674 = vpop.f32.mrb[0].mxu0
      %v1675 = vadd.f32 0.0, %v1674
      %v1676 = vpop.f32.mrb[0].mxu0
      %v1677 = vpop.f32.mrb[0].mxu0
      %v1678 = vadd.f32 0.0, %v1677
      %v1679 = vpop.f32.mrb[0].mxu0
      %1680 = vmatprep.mubr.bf16.mxu0 0
      %1681 = vmatmul.mubr.bf16.gmra.mrb[0].mxu0 %v1542
      %v1682 = vpop.f32.mrb[0].mxu0
      %v1683 = vadd.f32 0.0, %v1682
      %v1684 = vpop.f32.mrb[0].mxu0
      %v1685 = vpop.f32.mrb[0].mxu0
      %v1686 = vadd.f32 0.0, %v1685
      %v1687 = vpop.f32.mrb[0].mxu0
      %1688 = vmatprep.mubr.bf16.mxu0 0
      %1689 = vmatmul.mubr.bf16.gmra.mrb[0].mxu0 %v1545
      %v1690 = vpop.f32.mrb[0].mxu0
      %v1691 = vadd.f32 0.0, %v1690
      %v1692 = vpop.f32.mrb[0].mxu0
      %v1693 = vpop.f32.mrb[0].mxu0
      %v1694 = vadd.f32 0.0, %v1693
      %v1695 = vpop.f32.mrb[0].mxu0
      %1696 = vmatprep.mubr.bf16.mxu0 0
      %1697 = vmatmul.mubr.bf16.gmra.mrb[0].mxu0 %v1548
      %v1698 = vpop.f32.mrb[0].mxu0
      %v1699 = vadd.f32 0.0, %v1698
      %v1700 = vpop.f32.mrb[0].mxu0
      %v1701 = vpop.f32.mrb[0].mxu0
      %v1702 = vadd.f32 0.0, %v1701
      %v1703 = vpop.f32.mrb[0].mxu0
      %1704 = vmatprep.mubr.bf16.mxu0 0
      %1705 = vmatmul.mubr.bf16.gmra.mrb[0].mxu0 %v1551
      %v1706 = vpop.f32.mrb[0].mxu0
      %v1707 = vadd.f32 0.0, %v1706
      %v1708 = vpop.f32.mrb[0].mxu0
      %v1709 = vpop.f32.mrb[0].mxu0
      %v1710 = vadd.f32 0.0, %v1709
      %v1711 = vpop.f32.mrb[0].mxu0
      %1712 = vmatprep.mubr.bf16.mxu0 0
      %1713 = vmatmul.mubr.bf16.gmra.mrb[0].mxu0 %v1554
      %v1714 = vpop.f32.mrb[0].mxu0
      %v1715 = vadd.f32 0.0, %v1714
      %v1716 = vpop.f32.mrb[0].mxu0
      %v1717 = vpop.f32.mrb[0].mxu0
      %v1718 = vadd.f32 0.0, %v1717
      %v1719 = vpop.f32.mrb[0].mxu0
      %1720 = vmatprep.mubr.bf16.mxu0 0
      %1721 = vmatmul.mubr.bf16.gmra.mrb[0].mxu0 %v1557
      %v1722 = vpop.f32.mrb[0].mxu0
      %v1723 = vadd.f32 0.0, %v1722
      %v1724 = vpop.f32.mrb[0].mxu0
      %v1725 = vpop.f32.mrb[0].mxu0
      %v1726 = vadd.f32 0.0, %v1725
      %v1727 = vpop.f32.mrb[0].mxu0
      %1728 = vmatprep.mubr.bf16.mxu0 0
      %1729 = vmatmul.mubr.bf16.gmra.mrb[0].mxu0 %v1560
      %v1730 = vpop.f32.mrb[0].mxu0
      %v1731 = vadd.f32 0.0, %v1730
      %v1732 = vpop.f32.mrb[0].mxu0
      %v1733 = vpop.f32.mrb[0].mxu0
      %v1734 = vadd.f32 0.0, %v1733
      %v1735 = vpop.f32.mrb[0].mxu0
      %1736 = vmatprep.mubr.bf16.mxu0 0
      %1737 = vmatmul.mubr.bf16.gmra.mrb[0].mxu0 %v1563
      %v1738 = vpop.f32.mrb[0].mxu0
      %v1739 = vadd.f32 0.0, %v1738
      %v1740 = vpop.f32.mrb[0].mxu0
      %v1741 = vpop.f32.mrb[0].mxu0
      %v1742 = vadd.f32 0.0, %v1741
      %v1743 = vpop.f32.mrb[0].mxu0
      %1744 = vdwg.mxu0
      %v1745 = vld [vmem:[#allocation2] sm:$0xff]
      %v1746 = vld [vmem:[#allocation2 + $0x8] sm:$0xff]
      %v1747 = vld [vmem:[#allocation2 + $0x10] sm:$0xff]
      %v1748 = vld [vmem:[#allocation2 + $0x18] sm:$0xff]
      %v1749 = vld [vmem:[#allocation2 + $0x20] sm:$0xff]
      %v1750 = vld [vmem:[#allocation2 + $0x28] sm:$0xff]
      %v1751 = vld [vmem:[#allocation2 + $0x30] sm:$0xff]
      %v1752 = vld [vmem:[#allocation2 + $0x38] sm:$0xff]
      %v1753 = vld [vmem:[#allocation2 + $0x40] sm:$0xff]
      %v1754 = vld [vmem:[#allocation2 + $0x48] sm:$0xff]
      %v1755 = vld [vmem:[#allocation2 + $0x50] sm:$0xff]
      %v1756 = vld [vmem:[#allocation2 + $0x58] sm:$0xff]
      %v1757 = vld [vmem:[#allocation2 + $0x60] sm:$0xff]
      %v1758 = vld [vmem:[#allocation2 + $0x68] sm:$0xff]
      %v1759 = vld [vmem:[#allocation2 + $0x70] sm:$0xff]
      %v1760 = vld [vmem:[#allocation2 + $0x78] sm:$0xff]
      %v1761 = vld [vmem:[#allocation2 + $0x80] sm:$0xff]
      %v1762 = vld [vmem:[#allocation2 + $0x88] sm:$0xff]
      %v1763 = vld [vmem:[#allocation2 + $0x90] sm:$0xff]
      %v1764 = vld [vmem:[#allocation2 + $0x98] sm:$0xff]
      %v1765 = vld [vmem:[#allocation2 + $0xa0] sm:$0xff]
      %v1766 = vld [vmem:[#allocation2 + $0xa8] sm:$0xff]
      %v1767 = vld [vmem:[#allocation2 + $0xb0] sm:$0xff]
      %v1768 = vld [vmem:[#allocation2 + $0xb8] sm:$0xff]
      %v1769 = vld [vmem:[#allocation2 + $0xc0] sm:$0xff]
      %v1770 = vld [vmem:[#allocation2 + $0xc8] sm:$0xff]
      %v1771 = vld [vmem:[#allocation2 + $0xd0] sm:$0xff]
      %v1772 = vld [vmem:[#allocation2 + $0xd8] sm:$0xff]
      %v1773 = vld [vmem:[#allocation2 + $0xe0] sm:$0xff]
      %v1774 = vld [vmem:[#allocation2 + $0xe8] sm:$0xff]
      %v1775 = vld [vmem:[#allocation2 + $0xf0] sm:$0xff]
      %v1776 = vld [vmem:[#allocation2 + $0xf8] sm:$0xff]
      %v1777 = vld [vmem:[#allocation2 + $0x100] sm:$0xff]
      %v1778 = vld [vmem:[#allocation2 + $0x108] sm:$0xff]
      %v1779 = vld [vmem:[#allocation2 + $0x110] sm:$0xff]
      %v1780 = vld [vmem:[#allocation2 + $0x118] sm:$0xff]
      %v1781 = vadd.f32 %v1745, %v1603
      %v1782 = vadd.f32 %v1746, %v1606
      %v1783 = vadd.f32 %v1747, %v1611
      %v1784 = vadd.f32 %v1748, %v1614
      %v1785 = vadd.f32 %v1749, %v1619
      %v1786 = vadd.f32 %v1750, %v1622
      %v1787 = vadd.f32 %v1751, %v1627
      %v1788 = vadd.f32 %v1752, %v1630
      %v1789 = vadd.f32 %v1753, %v1635
      %v1790 = vadd.f32 %v1754, %v1638
      %v1791 = vadd.f32 %v1755, %v1643
      %v1792 = vadd.f32 %v1756, %v1646
      %v1793 = vadd.f32 %v1757, %v1651
      %v1794 = vadd.f32 %v1758, %v1654
      %v1795 = vadd.f32 %v1759, %v1659
      %v1796 = vadd.f32 %v1760, %v1662
      %v1797 = vadd.f32 %v1761, %v1667
      %v1798 = vadd.f32 %v1762, %v1670
      %v1799 = vadd.f32 %v1763, %v1675
      %v1800 = vadd.f32 %v1764, %v1678
      %v1801 = vadd.f32 %v1765, %v1683
      %v1802 = vadd.f32 %v1766, %v1686
      %v1803 = vadd.f32 %v1767, %v1691
      %v1804 = vadd.f32 %v1768, %v1694
      %v1805 = vadd.f32 %v1769, %v1699
      %v1806 = vadd.f32 %v1770, %v1702
      %v1807 = vadd.f32 %v1771, %v1707
      %v1808 = vadd.f32 %v1772, %v1710
      %v1809 = vadd.f32 %v1773, %v1715
      %v1810 = vadd.f32 %v1774, %v1718
      %v1811 = vadd.f32 %v1775, %v1723
      %v1812 = vadd.f32 %v1776, %v1726
      %v1813 = vadd.f32 %v1777, %v1731
      %v1814 = vadd.f32 %v1778, %v1734
      %v1815 = vadd.f32 %v1779, %v1739
      %v1816 = vadd.f32 %v1780, %v1742
      %1817 = vst [vmem:[#allocation2] sm:$0xff] %v1781
      %1818 = vst [vmem:[#allocation2 + $0x8] sm:$0xff] %v1782
      %1819 = vst [vmem:[#allocation2 + $0x10] sm:$0xff] %v1783
      %1820 = vst [vmem:[#allocation2 + $0x18] sm:$0xff] %v1784
      %1821 = vst [vmem:[#allocation2 + $0x20] sm:$0xff] %v1785
      %1822 = vst [vmem:[#allocation2 + $0x28] sm:$0xff] %v1786
      %1823 = vst [vmem:[#allocation2 + $0x30] sm:$0xff] %v1787
      %1824 = vst [vmem:[#allocation2 + $0x38] sm:$0xff] %v1788
      %1825 = vst [vmem:[#allocation2 + $0x40] sm:$0xff] %v1789
      %1826 = vst [vmem:[#allocation2 + $0x48] sm:$0xff] %v1790
      %1827 = vst [vmem:[#allocation2 + $0x50] sm:$0xff] %v1791
      %1828 = vst [vmem:[#allocation2 + $0x58] sm:$0xff] %v1792
      %1829 = vst [vmem:[#allocation2 + $0x60] sm:$0xff] %v1793
      %1830 = vst [vmem:[#allocation2 + $0x68] sm:$0xff] %v1794
      %1831 = vst [vmem:[#allocation2 + $0x70] sm:$0xff] %v1795
      %1832 = vst [vmem:[#allocation2 + $0x78] sm:$0xff] %v1796
      %1833 = vst [vmem:[#allocation2 + $0x80] sm:$0xff] %v1797
      %1834 = vst [vmem:[#allocation2 + $0x88] sm:$0xff] %v1798
      %1835 = vst [vmem:[#allocation2 + $0x90] sm:$0xff] %v1799
      %1836 = vst [vmem:[#allocation2 + $0x98] sm:$0xff] %v1800
      %1837 = vst [vmem:[#allocation2 + $0xa0] sm:$0xff] %v1801
      %1838 = vst [vmem:[#allocation2 + $0xa8] sm:$0xff] %v1802
      %1839 = vst [vmem:[#allocation2 + $0xb0] sm:$0xff] %v1803
      %1840 = vst [vmem:[#allocation2 + $0xb8] sm:$0xff] %v1804
      %1841 = vst [vmem:[#allocation2 + $0xc0] sm:$0xff] %v1805
      %1842 = vst [vmem:[#allocation2 + $0xc8] sm:$0xff] %v1806
      %1843 = vst [vmem:[#allocation2 + $0xd0] sm:$0xff] %v1807
      %1844 = vst [vmem:[#allocation2 + $0xd8] sm:$0xff] %v1808
      %1845 = vst [vmem:[#allocation2 + $0xe0] sm:$0xff] %v1809
      %1846 = vst [vmem:[#allocation2 + $0xe8] sm:$0xff] %v1810
      %1847 = vst [vmem:[#allocation2 + $0xf0] sm:$0xff] %v1811
      %1848 = vst [vmem:[#allocation2 + $0xf8] sm:$0xff] %v1812
      %1849 = vst [vmem:[#allocation2 + $0x100] sm:$0xff] %v1813
      %1850 = vst [vmem:[#allocation2 + $0x108] sm:$0xff] %v1814
      %1851 = vst [vmem:[#allocation2 + $0x110] sm:$0xff] %v1815
      %1852 = vst [vmem:[#allocation2 + $0x118] sm:$0xff] %v1816
      %v1853 = vld [vmem:[%s289 + $0x8] sm:$0xe]
      %v1854 = vld [vmem:[%s289 + $0xc] sm:$0xf]
      %v1855 = vld [vmem:[%s289 + $0x10] sm:$0xf]
      %v1856 = vld [vmem:[%s289 + $0x14] sm:$0xf]
      %v1857 = vld [vmem:[%s289 + $0x18] sm:$0xf]
      %v1858 = vld [vmem:[%s289 + $0x1c] sm:$0xf]
      %v1859 = vld [vmem:[%s289 + $0x20] sm:$0xf]
      %v1860 = vld [vmem:[%s289 + $0x24] sm:$0xf]
      %v1861 = vld [vmem:[%s289 + $0x28] sm:$0xf]
      %v1862 = vld [vmem:[%s289 + $0x2c] sm:$0xf]
      %v1863 = vld [vmem:[%s289 + $0x30] sm:$0xf]
      %v1864 = vld [vmem:[%s289 + $0x34] sm:$0xf]
      %v1865 = vld [vmem:[%s289 + $0x38] sm:$0xf]
      %v1866 = vld [vmem:[%s289 + $0x3c] sm:$0xf]
      %v1867 = vld [vmem:[%s289 + $0x40] sm:$0xf]
      %v1868 = vld [vmem:[%s289 + $0x44] sm:$0xf]
      %v1869 = vld [vmem:[%s289 + $0x48] sm:$0xf]
      %v1870 = vld [vmem:[%s289 + $0x4c] sm:$0xf]
      %v1871 = vld [vmem:[%s289 + $0x50] sm:$0xf]
      %v1872 = vld [vmem:[%s289 + $0x54] sm:$0xf]
      %v1873 = vld [vmem:[%s289 + $0x58] sm:$0xf]
      %v1874 = vld [vmem:[%s289 + $0x5c] sm:$0xf]
      %v1875 = vld [vmem:[%s289 + $0x60] sm:$0xf]
      %v1876 = vld [vmem:[%s289 + $0x64] sm:$0xf]
      %v1877 = vld [vmem:[%s289 + $0x68] sm:$0xf]
      %v1878 = vld [vmem:[%s289 + $0x6c] sm:$0xf]
      %v1879 = vld [vmem:[%s289 + $0x70] sm:$0xf]
      %v1880 = vld [vmem:[%s289 + $0x74] sm:$0xf]
      %v1881 = vld [vmem:[%s289 + $0x78] sm:$0xf]
      %v1882 = vld [vmem:[%s289 + $0x7c] sm:$0xf]
      %v1883 = vld [vmem:[%s289 + $0x80] sm:$0xf]
      %v1884 = vld [vmem:[%s289 + $0x84] sm:$0xf]
      %v1885 = vld [vmem:[%s289 + $0x88] sm:$0xf]
      %v1886 = vld [vmem:[%s289 + $0x8c] sm:$0xf]
      %v1887 = vld [vmem:[%s289 + $0x90] sm:$0xf]
      %v1888 = vld [vmem:[%s289 + $0x94] sm:$0xf]
      %v1889 = vld [vmem:[%s289 + $0x98] sm:$0x1]
      %s1890 = scalar_lea.vmem %s294, 12
      %v1891 = vld [vmem:[%s1890] sm:$0xf]
      %v1929 = vunpack.c.l.b16 %v1853
      %v1930 = vunpack.c.l.b16 %v1854
      %v1931 = vunpack.c.l.b16 %v1855
      %v1932 = vunpack.c.l.b16 %v1856
      %v1933 = vunpack.c.l.b16 %v1857
      %v1934 = vunpack.c.l.b16 %v1858
      %v1935 = vunpack.c.l.b16 %v1859
      %v1936 = vunpack.c.l.b16 %v1860
      %v1937 = vunpack.c.l.b16 %v1861
      %v1938 = vunpack.c.l.b16 %v1862
      %v1939 = vunpack.c.l.b16 %v1863
      %v1940 = vunpack.c.l.b16 %v1864
      %v1941 = vunpack.c.l.b16 %v1865
      %v1942 = vunpack.c.l.b16 %v1866
      %v1943 = vunpack.c.l.b16 %v1867
      %v1944 = vunpack.c.l.b16 %v1868
      %v1945 = vunpack.c.l.b16 %v1869
      %v1946 = vunpack.c.l.b16 %v1870
      %v1947 = vunpack.c.l.b16 %v1871
      %v1948 = vunpack.c.l.b16 %v1872
      %v1949 = vunpack.c.l.b16 %v1873
      %v1950 = vunpack.c.l.b16 %v1874
      %v1951 = vunpack.c.l.b16 %v1875
      %v1952 = vunpack.c.l.b16 %v1876
      %v1953 = vunpack.c.l.b16 %v1877
      %v1954 = vunpack.c.l.b16 %v1878
      %v1955 = vunpack.c.l.b16 %v1879
      %v1956 = vunpack.c.l.b16 %v1880
      %v1957 = vunpack.c.l.b16 %v1881
      %v1958 = vunpack.c.l.b16 %v1882
      %v1959 = vunpack.c.l.b16 %v1883
      %v1960 = vunpack.c.l.b16 %v1884
      %v1961 = vunpack.c.l.b16 %v1885
      %v1962 = vunpack.c.l.b16 %v1886
      %v1963 = vunpack.c.l.b16 %v1887
      %v1964 = vunpack.c.l.b16 %v1888
      %v1965 = vunpack.c.l.b16 %v1889
      %v1966 = vpack.c.b16 %v1930, %v1929
      %v1967 = vpack.c.b16 %v1932, %v1931
      %v1968 = vpack.c.b16 %v1934, %v1933
      %v1969 = vpack.c.b16 %v1936, %v1935
      %v1970 = vpack.c.b16 %v1938, %v1937
      %v1971 = vpack.c.b16 %v1940, %v1939
      %v1972 = vpack.c.b16 %v1942, %v1941
      %v1973 = vpack.c.b16 %v1944, %v1943
      %v1974 = vpack.c.b16 %v1946, %v1945
      %v1975 = vpack.c.b16 %v1948, %v1947
      %v1976 = vpack.c.b16 %v1950, %v1949
      %v1977 = vpack.c.b16 %v1952, %v1951
      %v1978 = vpack.c.b16 %v1954, %v1953
      %v1979 = vpack.c.b16 %v1956, %v1955
      %v1980 = vpack.c.b16 %v1958, %v1957
      %v1981 = vpack.c.b16 %v1960, %v1959
      %v1982 = vpack.c.b16 %v1962, %v1961
      %v1983 = vpack.c.b16 %v1964, %v1963
      %v1984 = vpack.c.b16 %v1965, %v1965
      %v1985 = vrot.slane %v1966, 1
      %v1986 = vrot.slane %v1967, 1
      %v1987 = vsel %vm1473, %v1985, %v1986
      %v1988 = vrot.slane %v1968, 1
      %v1989 = vsel %vm1473, %v1986, %v1988
      %v1990 = vrot.slane %v1969, 1
      %v1991 = vsel %vm1473, %v1988, %v1990
      %v1992 = vrot.slane %v1970, 1
      %v1993 = vsel %vm1473, %v1990, %v1992
      %v1994 = vrot.slane %v1971, 1
      %v1995 = vsel %vm1473, %v1992, %v1994
      %v1996 = vrot.slane %v1972, 1
      %v1997 = vsel %vm1473, %v1994, %v1996
      %v1998 = vrot.slane %v1973, 1
      %v1999 = vsel %vm1473, %v1996, %v1998
      %v2000 = vrot.slane %v1974, 1
      %v2001 = vsel %vm1473, %v1998, %v2000
      %v2002 = vrot.slane %v1975, 1
      %v2003 = vsel %vm1473, %v2000, %v2002
      %v2004 = vrot.slane %v1976, 1
      %v2005 = vsel %vm1473, %v2002, %v2004
      %v2006 = vrot.slane %v1977, 1
      %v2007 = vsel %vm1473, %v2004, %v2006
      %v2008 = vrot.slane %v1978, 1
      %v2009 = vsel %vm1473, %v2006, %v2008
      %v2010 = vrot.slane %v1979, 1
      %v2011 = vsel %vm1473, %v2008, %v2010
      %v2012 = vrot.slane %v1980, 1
      %v2013 = vsel %vm1473, %v2010, %v2012
      %v2014 = vrot.slane %v1981, 1
      %v2015 = vsel %vm1473, %v2012, %v2014
      %v2016 = vrot.slane %v1982, 1
      %v2017 = vsel %vm1473, %v2014, %v2016
      %v2018 = vrot.slane %v1983, 1
      %v2019 = vsel %vm1473, %v2016, %v2018
      %v2020 = vrot.slane %v1984, 1
      %v2021 = vsel %vm1473, %v2018, %v2020
      %v2023 = vsel %vm446, %v1987, 0
      %v2026 = vsel %vm446, %v1989, 0
      %v2029 = vsel %vm446, %v1991, 0
      %v2032 = vsel %vm446, %v1993, 0
      %v2035 = vsel %vm446, %v1995, 0
      %v2038 = vsel %vm446, %v1997, 0
      %v2041 = vsel %vm446, %v1999, 0
      %v2044 = vsel %vm446, %v2001, 0
      %v2047 = vsel %vm446, %v2003, 0
      %v2050 = vsel %vm446, %v2005, 0
      %v2053 = vsel %vm446, %v2007, 0
      %v2056 = vsel %vm446, %v2009, 0
      %v2059 = vsel %vm446, %v2011, 0
      %v2062 = vsel %vm446, %v2013, 0
      %v2065 = vsel %vm446, %v2015, 0
      %v2068 = vsel %vm446, %v2017, 0
      %v2071 = vsel %vm446, %v2019, 0
      %v2074 = vsel %vm446, %v2021, 0
      %v2077 = vsel %vm501, %v1891, 0
      %2079 = vmatprep.subr.bf16.mxu0 0
      %2080 = vmatpush1.bf16.msra.mxu0 %v2077
      %2081 = vmatprep.subr.bf16.mxu0 0
      %2082 = vmatpush1.bf16.msra.mxu0 0
      %2083 = vmatprep.subr.bf16.mxu0 0
      %2084 = vmatpush1.bf16.msra.mxu0 0
      %2085 = vmatprep.subr.bf16.mxu0 0
      %2086 = vmatpush1.bf16.msra.mxu0 0
      %2087 = vmatprep.subr.bf16.mxu0 0
      %2088 = vmatpush1.bf16.msra.mxu0 0
      %2089 = vmatprep.subr.bf16.mxu0 0
      %2090 = vmatpush1.bf16.msra.mxu0 0
      %2091 = vmatprep.subr.bf16.mxu0 0
      %2092 = vmatpush1.bf16.msra.mxu0 0
      %2093 = vmatprep.subr.bf16.mxu0 0
      %2094 = vmatpush1.bf16.msra.mxu0 0
      %2095 = vmatprep.subr.bf16.mxu0 0
      %2096 = vmatpush1.bf16.msra.mxu0 0
      %2097 = vmatprep.subr.bf16.mxu0 0
      %2098 = vmatpush1.bf16.msra.mxu0 0
      %2099 = vmatprep.subr.bf16.mxu0 0
      %2100 = vmatpush1.bf16.msra.mxu0 0
      %2101 = vmatprep.subr.bf16.mxu0 0
      %2102 = vmatpush1.bf16.msra.mxu0 0
      %2103 = vmatprep.subr.bf16.mxu0 0
      %2104 = vmatpush1.bf16.msra.mxu0 0
      %2105 = vmatprep.subr.bf16.mxu0 0
      %2106 = vmatpush1.bf16.msra.mxu0 0
      %2107 = vmatprep.subr.bf16.mxu0 0
      %2108 = vmatpush1.bf16.msra.mxu0 0
      %2109 = vmatprep.subr.bf16.mxu0 0
      %2110 = vmatpush1.bf16.msra.mxu0 0
      %2111 = vmatprep.mubr.bf16.mxu0 0
      %2112 = vmatmul.mubr.bf16.gmra.mrb[0].mxu0 %v2023
      %v2113 = vpop.f32.mrb[0].mxu0
      %v2114 = vadd.f32 0.0, %v2113
      %v2115 = vpop.f32.mrb[0].mxu0
      %v2116 = vpop.f32.mrb[0].mxu0
      %v2117 = vadd.f32 0.0, %v2116
      %v2118 = vpop.f32.mrb[0].mxu0
      %2119 = vmatprep.mubr.bf16.mxu0 0
      %2120 = vmatmul.mubr.bf16.gmra.mrb[0].mxu0 %v2026
      %v2121 = vpop.f32.mrb[0].mxu0
      %v2122 = vadd.f32 0.0, %v2121
      %v2123 = vpop.f32.mrb[0].mxu0
      %v2124 = vpop.f32.mrb[0].mxu0
      %v2125 = vadd.f32 0.0, %v2124
      %v2126 = vpop.f32.mrb[0].mxu0
      %2127 = vmatprep.mubr.bf16.mxu0 0
      %2128 = vmatmul.mubr.bf16.gmra.mrb[0].mxu0 %v2029
      %v2129 = vpop.f32.mrb[0].mxu0
      %v2130 = vadd.f32 0.0, %v2129
      %v2131 = vpop.f32.mrb[0].mxu0
      %v2132 = vpop.f32.mrb[0].mxu0
      %v2133 = vadd.f32 0.0, %v2132
      %v2134 = vpop.f32.mrb[0].mxu0
      %2135 = vmatprep.mubr.bf16.mxu0 0
      %2136 = vmatmul.mubr.bf16.gmra.mrb[0].mxu0 %v2032
      %v2137 = vpop.f32.mrb[0].mxu0
      %v2138 = vadd.f32 0.0, %v2137
      %v2139 = vpop.f32.mrb[0].mxu0
      %v2140 = vpop.f32.mrb[0].mxu0
      %v2141 = vadd.f32 0.0, %v2140
      %v2142 = vpop.f32.mrb[0].mxu0
      %2143 = vmatprep.mubr.bf16.mxu0 0
      %2144 = vmatmul.mubr.bf16.gmra.mrb[0].mxu0 %v2035
      %v2145 = vpop.f32.mrb[0].mxu0
      %v2146 = vadd.f32 0.0, %v2145
      %v2147 = vpop.f32.mrb[0].mxu0
      %v2148 = vpop.f32.mrb[0].mxu0
      %v2149 = vadd.f32 0.0, %v2148
      %v2150 = vpop.f32.mrb[0].mxu0
      %2151 = vmatprep.mubr.bf16.mxu0 0
      %2152 = vmatmul.mubr.bf16.gmra.mrb[0].mxu0 %v2038
      %v2153 = vpop.f32.mrb[0].mxu0
      %v2154 = vadd.f32 0.0, %v2153
      %v2155 = vpop.f32.mrb[0].mxu0
      %v2156 = vpop.f32.mrb[0].mxu0
      %v2157 = vadd.f32 0.0, %v2156
      %v2158 = vpop.f32.mrb[0].mxu0
      %2159 = vmatprep.mubr.bf16.mxu0 0
      %2160 = vmatmul.mubr.bf16.gmra.mrb[0].mxu0 %v2041
      %v2161 = vpop.f32.mrb[0].mxu0
      %v2162 = vadd.f32 0.0, %v2161
      %v2163 = vpop.f32.mrb[0].mxu0
      %v2164 = vpop.f32.mrb[0].mxu0
      %v2165 = vadd.f32 0.0, %v2164
      %v2166 = vpop.f32.mrb[0].mxu0
      %2167 = vmatprep.mubr.bf16.mxu0 0
      %2168 = vmatmul.mubr.bf16.gmra.mrb[0].mxu0 %v2044
      %v2169 = vpop.f32.mrb[0].mxu0
      %v2170 = vadd.f32 0.0, %v2169
      %v2171 = vpop.f32.mrb[0].mxu0
      %v2172 = vpop.f32.mrb[0].mxu0
      %v2173 = vadd.f32 0.0, %v2172
      %v2174 = vpop.f32.mrb[0].mxu0
      %2175 = vmatprep.mubr.bf16.mxu0 0
      %2176 = vmatmul.mubr.bf16.gmra.mrb[0].mxu0 %v2047
      %v2177 = vpop.f32.mrb[0].mxu0
      %v2178 = vadd.f32 0.0, %v2177
      %v2179 = vpop.f32.mrb[0].mxu0
      %v2180 = vpop.f32.mrb[0].mxu0
      %v2181 = vadd.f32 0.0, %v2180
      %v2182 = vpop.f32.mrb[0].mxu0
      %2183 = vmatprep.mubr.bf16.mxu0 0
      %2184 = vmatmul.mubr.bf16.gmra.mrb[0].mxu0 %v2050
      %v2185 = vpop.f32.mrb[0].mxu0
      %v2186 = vadd.f32 0.0, %v2185
      %v2187 = vpop.f32.mrb[0].mxu0
      %v2188 = vpop.f32.mrb[0].mxu0
      %v2189 = vadd.f32 0.0, %v2188
      %v2190 = vpop.f32.mrb[0].mxu0
      %2191 = vmatprep.mubr.bf16.mxu0 0
      %2192 = vmatmul.mubr.bf16.gmra.mrb[0].mxu0 %v2053
      %v2193 = vpop.f32.mrb[0].mxu0
      %v2194 = vadd.f32 0.0, %v2193
      %v2195 = vpop.f32.mrb[0].mxu0
      %v2196 = vpop.f32.mrb[0].mxu0
      %v2197 = vadd.f32 0.0, %v2196
      %v2198 = vpop.f32.mrb[0].mxu0
      %2199 = vmatprep.mubr.bf16.mxu0 0
      %2200 = vmatmul.mubr.bf16.gmra.mrb[0].mxu0 %v2056
      %v2201 = vpop.f32.mrb[0].mxu0
      %v2202 = vadd.f32 0.0, %v2201
      %v2203 = vpop.f32.mrb[0].mxu0
      %v2204 = vpop.f32.mrb[0].mxu0
      %v2205 = vadd.f32 0.0, %v2204
      %v2206 = vpop.f32.mrb[0].mxu0
      %2207 = vmatprep.mubr.bf16.mxu0 0
      %2208 = vmatmul.mubr.bf16.gmra.mrb[0].mxu0 %v2059
      %v2209 = vpop.f32.mrb[0].mxu0
      %v2210 = vadd.f32 0.0, %v2209
      %v2211 = vpop.f32.mrb[0].mxu0
      %v2212 = vpop.f32.mrb[0].mxu0
      %v2213 = vadd.f32 0.0, %v2212
      %v2214 = vpop.f32.mrb[0].mxu0
      %2215 = vmatprep.mubr.bf16.mxu0 0
      %2216 = vmatmul.mubr.bf16.gmra.mrb[0].mxu0 %v2062
      %v2217 = vpop.f32.mrb[0].mxu0
      %v2218 = vadd.f32 0.0, %v2217
      %v2219 = vpop.f32.mrb[0].mxu0
      %v2220 = vpop.f32.mrb[0].mxu0
      %v2221 = vadd.f32 0.0, %v2220
      %v2222 = vpop.f32.mrb[0].mxu0
      %2223 = vmatprep.mubr.bf16.mxu0 0
      %2224 = vmatmul.mubr.bf16.gmra.mrb[0].mxu0 %v2065
      %v2225 = vpop.f32.mrb[0].mxu0
      %v2226 = vadd.f32 0.0, %v2225
      %v2227 = vpop.f32.mrb[0].mxu0
      %v2228 = vpop.f32.mrb[0].mxu0
      %v2229 = vadd.f32 0.0, %v2228
      %v2230 = vpop.f32.mrb[0].mxu0
      %2231 = vmatprep.mubr.bf16.mxu0 0
      %2232 = vmatmul.mubr.bf16.gmra.mrb[0].mxu0 %v2068
      %v2233 = vpop.f32.mrb[0].mxu0
      %v2234 = vadd.f32 0.0, %v2233
      %v2235 = vpop.f32.mrb[0].mxu0
      %v2236 = vpop.f32.mrb[0].mxu0
      %v2237 = vadd.f32 0.0, %v2236
      %v2238 = vpop.f32.mrb[0].mxu0
      %2239 = vmatprep.mubr.bf16.mxu0 0
      %2240 = vmatmul.mubr.bf16.gmra.mrb[0].mxu0 %v2071
      %v2241 = vpop.f32.mrb[0].mxu0
      %v2242 = vadd.f32 0.0, %v2241
      %v2243 = vpop.f32.mrb[0].mxu0
      %v2244 = vpop.f32.mrb[0].mxu0
      %v2245 = vadd.f32 0.0, %v2244
      %v2246 = vpop.f32.mrb[0].mxu0
      %2247 = vmatprep.mubr.bf16.mxu0 0
      %2248 = vmatmul.mubr.bf16.gmra.mrb[0].mxu0 %v2074
      %v2249 = vpop.f32.mrb[0].mxu0
      %v2250 = vadd.f32 0.0, %v2249
      %v2251 = vpop.f32.mrb[0].mxu0
      %v2252 = vpop.f32.mrb[0].mxu0
      %v2253 = vadd.f32 0.0, %v2252
      %v2254 = vpop.f32.mrb[0].mxu0
      %2255 = vdwg.mxu0
      %v2256 = vld [vmem:[#allocation2] sm:$0xff]
      %v2257 = vld [vmem:[#allocation2 + $0x8] sm:$0xff]
      %v2258 = vld [vmem:[#allocation2 + $0x10] sm:$0xff]
      %v2259 = vld [vmem:[#allocation2 + $0x18] sm:$0xff]
      %v2260 = vld [vmem:[#allocation2 + $0x20] sm:$0xff]
      %v2261 = vld [vmem:[#allocation2 + $0x28] sm:$0xff]
      %v2262 = vld [vmem:[#allocation2 + $0x30] sm:$0xff]
      %v2263 = vld [vmem:[#allocation2 + $0x38] sm:$0xff]
      %v2264 = vld [vmem:[#allocation2 + $0x40] sm:$0xff]
      %v2265 = vld [vmem:[#allocation2 + $0x48] sm:$0xff]
      %v2266 = vld [vmem:[#allocation2 + $0x50] sm:$0xff]
      %v2267 = vld [vmem:[#allocation2 + $0x58] sm:$0xff]
      %v2268 = vld [vmem:[#allocation2 + $0x60] sm:$0xff]
      %v2269 = vld [vmem:[#allocation2 + $0x68] sm:$0xff]
      %v2270 = vld [vmem:[#allocation2 + $0x70] sm:$0xff]
      %v2271 = vld [vmem:[#allocation2 + $0x78] sm:$0xff]
      %v2272 = vld [vmem:[#allocation2 + $0x80] sm:$0xff]
      %v2273 = vld [vmem:[#allocation2 + $0x88] sm:$0xff]
      %v2274 = vld [vmem:[#allocation2 + $0x90] sm:$0xff]
      %v2275 = vld [vmem:[#allocation2 + $0x98] sm:$0xff]
      %v2276 = vld [vmem:[#allocation2 + $0xa0] sm:$0xff]
      %v2277 = vld [vmem:[#allocation2 + $0xa8] sm:$0xff]
      %v2278 = vld [vmem:[#allocation2 + $0xb0] sm:$0xff]
      %v2279 = vld [vmem:[#allocation2 + $0xb8] sm:$0xff]
      %v2280 = vld [vmem:[#allocation2 + $0xc0] sm:$0xff]
      %v2281 = vld [vmem:[#allocation2 + $0xc8] sm:$0xff]
      %v2282 = vld [vmem:[#allocation2 + $0xd0] sm:$0xff]
      %v2283 = vld [vmem:[#allocation2 + $0xd8] sm:$0xff]
      %v2284 = vld [vmem:[#allocation2 + $0xe0] sm:$0xff]
      %v2285 = vld [vmem:[#allocation2 + $0xe8] sm:$0xff]
      %v2286 = vld [vmem:[#allocation2 + $0xf0] sm:$0xff]
      %v2287 = vld [vmem:[#allocation2 + $0xf8] sm:$0xff]
      %v2288 = vld [vmem:[#allocation2 + $0x100] sm:$0xff]
      %v2289 = vld [vmem:[#allocation2 + $0x108] sm:$0xff]
      %v2290 = vld [vmem:[#allocation2 + $0x110] sm:$0xff]
      %v2291 = vld [vmem:[#allocation2 + $0x118] sm:$0xff]
      %v2292 = vadd.f32 %v2256, %v2114
      %v2293 = vadd.f32 %v2257, %v2117
      %v2294 = vadd.f32 %v2258, %v2122
      %v2295 = vadd.f32 %v2259, %v2125
      %v2296 = vadd.f32 %v2260, %v2130
      %v2297 = vadd.f32 %v2261, %v2133
      %v2298 = vadd.f32 %v2262, %v2138
      %v2299 = vadd.f32 %v2263, %v2141
      %v2300 = vadd.f32 %v2264, %v2146
      %v2301 = vadd.f32 %v2265, %v2149
      %v2302 = vadd.f32 %v2266, %v2154
      %v2303 = vadd.f32 %v2267, %v2157
      %v2304 = vadd.f32 %v2268, %v2162
      %v2305 = vadd.f32 %v2269, %v2165
      %v2306 = vadd.f32 %v2270, %v2170
      %v2307 = vadd.f32 %v2271, %v2173
      %v2308 = vadd.f32 %v2272, %v2178
      %v2309 = vadd.f32 %v2273, %v2181
      %v2310 = vadd.f32 %v2274, %v2186
      %v2311 = vadd.f32 %v2275, %v2189
      %v2312 = vadd.f32 %v2276, %v2194
      %v2313 = vadd.f32 %v2277, %v2197
      %v2314 = vadd.f32 %v2278, %v2202
      %v2315 = vadd.f32 %v2279, %v2205
      %v2316 = vadd.f32 %v2280, %v2210
      %v2317 = vadd.f32 %v2281, %v2213
      %v2318 = vadd.f32 %v2282, %v2218
      %v2319 = vadd.f32 %v2283, %v2221
      %v2320 = vadd.f32 %v2284, %v2226
      %v2321 = vadd.f32 %v2285, %v2229
      %v2322 = vadd.f32 %v2286, %v2234
      %v2323 = vadd.f32 %v2287, %v2237
      %v2324 = vadd.f32 %v2288, %v2242
      %v2325 = vadd.f32 %v2289, %v2245
      %v2326 = vadd.f32 %v2290, %v2250
      %v2327 = vadd.f32 %v2291, %v2253
      %2328 = vst [vmem:[#allocation2] sm:$0xff] %v2292
      %2329 = vst [vmem:[#allocation2 + $0x8] sm:$0xff] %v2293
      %2330 = vst [vmem:[#allocation2 + $0x10] sm:$0xff] %v2294
      %2331 = vst [vmem:[#allocation2 + $0x18] sm:$0xff] %v2295
      %2332 = vst [vmem:[#allocation2 + $0x20] sm:$0xff] %v2296
      %2333 = vst [vmem:[#allocation2 + $0x28] sm:$0xff] %v2297
      %2334 = vst [vmem:[#allocation2 + $0x30] sm:$0xff] %v2298
      %2335 = vst [vmem:[#allocation2 + $0x38] sm:$0xff] %v2299
      %2336 = vst [vmem:[#allocation2 + $0x40] sm:$0xff] %v2300
      %2337 = vst [vmem:[#allocation2 + $0x48] sm:$0xff] %v2301
      %2338 = vst [vmem:[#allocation2 + $0x50] sm:$0xff] %v2302
      %2339 = vst [vmem:[#allocation2 + $0x58] sm:$0xff] %v2303
      %2340 = vst [vmem:[#allocation2 + $0x60] sm:$0xff] %v2304
      %2341 = vst [vmem:[#allocation2 + $0x68] sm:$0xff] %v2305
      %2342 = vst [vmem:[#allocation2 + $0x70] sm:$0xff] %v2306
      %2343 = vst [vmem:[#allocation2 + $0x78] sm:$0xff] %v2307
      %2344 = vst [vmem:[#allocation2 + $0x80] sm:$0xff] %v2308
      %2345 = vst [vmem:[#allocation2 + $0x88] sm:$0xff] %v2309
      %2346 = vst [vmem:[#allocation2 + $0x90] sm:$0xff] %v2310
      %2347 = vst [vmem:[#allocation2 + $0x98] sm:$0xff] %v2311
      %2348 = vst [vmem:[#allocation2 + $0xa0] sm:$0xff] %v2312
      %2349 = vst [vmem:[#allocation2 + $0xa8] sm:$0xff] %v2313
      %2350 = vst [vmem:[#allocation2 + $0xb0] sm:$0xff] %v2314
      %2351 = vst [vmem:[#allocation2 + $0xb8] sm:$0xff] %v2315
      %2352 = vst [vmem:[#allocation2 + $0xc0] sm:$0xff] %v2316
      %2353 = vst [vmem:[#allocation2 + $0xc8] sm:$0xff] %v2317
      %2354 = vst [vmem:[#allocation2 + $0xd0] sm:$0xff] %v2318
      %2355 = vst [vmem:[#allocation2 + $0xd8] sm:$0xff] %v2319
      %2356 = vst [vmem:[#allocation2 + $0xe0] sm:$0xff] %v2320
      %2357 = vst [vmem:[#allocation2 + $0xe8] sm:$0xff] %v2321
      %2358 = vst [vmem:[#allocation2 + $0xf0] sm:$0xff] %v2322
      %2359 = vst [vmem:[#allocation2 + $0xf8] sm:$0xff] %v2323
      %2360 = vst [vmem:[#allocation2 + $0x100] sm:$0xff] %v2324
      %2361 = vst [vmem:[#allocation2 + $0x108] sm:$0xff] %v2325
      %2362 = vst [vmem:[#allocation2 + $0x110] sm:$0xff] %v2326
      %2363 = vst [vmem:[#allocation2 + $0x118] sm:$0xff] %v2327
      %v2364 = vld [vmem:[%s289 + $0x8] sm:$0xe]
      %v2365 = vld [vmem:[%s289 + $0xc] sm:$0xf]
      %v2366 = vld [vmem:[%s289 + $0x10] sm:$0xf]
      %v2367 = vld [vmem:[%s289 + $0x14] sm:$0xf]
      %v2368 = vld [vmem:[%s289 + $0x18] sm:$0xf]
      %v2369 = vld [vmem:[%s289 + $0x1c] sm:$0xf]
      %v2370 = vld [vmem:[%s289 + $0x20] sm:$0xf]
      %v2371 = vld [vmem:[%s289 + $0x24] sm:$0xf]
      %v2372 = vld [vmem:[%s289 + $0x28] sm:$0xf]
      %v2373 = vld [vmem:[%s289 + $0x2c] sm:$0xf]
      %v2374 = vld [vmem:[%s289 + $0x30] sm:$0xf]
      %v2375 = vld [vmem:[%s289 + $0x34] sm:$0xf]
      %v2376 = vld [vmem:[%s289 + $0x38] sm:$0xf]
      %v2377 = vld [vmem:[%s289 + $0x3c] sm:$0xf]
      %v2378 = vld [vmem:[%s289 + $0x40] sm:$0xf]
      %v2379 = vld [vmem:[%s289 + $0x44] sm:$0xf]
      %v2380 = vld [vmem:[%s289 + $0x48] sm:$0xf]
      %v2381 = vld [vmem:[%s289 + $0x4c] sm:$0xf]
      %v2382 = vld [vmem:[%s289 + $0x50] sm:$0xf]
      %v2383 = vld [vmem:[%s289 + $0x54] sm:$0xf]
      %v2384 = vld [vmem:[%s289 + $0x58] sm:$0xf]
      %v2385 = vld [vmem:[%s289 + $0x5c] sm:$0xf]
      %v2386 = vld [vmem:[%s289 + $0x60] sm:$0xf]
      %v2387 = vld [vmem:[%s289 + $0x64] sm:$0xf]
      %v2388 = vld [vmem:[%s289 + $0x68] sm:$0xf]
      %v2389 = vld [vmem:[%s289 + $0x6c] sm:$0xf]
      %v2390 = vld [vmem:[%s289 + $0x70] sm:$0xf]
      %v2391 = vld [vmem:[%s289 + $0x74] sm:$0xf]
      %v2392 = vld [vmem:[%s289 + $0x78] sm:$0xf]
      %v2393 = vld [vmem:[%s289 + $0x7c] sm:$0xf]
      %v2394 = vld [vmem:[%s289 + $0x80] sm:$0xf]
      %v2395 = vld [vmem:[%s289 + $0x84] sm:$0xf]
      %v2396 = vld [vmem:[%s289 + $0x88] sm:$0xf]
      %v2397 = vld [vmem:[%s289 + $0x8c] sm:$0xf]
      %v2398 = vld [vmem:[%s289 + $0x90] sm:$0xf]
      %v2399 = vld [vmem:[%s289 + $0x94] sm:$0xf]
      %v2400 = vld [vmem:[%s289 + $0x98] sm:$0x3]
      %s2401 = scalar_lea.vmem %s294, 16
      %v2402 = vld [vmem:[%s2401] sm:$0xf]
      %v2440 = vunpack.c.l.b16 %v2364
      %v2441 = vunpack.c.l.b16 %v2365
      %v2442 = vunpack.c.l.b16 %v2366
      %v2443 = vunpack.c.l.b16 %v2367
      %v2444 = vunpack.c.l.b16 %v2368
      %v2445 = vunpack.c.l.b16 %v2369
      %v2446 = vunpack.c.l.b16 %v2370
      %v2447 = vunpack.c.l.b16 %v2371
      %v2448 = vunpack.c.l.b16 %v2372
      %v2449 = vunpack.c.l.b16 %v2373
      %v2450 = vunpack.c.l.b16 %v2374
      %v2451 = vunpack.c.l.b16 %v2375
      %v2452 = vunpack.c.l.b16 %v2376
      %v2453 = vunpack.c.l.b16 %v2377
      %v2454 = vunpack.c.l.b16 %v2378
      %v2455 = vunpack.c.l.b16 %v2379
      %v2456 = vunpack.c.l.b16 %v2380
      %v2457 = vunpack.c.l.b16 %v2381
      %v2458 = vunpack.c.l.b16 %v2382
      %v2459 = vunpack.c.l.b16 %v2383
      %v2460 = vunpack.c.l.b16 %v2384
      %v2461 = vunpack.c.l.b16 %v2385
      %v2462 = vunpack.c.l.b16 %v2386
      %v2463 = vunpack.c.l.b16 %v2387
      %v2464 = vunpack.c.l.b16 %v2388
      %v2465 = vunpack.c.l.b16 %v2389
      %v2466 = vunpack.c.l.b16 %v2390
      %v2467 = vunpack.c.l.b16 %v2391
      %v2468 = vunpack.c.l.b16 %v2392
      %v2469 = vunpack.c.l.b16 %v2393
      %v2470 = vunpack.c.l.b16 %v2394
      %v2471 = vunpack.c.l.b16 %v2395
      %v2472 = vunpack.c.l.b16 %v2396
      %v2473 = vunpack.c.l.b16 %v2397
      %v2474 = vunpack.c.l.b16 %v2398
      %v2475 = vunpack.c.l.b16 %v2399
      %v2476 = vunpack.c.l.b16 %v2400
      %v2477 = vpack.c.b16 %v2441, %v2440
      %v2478 = vpack.c.b16 %v2443, %v2442
      %v2479 = vpack.c.b16 %v2445, %v2444
      %v2480 = vpack.c.b16 %v2447, %v2446
      %v2481 = vpack.c.b16 %v2449, %v2448
      %v2482 = vpack.c.b16 %v2451, %v2450
      %v2483 = vpack.c.b16 %v2453, %v2452
      %v2484 = vpack.c.b16 %v2455, %v2454
      %v2485 = vpack.c.b16 %v2457, %v2456
      %v2486 = vpack.c.b16 %v2459, %v2458
      %v2487 = vpack.c.b16 %v2461, %v2460
      %v2488 = vpack.c.b16 %v2463, %v2462
      %v2489 = vpack.c.b16 %v2465, %v2464
      %v2490 = vpack.c.b16 %v2467, %v2466
      %v2491 = vpack.c.b16 %v2469, %v2468
      %v2492 = vpack.c.b16 %v2471, %v2470
      %v2493 = vpack.c.b16 %v2473, %v2472
      %v2494 = vpack.c.b16 %v2475, %v2474
      %v2495 = vpack.c.b16 %v2476, %v2476
      %vm2496 = vsmask.f32 6400
      %v2498 = vshrl.u32 %v2477, 16
      %v2500 = vrot.slane %v2498, 1
      %v2501 = vshll.u32 %v2477, 16
      %v2503 = vrot.slane %v2501, 2
      %v2504 = vor.u32 %v2500, %v2503
      %v2506 = vshrl.u32 %v2478, 16
      %v2508 = vrot.slane %v2506, 1
      %v2509 = vshll.u32 %v2478, 16
      %v2511 = vrot.slane %v2509, 2
      %v2512 = vor.u32 %v2508, %v2511
      %v2513 = vsel %vm2496, %v2504, %v2512
      %v2515 = vshrl.u32 %v2479, 16
      %v2517 = vrot.slane %v2515, 1
      %v2518 = vshll.u32 %v2479, 16
      %v2520 = vrot.slane %v2518, 2
      %v2521 = vor.u32 %v2517, %v2520
      %v2522 = vsel %vm2496, %v2512, %v2521
      %v2524 = vshrl.u32 %v2480, 16
      %v2526 = vrot.slane %v2524, 1
      %v2527 = vshll.u32 %v2480, 16
      %v2529 = vrot.slane %v2527, 2
      %v2530 = vor.u32 %v2526, %v2529
      %v2531 = vsel %vm2496, %v2521, %v2530
      %v2533 = vshrl.u32 %v2481, 16
      %v2535 = vrot.slane %v2533, 1
      %v2536 = vshll.u32 %v2481, 16
      %v2538 = vrot.slane %v2536, 2
      %v2539 = vor.u32 %v2535, %v2538
      %v2540 = vsel %vm2496, %v2530, %v2539
      %v2542 = vshrl.u32 %v2482, 16
      %v2544 = vrot.slane %v2542, 1
      %v2545 = vshll.u32 %v2482, 16
      %v2547 = vrot.slane %v2545, 2
      %v2548 = vor.u32 %v2544, %v2547
      %v2549 = vsel %vm2496, %v2539, %v2548
      %v2551 = vshrl.u32 %v2483, 16
      %v2553 = vrot.slane %v2551, 1
      %v2554 = vshll.u32 %v2483, 16
      %v2556 = vrot.slane %v2554, 2
      %v2557 = vor.u32 %v2553, %v2556
      %v2558 = vsel %vm2496, %v2548, %v2557
      %v2560 = vshrl.u32 %v2484, 16
      %v2562 = vrot.slane %v2560, 1
      %v2563 = vshll.u32 %v2484, 16
      %v2565 = vrot.slane %v2563, 2
      %v2566 = vor.u32 %v2562, %v2565
      %v2567 = vsel %vm2496, %v2557, %v2566
      %v2569 = vshrl.u32 %v2485, 16
      %v2571 = vrot.slane %v2569, 1
      %v2572 = vshll.u32 %v2485, 16
      %v2574 = vrot.slane %v2572, 2
      %v2575 = vor.u32 %v2571, %v2574
      %v2576 = vsel %vm2496, %v2566, %v2575
      %v2578 = vshrl.u32 %v2486, 16
      %v2580 = vrot.slane %v2578, 1
      %v2581 = vshll.u32 %v2486, 16
      %v2583 = vrot.slane %v2581, 2
      %v2584 = vor.u32 %v2580, %v2583
      %v2585 = vsel %vm2496, %v2575, %v2584
      %v2587 = vshrl.u32 %v2487, 16
      %v2589 = vrot.slane %v2587, 1
      %v2590 = vshll.u32 %v2487, 16
      %v2592 = vrot.slane %v2590, 2
      %v2593 = vor.u32 %v2589, %v2592
      %v2594 = vsel %vm2496, %v2584, %v2593
      %v2596 = vshrl.u32 %v2488, 16
      %v2598 = vrot.slane %v2596, 1
      %v2599 = vshll.u32 %v2488, 16
      %v2601 = vrot.slane %v2599, 2
      %v2602 = vor.u32 %v2598, %v2601
      %v2603 = vsel %vm2496, %v2593, %v2602
      %v2605 = vshrl.u32 %v2489, 16
      %v2607 = vrot.slane %v2605, 1
      %v2608 = vshll.u32 %v2489, 16
      %v2610 = vrot.slane %v2608, 2
      %v2611 = vor.u32 %v2607, %v2610
      %v2612 = vsel %vm2496, %v2602, %v2611
      %v2614 = vshrl.u32 %v2490, 16
      %v2616 = vrot.slane %v2614, 1
      %v2617 = vshll.u32 %v2490, 16
      %v2619 = vrot.slane %v2617, 2
      %v2620 = vor.u32 %v2616, %v2619
      %v2621 = vsel %vm2496, %v2611, %v2620
      %v2623 = vshrl.u32 %v2491, 16
      %v2625 = vrot.slane %v2623, 1
      %v2626 = vshll.u32 %v2491, 16
      %v2628 = vrot.slane %v2626, 2
      %v2629 = vor.u32 %v2625, %v2628
      %v2630 = vsel %vm2496, %v2620, %v2629
      %v2632 = vshrl.u32 %v2492, 16
      %v2634 = vrot.slane %v2632, 1
      %v2635 = vshll.u32 %v2492, 16
      %v2637 = vrot.slane %v2635, 2
      %v2638 = vor.u32 %v2634, %v2637
      %v2639 = vsel %vm2496, %v2629, %v2638
      %v2641 = vshrl.u32 %v2493, 16
      %v2643 = vrot.slane %v2641, 1
      %v2644 = vshll.u32 %v2493, 16
      %v2646 = vrot.slane %v2644, 2
      %v2647 = vor.u32 %v2643, %v2646
      %v2648 = vsel %vm2496, %v2638, %v2647
      %v2650 = vshrl.u32 %v2494, 16
      %v2652 = vrot.slane %v2650, 1
      %v2653 = vshll.u32 %v2494, 16
      %v2655 = vrot.slane %v2653, 2
      %v2656 = vor.u32 %v2652, %v2655
      %v2657 = vsel %vm2496, %v2647, %v2656
      %v2659 = vshrl.u32 %v2495, 16
      %v2661 = vrot.slane %v2659, 1
      %v2662 = vshll.u32 %v2495, 16
      %v2664 = vrot.slane %v2662, 2
      %v2665 = vor.u32 %v2661, %v2664
      %v2666 = vsel %vm2496, %v2656, %v2665
      %v2668 = vsel %vm446, %v2513, 0
      %v2671 = vsel %vm446, %v2522, 0
      %v2674 = vsel %vm446, %v2531, 0
      %v2677 = vsel %vm446, %v2540, 0
      %v2680 = vsel %vm446, %v2549, 0
      %v2683 = vsel %vm446, %v2558, 0
      %v2686 = vsel %vm446, %v2567, 0
      %v2689 = vsel %vm446, %v2576, 0
      %v2692 = vsel %vm446, %v2585, 0
      %v2695 = vsel %vm446, %v2594, 0
      %v2698 = vsel %vm446, %v2603, 0
      %v2701 = vsel %vm446, %v2612, 0
      %v2704 = vsel %vm446, %v2621, 0
      %v2707 = vsel %vm446, %v2630, 0
      %v2710 = vsel %vm446, %v2639, 0
      %v2713 = vsel %vm446, %v2648, 0
      %v2716 = vsel %vm446, %v2657, 0
      %v2719 = vsel %vm446, %v2666, 0
      %v2722 = vsel %vm501, %v2402, 0
      %2724 = vmatprep.subr.bf16.mxu0 0
      %2725 = vmatpush1.bf16.msra.mxu0 %v2722
      %2726 = vmatprep.subr.bf16.mxu0 0
      %2727 = vmatpush1.bf16.msra.mxu0 0
      %2728 = vmatprep.subr.bf16.mxu0 0
      %2729 = vmatpush1.bf16.msra.mxu0 0
      %2730 = vmatprep.subr.bf16.mxu0 0
      %2731 = vmatpush1.bf16.msra.mxu0 0
      %2732 = vmatprep.subr.bf16.mxu0 0
      %2733 = vmatpush1.bf16.msra.mxu0 0
      %2734 = vmatprep.subr.bf16.mxu0 0
      %2735 = vmatpush1.bf16.msra.mxu0 0
      %2736 = vmatprep.subr.bf16.mxu0 0
      %2737 = vmatpush1.bf16.msra.mxu0 0
      %2738 = vmatprep.subr.bf16.mxu0 0
      %2739 = vmatpush1.bf16.msra.mxu0 0
      %2740 = vmatprep.subr.bf16.mxu0 0
      %2741 = vmatpush1.bf16.msra.mxu0 0
      %2742 = vmatprep.subr.bf16.mxu0 0
      %2743 = vmatpush1.bf16.msra.mxu0 0
      %2744 = vmatprep.subr.bf16.mxu0 0
      %2745 = vmatpush1.bf16.msra.mxu0 0
      %2746 = vmatprep.subr.bf16.mxu0 0
      %2747 = vmatpush1.bf16.msra.mxu0 0
      %2748 = vmatprep.subr.bf16.mxu0 0
      %2749 = vmatpush1.bf16.msra.mxu0 0
      %2750 = vmatprep.subr.bf16.mxu0 0
      %2751 = vmatpush1.bf16.msra.mxu0 0
      %2752 = vmatprep.subr.bf16.mxu0 0
      %2753 = vmatpush1.bf16.msra.mxu0 0
      %2754 = vmatprep.subr.bf16.mxu0 0
      %2755 = vmatpush1.bf16.msra.mxu0 0
      %2756 = vmatprep.mubr.bf16.mxu0 0
      %2757 = vmatmul.mubr.bf16.gmra.mrb[0].mxu0 %v2668
      %v2758 = vpop.f32.mrb[0].mxu0
      %v2759 = vadd.f32 0.0, %v2758
      %v2760 = vpop.f32.mrb[0].mxu0
      %v2761 = vpop.f32.mrb[0].mxu0
      %v2762 = vadd.f32 0.0, %v2761
      %v2763 = vpop.f32.mrb[0].mxu0
      %2764 = vmatprep.mubr.bf16.mxu0 0
      %2765 = vmatmul.mubr.bf16.gmra.mrb[0].mxu0 %v2671
      %v2766 = vpop.f32.mrb[0].mxu0
      %v2767 = vadd.f32 0.0, %v2766
      %v2768 = vpop.f32.mrb[0].mxu0
      %v2769 = vpop.f32.mrb[0].mxu0
      %v2770 = vadd.f32 0.0, %v2769
      %v2771 = vpop.f32.mrb[0].mxu0
      %2772 = vmatprep.mubr.bf16.mxu0 0
      %2773 = vmatmul.mubr.bf16.gmra.mrb[0].mxu0 %v2674
      %v2774 = vpop.f32.mrb[0].mxu0
      %v2775 = vadd.f32 0.0, %v2774
      %v2776 = vpop.f32.mrb[0].mxu0
      %v2777 = vpop.f32.mrb[0].mxu0
      %v2778 = vadd.f32 0.0, %v2777
      %v2779 = vpop.f32.mrb[0].mxu0
      %2780 = vmatprep.mubr.bf16.mxu0 0
      %2781 = vmatmul.mubr.bf16.gmra.mrb[0].mxu0 %v2677
      %v2782 = vpop.f32.mrb[0].mxu0
      %v2783 = vadd.f32 0.0, %v2782
      %v2784 = vpop.f32.mrb[0].mxu0
      %v2785 = vpop.f32.mrb[0].mxu0
      %v2786 = vadd.f32 0.0, %v2785
      %v2787 = vpop.f32.mrb[0].mxu0
      %2788 = vmatprep.mubr.bf16.mxu0 0
      %2789 = vmatmul.mubr.bf16.gmra.mrb[0].mxu0 %v2680
      %v2790 = vpop.f32.mrb[0].mxu0
      %v2791 = vadd.f32 0.0, %v2790
      %v2792 = vpop.f32.mrb[0].mxu0
      %v2793 = vpop.f32.mrb[0].mxu0
      %v2794 = vadd.f32 0.0, %v2793
      %v2795 = vpop.f32.mrb[0].mxu0
      %2796 = vmatprep.mubr.bf16.mxu0 0
      %2797 = vmatmul.mubr.bf16.gmra.mrb[0].mxu0 %v2683
      %v2798 = vpop.f32.mrb[0].mxu0
      %v2799 = vadd.f32 0.0, %v2798
      %v2800 = vpop.f32.mrb[0].mxu0
      %v2801 = vpop.f32.mrb[0].mxu0
      %v2802 = vadd.f32 0.0, %v2801
      %v2803 = vpop.f32.mrb[0].mxu0
      %2804 = vmatprep.mubr.bf16.mxu0 0
      %2805 = vmatmul.mubr.bf16.gmra.mrb[0].mxu0 %v2686
      %v2806 = vpop.f32.mrb[0].mxu0
      %v2807 = vadd.f32 0.0, %v2806
      %v2808 = vpop.f32.mrb[0].mxu0
      %v2809 = vpop.f32.mrb[0].mxu0
      %v2810 = vadd.f32 0.0, %v2809
      %v2811 = vpop.f32.mrb[0].mxu0
      %2812 = vmatprep.mubr.bf16.mxu0 0
      %2813 = vmatmul.mubr.bf16.gmra.mrb[0].mxu0 %v2689
      %v2814 = vpop.f32.mrb[0].mxu0
      %v2815 = vadd.f32 0.0, %v2814
      %v2816 = vpop.f32.mrb[0].mxu0
      %v2817 = vpop.f32.mrb[0].mxu0
      %v2818 = vadd.f32 0.0, %v2817
      %v2819 = vpop.f32.mrb[0].mxu0
      %2820 = vmatprep.mubr.bf16.mxu0 0
      %2821 = vmatmul.mubr.bf16.gmra.mrb[0].mxu0 %v2692
      %v2822 = vpop.f32.mrb[0].mxu0
      %v2823 = vadd.f32 0.0, %v2822
      %v2824 = vpop.f32.mrb[0].mxu0
      %v2825 = vpop.f32.mrb[0].mxu0
      %v2826 = vadd.f32 0.0, %v2825
      %v2827 = vpop.f32.mrb[0].mxu0
      %2828 = vmatprep.mubr.bf16.mxu0 0
      %2829 = vmatmul.mubr.bf16.gmra.mrb[0].mxu0 %v2695
      %v2830 = vpop.f32.mrb[0].mxu0
      %v2831 = vadd.f32 0.0, %v2830
      %v2832 = vpop.f32.mrb[0].mxu0
      %v2833 = vpop.f32.mrb[0].mxu0
      %v2834 = vadd.f32 0.0, %v2833
      %v2835 = vpop.f32.mrb[0].mxu0
      %2836 = vmatprep.mubr.bf16.mxu0 0
      %2837 = vmatmul.mubr.bf16.gmra.mrb[0].mxu0 %v2698
      %v2838 = vpop.f32.mrb[0].mxu0
      %v2839 = vadd.f32 0.0, %v2838
      %v2840 = vpop.f32.mrb[0].mxu0
      %v2841 = vpop.f32.mrb[0].mxu0
      %v2842 = vadd.f32 0.0, %v2841
      %v2843 = vpop.f32.mrb[0].mxu0
      %2844 = vmatprep.mubr.bf16.mxu0 0
      %2845 = vmatmul.mubr.bf16.gmra.mrb[0].mxu0 %v2701
      %v2846 = vpop.f32.mrb[0].mxu0
      %v2847 = vadd.f32 0.0, %v2846
      %v2848 = vpop.f32.mrb[0].mxu0
      %v2849 = vpop.f32.mrb[0].mxu0
      %v2850 = vadd.f32 0.0, %v2849
      %v2851 = vpop.f32.mrb[0].mxu0
      %2852 = vmatprep.mubr.bf16.mxu0 0
      %2853 = vmatmul.mubr.bf16.gmra.mrb[0].mxu0 %v2704
      %v2854 = vpop.f32.mrb[0].mxu0
      %v2855 = vadd.f32 0.0, %v2854
      %v2856 = vpop.f32.mrb[0].mxu0
      %v2857 = vpop.f32.mrb[0].mxu0
      %v2858 = vadd.f32 0.0, %v2857
      %v2859 = vpop.f32.mrb[0].mxu0
      %2860 = vmatprep.mubr.bf16.mxu0 0
      %2861 = vmatmul.mubr.bf16.gmra.mrb[0].mxu0 %v2707
      %v2862 = vpop.f32.mrb[0].mxu0
      %v2863 = vadd.f32 0.0, %v2862
      %v2864 = vpop.f32.mrb[0].mxu0
      %v2865 = vpop.f32.mrb[0].mxu0
      %v2866 = vadd.f32 0.0, %v2865
      %v2867 = vpop.f32.mrb[0].mxu0
      %2868 = vmatprep.mubr.bf16.mxu0 0
      %2869 = vmatmul.mubr.bf16.gmra.mrb[0].mxu0 %v2710
      %v2870 = vpop.f32.mrb[0].mxu0
      %v2871 = vadd.f32 0.0, %v2870
      %v2872 = vpop.f32.mrb[0].mxu0
      %v2873 = vpop.f32.mrb[0].mxu0
      %v2874 = vadd.f32 0.0, %v2873
      %v2875 = vpop.f32.mrb[0].mxu0
      %2876 = vmatprep.mubr.bf16.mxu0 0
      %2877 = vmatmul.mubr.bf16.gmra.mrb[0].mxu0 %v2713
      %v2878 = vpop.f32.mrb[0].mxu0
      %v2879 = vadd.f32 0.0, %v2878
      %v2880 = vpop.f32.mrb[0].mxu0
      %v2881 = vpop.f32.mrb[0].mxu0
      %v2882 = vadd.f32 0.0, %v2881
      %v2883 = vpop.f32.mrb[0].mxu0
      %2884 = vmatprep.mubr.bf16.mxu0 0
      %2885 = vmatmul.mubr.bf16.gmra.mrb[0].mxu0 %v2716
      %v2886 = vpop.f32.mrb[0].mxu0
      %v2887 = vadd.f32 0.0, %v2886
      %v2888 = vpop.f32.mrb[0].mxu0
      %v2889 = vpop.f32.mrb[0].mxu0
      %v2890 = vadd.f32 0.0, %v2889
      %v2891 = vpop.f32.mrb[0].mxu0
      %2892 = vmatprep.mubr.bf16.mxu0 0
      %2893 = vmatmul.mubr.bf16.gmra.mrb[0].mxu0 %v2719
      %v2894 = vpop.f32.mrb[0].mxu0
      %v2895 = vadd.f32 0.0, %v2894
      %v2896 = vpop.f32.mrb[0].mxu0
      %v2897 = vpop.f32.mrb[0].mxu0
      %v2898 = vadd.f32 0.0, %v2897
      %v2899 = vpop.f32.mrb[0].mxu0
      %2900 = vdwg.mxu0
      %v2901 = vld [vmem:[#allocation2] sm:$0xff]
      %v2902 = vld [vmem:[#allocation2 + $0x8] sm:$0xff]
      %v2903 = vld [vmem:[#allocation2 + $0x10] sm:$0xff]
      %v2904 = vld [vmem:[#allocation2 + $0x18] sm:$0xff]
      %v2905 = vld [vmem:[#allocation2 + $0x20] sm:$0xff]
      %v2906 = vld [vmem:[#allocation2 + $0x28] sm:$0xff]
      %v2907 = vld [vmem:[#allocation2 + $0x30] sm:$0xff]
      %v2908 = vld [vmem:[#allocation2 + $0x38] sm:$0xff]
      %v2909 = vld [vmem:[#allocation2 + $0x40] sm:$0xff]
      %v2910 = vld [vmem:[#allocation2 + $0x48] sm:$0xff]
      %v2911 = vld [vmem:[#allocation2 + $0x50] sm:$0xff]
      %v2912 = vld [vmem:[#allocation2 + $0x58] sm:$0xff]
      %v2913 = vld [vmem:[#allocation2 + $0x60] sm:$0xff]
      %v2914 = vld [vmem:[#allocation2 + $0x68] sm:$0xff]
      %v2915 = vld [vmem:[#allocation2 + $0x70] sm:$0xff]
      %v2916 = vld [vmem:[#allocation2 + $0x78] sm:$0xff]
      %v2917 = vld [vmem:[#allocation2 + $0x80] sm:$0xff]
      %v2918 = vld [vmem:[#allocation2 + $0x88] sm:$0xff]
      %v2919 = vld [vmem:[#allocation2 + $0x90] sm:$0xff]
      %v2920 = vld [vmem:[#allocation2 + $0x98] sm:$0xff]
      %v2921 = vld [vmem:[#allocation2 + $0xa0] sm:$0xff]
      %v2922 = vld [vmem:[#allocation2 + $0xa8] sm:$0xff]
      %v2923 = vld [vmem:[#allocation2 + $0xb0] sm:$0xff]
      %v2924 = vld [vmem:[#allocation2 + $0xb8] sm:$0xff]
      %v2925 = vld [vmem:[#allocation2 + $0xc0] sm:$0xff]
      %v2926 = vld [vmem:[#allocation2 + $0xc8] sm:$0xff]
      %v2927 = vld [vmem:[#allocation2 + $0xd0] sm:$0xff]
      %v2928 = vld [vmem:[#allocation2 + $0xd8] sm:$0xff]
      %v2929 = vld [vmem:[#allocation2 + $0xe0] sm:$0xff]
      %v2930 = vld [vmem:[#allocation2 + $0xe8] sm:$0xff]
      %v2931 = vld [vmem:[#allocation2 + $0xf0] sm:$0xff]
      %v2932 = vld [vmem:[#allocation2 + $0xf8] sm:$0xff]
      %v2933 = vld [vmem:[#allocation2 + $0x100] sm:$0xff]
      %v2934 = vld [vmem:[#allocation2 + $0x108] sm:$0xff]
      %v2935 = vld [vmem:[#allocation2 + $0x110] sm:$0xff]
      %v2936 = vld [vmem:[#allocation2 + $0x118] sm:$0xff]
      %v2937 = vadd.f32 %v2901, %v2759
      %v2938 = vadd.f32 %v2902, %v2762
      %v2939 = vadd.f32 %v2903, %v2767
      %v2940 = vadd.f32 %v2904, %v2770
      %v2941 = vadd.f32 %v2905, %v2775
      %v2942 = vadd.f32 %v2906, %v2778
      %v2943 = vadd.f32 %v2907, %v2783
      %v2944 = vadd.f32 %v2908, %v2786
      %v2945 = vadd.f32 %v2909, %v2791
      %v2946 = vadd.f32 %v2910, %v2794
      %v2947 = vadd.f32 %v2911, %v2799
      %v2948 = vadd.f32 %v2912, %v2802
      %v2949 = vadd.f32 %v2913, %v2807
      %v2950 = vadd.f32 %v2914, %v2810
      %v2951 = vadd.f32 %v2915, %v2815
      %v2952 = vadd.f32 %v2916, %v2818
      %v2953 = vadd.f32 %v2917, %v2823
      %v2954 = vadd.f32 %v2918, %v2826
      %v2955 = vadd.f32 %v2919, %v2831
      %v2956 = vadd.f32 %v2920, %v2834
      %v2957 = vadd.f32 %v2921, %v2839
      %v2958 = vadd.f32 %v2922, %v2842
      %v2959 = vadd.f32 %v2923, %v2847
      %v2960 = vadd.f32 %v2924, %v2850
      %v2961 = vadd.f32 %v2925, %v2855
      %v2962 = vadd.f32 %v2926, %v2858
      %v2963 = vadd.f32 %v2927, %v2863
      %v2964 = vadd.f32 %v2928, %v2866
      %v2965 = vadd.f32 %v2929, %v2871
      %v2966 = vadd.f32 %v2930, %v2874
      %v2967 = vadd.f32 %v2931, %v2879
      %v2968 = vadd.f32 %v2932, %v2882
      %v2969 = vadd.f32 %v2933, %v2887
      %v2970 = vadd.f32 %v2934, %v2890
      %v2971 = vadd.f32 %v2935, %v2895
      %v2972 = vadd.f32 %v2936, %v2898
      %2973 = vst [vmem:[#allocation2] sm:$0xff] %v2937
      %2974 = vst [vmem:[#allocation2 + $0x8] sm:$0xff] %v2938
      %2975 = vst [vmem:[#allocation2 + $0x10] sm:$0xff] %v2939
      %2976 = vst [vmem:[#allocation2 + $0x18] sm:$0xff] %v2940
      %2977 = vst [vmem:[#allocation2 + $0x20] sm:$0xff] %v2941
      %2978 = vst [vmem:[#allocation2 + $0x28] sm:$0xff] %v2942
      %2979 = vst [vmem:[#allocation2 + $0x30] sm:$0xff] %v2943
      %2980 = vst [vmem:[#allocation2 + $0x38] sm:$0xff] %v2944
      %2981 = vst [vmem:[#allocation2 + $0x40] sm:$0xff] %v2945
      %2982 = vst [vmem:[#allocation2 + $0x48] sm:$0xff] %v2946
      %2983 = vst [vmem:[#allocation2 + $0x50] sm:$0xff] %v2947
      %2984 = vst [vmem:[#allocation2 + $0x58] sm:$0xff] %v2948
      %2985 = vst [vmem:[#allocation2 + $0x60] sm:$0xff] %v2949
      %2986 = vst [vmem:[#allocation2 + $0x68] sm:$0xff] %v2950
      %2987 = vst [vmem:[#allocation2 + $0x70] sm:$0xff] %v2951
      %2988 = vst [vmem:[#allocation2 + $0x78] sm:$0xff] %v2952
      %2989 = vst [vmem:[#allocation2 + $0x80] sm:$0xff] %v2953
      %2990 = vst [vmem:[#allocation2 + $0x88] sm:$0xff] %v2954
      %2991 = vst [vmem:[#allocation2 + $0x90] sm:$0xff] %v2955
      %2992 = vst [vmem:[#allocation2 + $0x98] sm:$0xff] %v2956
      %2993 = vst [vmem:[#allocation2 + $0xa0] sm:$0xff] %v2957
      %2994 = vst [vmem:[#allocation2 + $0xa8] sm:$0xff] %v2958
      %2995 = vst [vmem:[#allocation2 + $0xb0] sm:$0xff] %v2959
      %2996 = vst [vmem:[#allocation2 + $0xb8] sm:$0xff] %v2960
      %2997 = vst [vmem:[#allocation2 + $0xc0] sm:$0xff] %v2961
      %2998 = vst [vmem:[#allocation2 + $0xc8] sm:$0xff] %v2962
      %2999 = vst [vmem:[#allocation2 + $0xd0] sm:$0xff] %v2963
      %3000 = vst [vmem:[#allocation2 + $0xd8] sm:$0xff] %v2964
      %3001 = vst [vmem:[#allocation2 + $0xe0] sm:$0xff] %v2965
      %3002 = vst [vmem:[#allocation2 + $0xe8] sm:$0xff] %v2966
      %3003 = vst [vmem:[#allocation2 + $0xf0] sm:$0xff] %v2967
      %3004 = vst [vmem:[#allocation2 + $0xf8] sm:$0xff] %v2968
      %3005 = vst [vmem:[#allocation2 + $0x100] sm:$0xff] %v2969
      %3006 = vst [vmem:[#allocation2 + $0x108] sm:$0xff] %v2970
      %3007 = vst [vmem:[#allocation2 + $0x110] sm:$0xff] %v2971
      %3008 = vst [vmem:[#allocation2 + $0x118] sm:$0xff] %v2972
      %v3009 = vld [vmem:[%s289 + $0x8] sm:$0xc]
      %v3010 = vld [vmem:[%s289 + $0xc] sm:$0xf]
      %v3011 = vld [vmem:[%s289 + $0x10] sm:$0xf]
      %v3012 = vld [vmem:[%s289 + $0x14] sm:$0xf]
      %v3013 = vld [vmem:[%s289 + $0x18] sm:$0xf]
      %v3014 = vld [vmem:[%s289 + $0x1c] sm:$0xf]
      %v3015 = vld [vmem:[%s289 + $0x20] sm:$0xf]
      %v3016 = vld [vmem:[%s289 + $0x24] sm:$0xf]
      %v3017 = vld [vmem:[%s289 + $0x28] sm:$0xf]
      %v3018 = vld [vmem:[%s289 + $0x2c] sm:$0xf]
      %v3019 = vld [vmem:[%s289 + $0x30] sm:$0xf]
      %v3020 = vld [vmem:[%s289 + $0x34] sm:$0xf]
      %v3021 = vld [vmem:[%s289 + $0x38] sm:$0xf]
      %v3022 = vld [vmem:[%s289 + $0x3c] sm:$0xf]
      %v3023 = vld [vmem:[%s289 + $0x40] sm:$0xf]
      %v3024 = vld [vmem:[%s289 + $0x44] sm:$0xf]
      %v3025 = vld [vmem:[%s289 + $0x48] sm:$0xf]
      %v3026 = vld [vmem:[%s289 + $0x4c] sm:$0xf]
      %v3027 = vld [vmem:[%s289 + $0x50] sm:$0xf]
      %v3028 = vld [vmem:[%s289 + $0x54] sm:$0xf]
      %v3029 = vld [vmem:[%s289 + $0x58] sm:$0xf]
      %v3030 = vld [vmem:[%s289 + $0x5c] sm:$0xf]
      %v3031 = vld [vmem:[%s289 + $0x60] sm:$0xf]
      %v3032 = vld [vmem:[%s289 + $0x64] sm:$0xf]
      %v3033 = vld [vmem:[%s289 + $0x68] sm:$0xf]
      %v3034 = vld [vmem:[%s289 + $0x6c] sm:$0xf]
      %v3035 = vld [vmem:[%s289 + $0x70] sm:$0xf]
      %v3036 = vld [vmem:[%s289 + $0x74] sm:$0xf]
      %v3037 = vld [vmem:[%s289 + $0x78] sm:$0xf]
      %v3038 = vld [vmem:[%s289 + $0x7c] sm:$0xf]
      %v3039 = vld [vmem:[%s289 + $0x80] sm:$0xf]
      %v3040 = vld [vmem:[%s289 + $0x84] sm:$0xf]
      %v3041 = vld [vmem:[%s289 + $0x88] sm:$0xf]
      %v3042 = vld [vmem:[%s289 + $0x8c] sm:$0xf]
      %v3043 = vld [vmem:[%s289 + $0x90] sm:$0xf]
      %v3044 = vld [vmem:[%s289 + $0x94] sm:$0xf]
      %v3045 = vld [vmem:[%s289 + $0x98] sm:$0x3]
      %s3046 = scalar_lea.vmem %s294, 20
      %v3047 = vld [vmem:[%s3046] sm:$0xf]
      %v3085 = vunpack.c.l.b16 %v3009
      %v3086 = vunpack.c.l.b16 %v3010
      %v3087 = vunpack.c.l.b16 %v3011
      %v3088 = vunpack.c.l.b16 %v3012
      %v3089 = vunpack.c.l.b16 %v3013
      %v3090 = vunpack.c.l.b16 %v3014
      %v3091 = vunpack.c.l.b16 %v3015
      %v3092 = vunpack.c.l.b16 %v3016
      %v3093 = vunpack.c.l.b16 %v3017
      %v3094 = vunpack.c.l.b16 %v3018
      %v3095 = vunpack.c.l.b16 %v3019
      %v3096 = vunpack.c.l.b16 %v3020
      %v3097 = vunpack.c.l.b16 %v3021
      %v3098 = vunpack.c.l.b16 %v3022
      %v3099 = vunpack.c.l.b16 %v3023
      %v3100 = vunpack.c.l.b16 %v3024
      %v3101 = vunpack.c.l.b16 %v3025
      %v3102 = vunpack.c.l.b16 %v3026
      %v3103 = vunpack.c.l.b16 %v3027
      %v3104 = vunpack.c.l.b16 %v3028
      %v3105 = vunpack.c.l.b16 %v3029
      %v3106 = vunpack.c.l.b16 %v3030
      %v3107 = vunpack.c.l.b16 %v3031
      %v3108 = vunpack.c.l.b16 %v3032
      %v3109 = vunpack.c.l.b16 %v3033
      %v3110 = vunpack.c.l.b16 %v3034
      %v3111 = vunpack.c.l.b16 %v3035
      %v3112 = vunpack.c.l.b16 %v3036
      %v3113 = vunpack.c.l.b16 %v3037
      %v3114 = vunpack.c.l.b16 %v3038
      %v3115 = vunpack.c.l.b16 %v3039
      %v3116 = vunpack.c.l.b16 %v3040
      %v3117 = vunpack.c.l.b16 %v3041
      %v3118 = vunpack.c.l.b16 %v3042
      %v3119 = vunpack.c.l.b16 %v3043
      %v3120 = vunpack.c.l.b16 %v3044
      %v3121 = vunpack.c.l.b16 %v3045
      %v3122 = vpack.c.b16 %v3086, %v3085
      %v3123 = vpack.c.b16 %v3088, %v3087
      %v3124 = vpack.c.b16 %v3090, %v3089
      %v3125 = vpack.c.b16 %v3092, %v3091
      %v3126 = vpack.c.b16 %v3094, %v3093
      %v3127 = vpack.c.b16 %v3096, %v3095
      %v3128 = vpack.c.b16 %v3098, %v3097
      %v3129 = vpack.c.b16 %v3100, %v3099
      %v3130 = vpack.c.b16 %v3102, %v3101
      %v3131 = vpack.c.b16 %v3104, %v3103
      %v3132 = vpack.c.b16 %v3106, %v3105
      %v3133 = vpack.c.b16 %v3108, %v3107
      %v3134 = vpack.c.b16 %v3110, %v3109
      %v3135 = vpack.c.b16 %v3112, %v3111
      %v3136 = vpack.c.b16 %v3114, %v3113
      %v3137 = vpack.c.b16 %v3116, %v3115
      %v3138 = vpack.c.b16 %v3118, %v3117
      %v3139 = vpack.c.b16 %v3120, %v3119
      %v3140 = vpack.c.b16 %v3121, %v3121
      %vm3141 = vcmask 1045504
      %v3142 = vrot.slane %v3122, 2
      %v3143 = vrot.slane %v3123, 2
      %v3144 = vsel %vm3141, %v3142, %v3143
      %v3145 = vrot.slane %v3124, 2
      %v3146 = vsel %vm3141, %v3143, %v3145
      %v3147 = vrot.slane %v3125, 2
      %v3148 = vsel %vm3141, %v3145, %v3147
      %v3149 = vrot.slane %v3126, 2
      %v3150 = vsel %vm3141, %v3147, %v3149
      %v3151 = vrot.slane %v3127, 2
      %v3152 = vsel %vm3141, %v3149, %v3151
      %v3153 = vrot.slane %v3128, 2
      %v3154 = vsel %vm3141, %v3151, %v3153
      %v3155 = vrot.slane %v3129, 2
      %v3156 = vsel %vm3141, %v3153, %v3155
      %v3157 = vrot.slane %v3130, 2
      %v3158 = vsel %vm3141, %v3155, %v3157
      %v3159 = vrot.slane %v3131, 2
      %v3160 = vsel %vm3141, %v3157, %v3159
      %v3161 = vrot.slane %v3132, 2
      %v3162 = vsel %vm3141, %v3159, %v3161
      %v3163 = vrot.slane %v3133, 2
      %v3164 = vsel %vm3141, %v3161, %v3163
      %v3165 = vrot.slane %v3134, 2
      %v3166 = vsel %vm3141, %v3163, %v3165
      %v3167 = vrot.slane %v3135, 2
      %v3168 = vsel %vm3141, %v3165, %v3167
      %v3169 = vrot.slane %v3136, 2
      %v3170 = vsel %vm3141, %v3167, %v3169
      %v3171 = vrot.slane %v3137, 2
      %v3172 = vsel %vm3141, %v3169, %v3171
      %v3173 = vrot.slane %v3138, 2
      %v3174 = vsel %vm3141, %v3171, %v3173
      %v3175 = vrot.slane %v3139, 2
      %v3176 = vsel %vm3141, %v3173, %v3175
      %v3177 = vrot.slane %v3140, 2
      %v3178 = vsel %vm3141, %v3175, %v3177
      %v3180 = vsel %vm446, %v3144, 0
      %v3183 = vsel %vm446, %v3146, 0
      %v3186 = vsel %vm446, %v3148, 0
      %v3189 = vsel %vm446, %v3150, 0
      %v3192 = vsel %vm446, %v3152, 0
      %v3195 = vsel %vm446, %v3154, 0
      %v3198 = vsel %vm446, %v3156, 0
      %v3201 = vsel %vm446, %v3158, 0
      %v3204 = vsel %vm446, %v3160, 0
      %v3207 = vsel %vm446, %v3162, 0
      %v3210 = vsel %vm446, %v3164, 0
      %v3213 = vsel %vm446, %v3166, 0
      %v3216 = vsel %vm446, %v3168, 0
      %v3219 = vsel %vm446, %v3170, 0
      %v3222 = vsel %vm446, %v3172, 0
      %v3225 = vsel %vm446, %v3174, 0
      %v3228 = vsel %vm446, %v3176, 0
      %v3231 = vsel %vm446, %v3178, 0
      %v3234 = vsel %vm501, %v3047, 0
      %3236 = vmatprep.subr.bf16.mxu0 0
      %3237 = vmatpush1.bf16.msra.mxu0 %v3234
      %3238 = vmatprep.subr.bf16.mxu0 0
      %3239 = vmatpush1.bf16.msra.mxu0 0
      %3240 = vmatprep.subr.bf16.mxu0 0
      %3241 = vmatpush1.bf16.msra.mxu0 0
      %3242 = vmatprep.subr.bf16.mxu0 0
      %3243 = vmatpush1.bf16.msra.mxu0 0
      %3244 = vmatprep.subr.bf16.mxu0 0
      %3245 = vmatpush1.bf16.msra.mxu0 0
      %3246 = vmatprep.subr.bf16.mxu0 0
      %3247 = vmatpush1.bf16.msra.mxu0 0
      %3248 = vmatprep.subr.bf16.mxu0 0
      %3249 = vmatpush1.bf16.msra.mxu0 0
      %3250 = vmatprep.subr.bf16.mxu0 0
      %3251 = vmatpush1.bf16.msra.mxu0 0
      %3252 = vmatprep.subr.bf16.mxu0 0
      %3253 = vmatpush1.bf16.msra.mxu0 0
      %3254 = vmatprep.subr.bf16.mxu0 0
      %3255 = vmatpush1.bf16.msra.mxu0 0
      %3256 = vmatprep.subr.bf16.mxu0 0
      %3257 = vmatpush1.bf16.msra.mxu0 0
      %3258 = vmatprep.subr.bf16.mxu0 0
      %3259 = vmatpush1.bf16.msra.mxu0 0
      %3260 = vmatprep.subr.bf16.mxu0 0
      %3261 = vmatpush1.bf16.msra.mxu0 0
      %3262 = vmatprep.subr.bf16.mxu0 0
      %3263 = vmatpush1.bf16.msra.mxu0 0
      %3264 = vmatprep.subr.bf16.mxu0 0
      %3265 = vmatpush1.bf16.msra.mxu0 0
      %3266 = vmatprep.subr.bf16.mxu0 0
      %3267 = vmatpush1.bf16.msra.mxu0 0
      %3268 = vmatprep.mubr.bf16.mxu0 0
      %3269 = vmatmul.mubr.bf16.gmra.mrb[0].mxu0 %v3180
      %v3270 = vpop.f32.mrb[0].mxu0
      %v3271 = vadd.f32 0.0, %v3270
      %v3272 = vpop.f32.mrb[0].mxu0
      %v3273 = vpop.f32.mrb[0].mxu0
      %v3274 = vadd.f32 0.0, %v3273
      %v3275 = vpop.f32.mrb[0].mxu0
      %3276 = vmatprep.mubr.bf16.mxu0 0
      %3277 = vmatmul.mubr.bf16.gmra.mrb[0].mxu0 %v3183
      %v3278 = vpop.f32.mrb[0].mxu0
      %v3279 = vadd.f32 0.0, %v3278
      %v3280 = vpop.f32.mrb[0].mxu0
      %v3281 = vpop.f32.mrb[0].mxu0
      %v3282 = vadd.f32 0.0, %v3281
      %v3283 = vpop.f32.mrb[0].mxu0
      %3284 = vmatprep.mubr.bf16.mxu0 0
      %3285 = vmatmul.mubr.bf16.gmra.mrb[0].mxu0 %v3186
      %v3286 = vpop.f32.mrb[0].mxu0
      %v3287 = vadd.f32 0.0, %v3286
      %v3288 = vpop.f32.mrb[0].mxu0
      %v3289 = vpop.f32.mrb[0].mxu0
      %v3290 = vadd.f32 0.0, %v3289
      %v3291 = vpop.f32.mrb[0].mxu0
      %3292 = vmatprep.mubr.bf16.mxu0 0
      %3293 = vmatmul.mubr.bf16.gmra.mrb[0].mxu0 %v3189
      %v3294 = vpop.f32.mrb[0].mxu0
      %v3295 = vadd.f32 0.0, %v3294
      %v3296 = vpop.f32.mrb[0].mxu0
      %v3297 = vpop.f32.mrb[0].mxu0
      %v3298 = vadd.f32 0.0, %v3297
      %v3299 = vpop.f32.mrb[0].mxu0
      %3300 = vmatprep.mubr.bf16.mxu0 0
      %3301 = vmatmul.mubr.bf16.gmra.mrb[0].mxu0 %v3192
      %v3302 = vpop.f32.mrb[0].mxu0
      %v3303 = vadd.f32 0.0, %v3302
      %v3304 = vpop.f32.mrb[0].mxu0
      %v3305 = vpop.f32.mrb[0].mxu0
      %v3306 = vadd.f32 0.0, %v3305
      %v3307 = vpop.f32.mrb[0].mxu0
      %3308 = vmatprep.mubr.bf16.mxu0 0
      %3309 = vmatmul.mubr.bf16.gmra.mrb[0].mxu0 %v3195
      %v3310 = vpop.f32.mrb[0].mxu0
      %v3311 = vadd.f32 0.0, %v3310
      %v3312 = vpop.f32.mrb[0].mxu0
      %v3313 = vpop.f32.mrb[0].mxu0
      %v3314 = vadd.f32 0.0, %v3313
      %v3315 = vpop.f32.mrb[0].mxu0
      %3316 = vmatprep.mubr.bf16.mxu0 0
      %3317 = vmatmul.mubr.bf16.gmra.mrb[0].mxu0 %v3198
      %v3318 = vpop.f32.mrb[0].mxu0
      %v3319 = vadd.f32 0.0, %v3318
      %v3320 = vpop.f32.mrb[0].mxu0
      %v3321 = vpop.f32.mrb[0].mxu0
      %v3322 = vadd.f32 0.0, %v3321
      %v3323 = vpop.f32.mrb[0].mxu0
      %3324 = vmatprep.mubr.bf16.mxu0 0
      %3325 = vmatmul.mubr.bf16.gmra.mrb[0].mxu0 %v3201
      %v3326 = vpop.f32.mrb[0].mxu0
      %v3327 = vadd.f32 0.0, %v3326
      %v3328 = vpop.f32.mrb[0].mxu0
      %v3329 = vpop.f32.mrb[0].mxu0
      %v3330 = vadd.f32 0.0, %v3329
      %v3331 = vpop.f32.mrb[0].mxu0
      %3332 = vmatprep.mubr.bf16.mxu0 0
      %3333 = vmatmul.mubr.bf16.gmra.mrb[0].mxu0 %v3204
      %v3334 = vpop.f32.mrb[0].mxu0
      %v3335 = vadd.f32 0.0, %v3334
      %v3336 = vpop.f32.mrb[0].mxu0
      %v3337 = vpop.f32.mrb[0].mxu0
      %v3338 = vadd.f32 0.0, %v3337
      %v3339 = vpop.f32.mrb[0].mxu0
      %3340 = vmatprep.mubr.bf16.mxu0 0
      %3341 = vmatmul.mubr.bf16.gmra.mrb[0].mxu0 %v3207
      %v3342 = vpop.f32.mrb[0].mxu0
      %v3343 = vadd.f32 0.0, %v3342
      %v3344 = vpop.f32.mrb[0].mxu0
      %v3345 = vpop.f32.mrb[0].mxu0
      %v3346 = vadd.f32 0.0, %v3345
      %v3347 = vpop.f32.mrb[0].mxu0
      %3348 = vmatprep.mubr.bf16.mxu0 0
      %3349 = vmatmul.mubr.bf16.gmra.mrb[0].mxu0 %v3210
      %v3350 = vpop.f32.mrb[0].mxu0
      %v3351 = vadd.f32 0.0, %v3350
      %v3352 = vpop.f32.mrb[0].mxu0
      %v3353 = vpop.f32.mrb[0].mxu0
      %v3354 = vadd.f32 0.0, %v3353
      %v3355 = vpop.f32.mrb[0].mxu0
      %3356 = vmatprep.mubr.bf16.mxu0 0
      %3357 = vmatmul.mubr.bf16.gmra.mrb[0].mxu0 %v3213
      %v3358 = vpop.f32.mrb[0].mxu0
      %v3359 = vadd.f32 0.0, %v3358
      %v3360 = vpop.f32.mrb[0].mxu0
      %v3361 = vpop.f32.mrb[0].mxu0
      %v3362 = vadd.f32 0.0, %v3361
      %v3363 = vpop.f32.mrb[0].mxu0
      %3364 = vmatprep.mubr.bf16.mxu0 0
      %3365 = vmatmul.mubr.bf16.gmra.mrb[0].mxu0 %v3216
      %v3366 = vpop.f32.mrb[0].mxu0
      %v3367 = vadd.f32 0.0, %v3366
      %v3368 = vpop.f32.mrb[0].mxu0
      %v3369 = vpop.f32.mrb[0].mxu0
      %v3370 = vadd.f32 0.0, %v3369
      %v3371 = vpop.f32.mrb[0].mxu0
      %3372 = vmatprep.mubr.bf16.mxu0 0
      %3373 = vmatmul.mubr.bf16.gmra.mrb[0].mxu0 %v3219
      %v3374 = vpop.f32.mrb[0].mxu0
      %v3375 = vadd.f32 0.0, %v3374
      %v3376 = vpop.f32.mrb[0].mxu0
      %v3377 = vpop.f32.mrb[0].mxu0
      %v3378 = vadd.f32 0.0, %v3377
      %v3379 = vpop.f32.mrb[0].mxu0
      %3380 = vmatprep.mubr.bf16.mxu0 0
      %3381 = vmatmul.mubr.bf16.gmra.mrb[0].mxu0 %v3222
      %v3382 = vpop.f32.mrb[0].mxu0
      %v3383 = vadd.f32 0.0, %v3382
      %v3384 = vpop.f32.mrb[0].mxu0
      %v3385 = vpop.f32.mrb[0].mxu0
      %v3386 = vadd.f32 0.0, %v3385
      %v3387 = vpop.f32.mrb[0].mxu0
      %3388 = vmatprep.mubr.bf16.mxu0 0
      %3389 = vmatmul.mubr.bf16.gmra.mrb[0].mxu0 %v3225
      %v3390 = vpop.f32.mrb[0].mxu0
      %v3391 = vadd.f32 0.0, %v3390
      %v3392 = vpop.f32.mrb[0].mxu0
      %v3393 = vpop.f32.mrb[0].mxu0
      %v3394 = vadd.f32 0.0, %v3393
      %v3395 = vpop.f32.mrb[0].mxu0
      %3396 = vmatprep.mubr.bf16.mxu0 0
      %3397 = vmatmul.mubr.bf16.gmra.mrb[0].mxu0 %v3228
      %v3398 = vpop.f32.mrb[0].mxu0
      %v3399 = vadd.f32 0.0, %v3398
      %v3400 = vpop.f32.mrb[0].mxu0
      %v3401 = vpop.f32.mrb[0].mxu0
      %v3402 = vadd.f32 0.0, %v3401
      %v3403 = vpop.f32.mrb[0].mxu0
      %3404 = vmatprep.mubr.bf16.mxu0 0
      %3405 = vmatmul.mubr.bf16.gmra.mrb[0].mxu0 %v3231
      %v3406 = vpop.f32.mrb[0].mxu0
      %v3407 = vadd.f32 0.0, %v3406
      %v3408 = vpop.f32.mrb[0].mxu0
      %v3409 = vpop.f32.mrb[0].mxu0
      %v3410 = vadd.f32 0.0, %v3409
      %v3411 = vpop.f32.mrb[0].mxu0
      %3412 = vdwg.mxu0
      %v3413 = vld [vmem:[#allocation2] sm:$0xff]
      %v3414 = vld [vmem:[#allocation2 + $0x8] sm:$0xff]
      %v3415 = vld [vmem:[#allocation2 + $0x10] sm:$0xff]
      %v3416 = vld [vmem:[#allocation2 + $0x18] sm:$0xff]
      %v3417 = vld [vmem:[#allocation2 + $0x20] sm:$0xff]
      %v3418 = vld [vmem:[#allocation2 + $0x28] sm:$0xff]
      %v3419 = vld [vmem:[#allocation2 + $0x30] sm:$0xff]
      %v3420 = vld [vmem:[#allocation2 + $0x38] sm:$0xff]
      %v3421 = vld [vmem:[#allocation2 + $0x40] sm:$0xff]
      %v3422 = vld [vmem:[#allocation2 + $0x48] sm:$0xff]
      %v3423 = vld [vmem:[#allocation2 + $0x50] sm:$0xff]
      %v3424 = vld [vmem:[#allocation2 + $0x58] sm:$0xff]
      %v3425 = vld [vmem:[#allocation2 + $0x60] sm:$0xff]
      %v3426 = vld [vmem:[#allocation2 + $0x68] sm:$0xff]
      %v3427 = vld [vmem:[#allocation2 + $0x70] sm:$0xff]
      %v3428 = vld [vmem:[#allocation2 + $0x78] sm:$0xff]
      %v3429 = vld [vmem:[#allocation2 + $0x80] sm:$0xff]
      %v3430 = vld [vmem:[#allocation2 + $0x88] sm:$0xff]
      %v3431 = vld [vmem:[#allocation2 + $0x90] sm:$0xff]
      %v3432 = vld [vmem:[#allocation2 + $0x98] sm:$0xff]
      %v3433 = vld [vmem:[#allocation2 + $0xa0] sm:$0xff]
      %v3434 = vld [vmem:[#allocation2 + $0xa8] sm:$0xff]
      %v3435 = vld [vmem:[#allocation2 + $0xb0] sm:$0xff]
      %v3436 = vld [vmem:[#allocation2 + $0xb8] sm:$0xff]
      %v3437 = vld [vmem:[#allocation2 + $0xc0] sm:$0xff]
      %v3438 = vld [vmem:[#allocation2 + $0xc8] sm:$0xff]
      %v3439 = vld [vmem:[#allocation2 + $0xd0] sm:$0xff]
      %v3440 = vld [vmem:[#allocation2 + $0xd8] sm:$0xff]
      %v3441 = vld [vmem:[#allocation2 + $0xe0] sm:$0xff]
      %v3442 = vld [vmem:[#allocation2 + $0xe8] sm:$0xff]
      %v3443 = vld [vmem:[#allocation2 + $0xf0] sm:$0xff]
      %v3444 = vld [vmem:[#allocation2 + $0xf8] sm:$0xff]
      %v3445 = vld [vmem:[#allocation2 + $0x100] sm:$0xff]
      %v3446 = vld [vmem:[#allocation2 + $0x108] sm:$0xff]
      %v3447 = vld [vmem:[#allocation2 + $0x110] sm:$0xff]
      %v3448 = vld [vmem:[#allocation2 + $0x118] sm:$0xff]
      %v3449 = vadd.f32 %v3413, %v3271
      %v3450 = vadd.f32 %v3414, %v3274
      %v3451 = vadd.f32 %v3415, %v3279
      %v3452 = vadd.f32 %v3416, %v3282
      %v3453 = vadd.f32 %v3417, %v3287
      %v3454 = vadd.f32 %v3418, %v3290
      %v3455 = vadd.f32 %v3419, %v3295
      %v3456 = vadd.f32 %v3420, %v3298
      %v3457 = vadd.f32 %v3421, %v3303
      %v3458 = vadd.f32 %v3422, %v3306
      %v3459 = vadd.f32 %v3423, %v3311
      %v3460 = vadd.f32 %v3424, %v3314
      %v3461 = vadd.f32 %v3425, %v3319
      %v3462 = vadd.f32 %v3426, %v3322
      %v3463 = vadd.f32 %v3427, %v3327
      %v3464 = vadd.f32 %v3428, %v3330
      %v3465 = vadd.f32 %v3429, %v3335
      %v3466 = vadd.f32 %v3430, %v3338
      %v3467 = vadd.f32 %v3431, %v3343
      %v3468 = vadd.f32 %v3432, %v3346
      %v3469 = vadd.f32 %v3433, %v3351
      %v3470 = vadd.f32 %v3434, %v3354
      %v3471 = vadd.f32 %v3435, %v3359
      %v3472 = vadd.f32 %v3436, %v3362
      %v3473 = vadd.f32 %v3437, %v3367
      %v3474 = vadd.f32 %v3438, %v3370
      %v3475 = vadd.f32 %v3439, %v3375
      %v3476 = vadd.f32 %v3440, %v3378
      %v3477 = vadd.f32 %v3441, %v3383
      %v3478 = vadd.f32 %v3442, %v3386
      %v3479 = vadd.f32 %v3443, %v3391
      %v3480 = vadd.f32 %v3444, %v3394
      %v3481 = vadd.f32 %v3445, %v3399
      %v3482 = vadd.f32 %v3446, %v3402
      %v3483 = vadd.f32 %v3447, %v3407
      %v3484 = vadd.f32 %v3448, %v3410
      %3485 = vst [vmem:[#allocation2] sm:$0xff] %v3449
      %3486 = vst [vmem:[#allocation2 + $0x8] sm:$0xff] %v3450
      %3487 = vst [vmem:[#allocation2 + $0x10] sm:$0xff] %v3451
      %3488 = vst [vmem:[#allocation2 + $0x18] sm:$0xff] %v3452
      %3489 = vst [vmem:[#allocation2 + $0x20] sm:$0xff] %v3453
      %3490 = vst [vmem:[#allocation2 + $0x28] sm:$0xff] %v3454
      %3491 = vst [vmem:[#allocation2 + $0x30] sm:$0xff] %v3455
      %3492 = vst [vmem:[#allocation2 + $0x38] sm:$0xff] %v3456
      %3493 = vst [vmem:[#allocation2 + $0x40] sm:$0xff] %v3457
      %3494 = vst [vmem:[#allocation2 + $0x48] sm:$0xff] %v3458
      %3495 = vst [vmem:[#allocation2 + $0x50] sm:$0xff] %v3459
      %3496 = vst [vmem:[#allocation2 + $0x58] sm:$0xff] %v3460
      %3497 = vst [vmem:[#allocation2 + $0x60] sm:$0xff] %v3461
      %3498 = vst [vmem:[#allocation2 + $0x68] sm:$0xff] %v3462
      %3499 = vst [vmem:[#allocation2 + $0x70] sm:$0xff] %v3463
      %3500 = vst [vmem:[#allocation2 + $0x78] sm:$0xff] %v3464
      %3501 = vst [vmem:[#allocation2 + $0x80] sm:$0xff] %v3465
      %3502 = vst [vmem:[#allocation2 + $0x88] sm:$0xff] %v3466
      %3503 = vst [vmem:[#allocation2 + $0x90] sm:$0xff] %v3467
      %3504 = vst [vmem:[#allocation2 + $0x98] sm:$0xff] %v3468
      %3505 = vst [vmem:[#allocation2 + $0xa0] sm:$0xff] %v3469
      %3506 = vst [vmem:[#allocation2 + $0xa8] sm:$0xff] %v3470
      %3507 = vst [vmem:[#allocation2 + $0xb0] sm:$0xff] %v3471
      %3508 = vst [vmem:[#allocation2 + $0xb8] sm:$0xff] %v3472
      %3509 = vst [vmem:[#allocation2 + $0xc0] sm:$0xff] %v3473
      %3510 = vst [vmem:[#allocation2 + $0xc8] sm:$0xff] %v3474
      %3511 = vst [vmem:[#allocation2 + $0xd0] sm:$0xff] %v3475
      %3512 = vst [vmem:[#allocation2 + $0xd8] sm:$0xff] %v3476
      %3513 = vst [vmem:[#allocation2 + $0xe0] sm:$0xff] %v3477
      %3514 = vst [vmem:[#allocation2 + $0xe8] sm:$0xff] %v3478
      %3515 = vst [vmem:[#allocation2 + $0xf0] sm:$0xff] %v3479
      %3516 = vst [vmem:[#allocation2 + $0xf8] sm:$0xff] %v3480
      %3517 = vst [vmem:[#allocation2 + $0x100] sm:$0xff] %v3481
      %3518 = vst [vmem:[#allocation2 + $0x108] sm:$0xff] %v3482
      %3519 = vst [vmem:[#allocation2 + $0x110] sm:$0xff] %v3483
      %3520 = vst [vmem:[#allocation2 + $0x118] sm:$0xff] %v3484
      %v3521 = vld [vmem:[%s289 + $0x10] sm:$0xc]
      %v3522 = vld [vmem:[%s289 + $0x14] sm:$0xf]
      %v3523 = vld [vmem:[%s289 + $0x18] sm:$0xf]
      %v3524 = vld [vmem:[%s289 + $0x1c] sm:$0xf]
      %v3525 = vld [vmem:[%s289 + $0x20] sm:$0xf]
      %v3526 = vld [vmem:[%s289 + $0x24] sm:$0xf]
      %v3527 = vld [vmem:[%s289 + $0x28] sm:$0xf]
      %v3528 = vld [vmem:[%s289 + $0x2c] sm:$0xf]
      %v3529 = vld [vmem:[%s289 + $0x30] sm:$0xf]
      %v3530 = vld [vmem:[%s289 + $0x34] sm:$0xf]
      %v3531 = vld [vmem:[%s289 + $0x38] sm:$0xf]
      %v3532 = vld [vmem:[%s289 + $0x3c] sm:$0xf]
      %v3533 = vld [vmem:[%s289 + $0x40] sm:$0xf]
      %v3534 = vld [vmem:[%s289 + $0x44] sm:$0xf]
      %v3535 = vld [vmem:[%s289 + $0x48] sm:$0xf]
      %v3536 = vld [vmem:[%s289 + $0x4c] sm:$0xf]
      %v3537 = vld [vmem:[%s289 + $0x50] sm:$0xf]
      %v3538 = vld [vmem:[%s289 + $0x54] sm:$0xf]
      %v3539 = vld [vmem:[%s289 + $0x58] sm:$0xf]
      %v3540 = vld [vmem:[%s289 + $0x5c] sm:$0xf]
      %v3541 = vld [vmem:[%s289 + $0x60] sm:$0xf]
      %v3542 = vld [vmem:[%s289 + $0x64] sm:$0xf]
      %v3543 = vld [vmem:[%s289 + $0x68] sm:$0xf]
      %v3544 = vld [vmem:[%s289 + $0x6c] sm:$0xf]
      %v3545 = vld [vmem:[%s289 + $0x70] sm:$0xf]
      %v3546 = vld [vmem:[%s289 + $0x74] sm:$0xf]
      %v3547 = vld [vmem:[%s289 + $0x78] sm:$0xf]
      %v3548 = vld [vmem:[%s289 + $0x7c] sm:$0xf]
      %v3549 = vld [vmem:[%s289 + $0x80] sm:$0xf]
      %v3550 = vld [vmem:[%s289 + $0x84] sm:$0xf]
      %v3551 = vld [vmem:[%s289 + $0x88] sm:$0xf]
      %v3552 = vld [vmem:[%s289 + $0x8c] sm:$0xf]
      %v3553 = vld [vmem:[%s289 + $0x90] sm:$0xf]
      %v3554 = vld [vmem:[%s289 + $0x94] sm:$0xf]
      %v3555 = vld [vmem:[%s289 + $0x98] sm:$0xf]
      %v3556 = vld [vmem:[%s289 + $0x9c] sm:$0xf]
      %v3557 = vld [vmem:[%s289 + $0xa0] sm:$0x3]
      %s3558 = scalar_lea.vmem %s294, 24
      %v3559 = vld [vmem:[%s3558] sm:$0xf]
      %v3597 = vunpack.c.l.b16 %v3521
      %v3598 = vunpack.c.l.b16 %v3522
      %v3599 = vunpack.c.l.b16 %v3523
      %v3600 = vunpack.c.l.b16 %v3524
      %v3601 = vunpack.c.l.b16 %v3525
      %v3602 = vunpack.c.l.b16 %v3526
      %v3603 = vunpack.c.l.b16 %v3527
      %v3604 = vunpack.c.l.b16 %v3528
      %v3605 = vunpack.c.l.b16 %v3529
      %v3606 = vunpack.c.l.b16 %v3530
      %v3607 = vunpack.c.l.b16 %v3531
      %v3608 = vunpack.c.l.b16 %v3532
      %v3609 = vunpack.c.l.b16 %v3533
      %v3610 = vunpack.c.l.b16 %v3534
      %v3611 = vunpack.c.l.b16 %v3535
      %v3612 = vunpack.c.l.b16 %v3536
      %v3613 = vunpack.c.l.b16 %v3537
      %v3614 = vunpack.c.l.b16 %v3538
      %v3615 = vunpack.c.l.b16 %v3539
      %v3616 = vunpack.c.l.b16 %v3540
      %v3617 = vunpack.c.l.b16 %v3541
      %v3618 = vunpack.c.l.b16 %v3542
      %v3619 = vunpack.c.l.b16 %v3543
      %v3620 = vunpack.c.l.b16 %v3544
      %v3621 = vunpack.c.l.b16 %v3545
      %v3622 = vunpack.c.l.b16 %v3546
      %v3623 = vunpack.c.l.b16 %v3547
      %v3624 = vunpack.c.l.b16 %v3548
      %v3625 = vunpack.c.l.b16 %v3549
      %v3626 = vunpack.c.l.b16 %v3550
      %v3627 = vunpack.c.l.b16 %v3551
      %v3628 = vunpack.c.l.b16 %v3552
      %v3629 = vunpack.c.l.b16 %v3553
      %v3630 = vunpack.c.l.b16 %v3554
      %v3631 = vunpack.c.l.b16 %v3555
      %v3632 = vunpack.c.l.b16 %v3556
      %v3633 = vunpack.c.l.b16 %v3557
      %v3634 = vpack.c.b16 %v3598, %v3597
      %v3635 = vpack.c.b16 %v3600, %v3599
      %v3636 = vpack.c.b16 %v3602, %v3601
      %v3637 = vpack.c.b16 %v3604, %v3603
      %v3638 = vpack.c.b16 %v3606, %v3605
      %v3639 = vpack.c.b16 %v3608, %v3607
      %v3640 = vpack.c.b16 %v3610, %v3609
      %v3641 = vpack.c.b16 %v3612, %v3611
      %v3642 = vpack.c.b16 %v3614, %v3613
      %v3643 = vpack.c.b16 %v3616, %v3615
      %v3644 = vpack.c.b16 %v3618, %v3617
      %v3645 = vpack.c.b16 %v3620, %v3619
      %v3646 = vpack.c.b16 %v3622, %v3621
      %v3647 = vpack.c.b16 %v3624, %v3623
      %v3648 = vpack.c.b16 %v3626, %v3625
      %v3649 = vpack.c.b16 %v3628, %v3627
      %v3650 = vpack.c.b16 %v3630, %v3629
      %v3651 = vpack.c.b16 %v3632, %v3631
      %v3652 = vpack.c.b16 %v3633, %v3633
      %v3653 = vrot.slane %v3634, 2
      %v3654 = vrot.slane %v3635, 2
      %v3655 = vsel %vm3141, %v3653, %v3654
      %v3656 = vrot.slane %v3636, 2
      %v3657 = vsel %vm3141, %v3654, %v3656
      %v3658 = vrot.slane %v3637, 2
      %v3659 = vsel %vm3141, %v3656, %v3658
      %v3660 = vrot.slane %v3638, 2
      %v3661 = vsel %vm3141, %v3658, %v3660
      %v3662 = vrot.slane %v3639, 2
      %v3663 = vsel %vm3141, %v3660, %v3662
      %v3664 = vrot.slane %v3640, 2
      %v3665 = vsel %vm3141, %v3662, %v3664
      %v3666 = vrot.slane %v3641, 2
      %v3667 = vsel %vm3141, %v3664, %v3666
      %v3668 = vrot.slane %v3642, 2
      %v3669 = vsel %vm3141, %v3666, %v3668
      %v3670 = vrot.slane %v3643, 2
      %v3671 = vsel %vm3141, %v3668, %v3670
      %v3672 = vrot.slane %v3644, 2
      %v3673 = vsel %vm3141, %v3670, %v3672
      %v3674 = vrot.slane %v3645, 2
      %v3675 = vsel %vm3141, %v3672, %v3674
      %v3676 = vrot.slane %v3646, 2
      %v3677 = vsel %vm3141, %v3674, %v3676
      %v3678 = vrot.slane %v3647, 2
      %v3679 = vsel %vm3141, %v3676, %v3678
      %v3680 = vrot.slane %v3648, 2
      %v3681 = vsel %vm3141, %v3678, %v3680
      %v3682 = vrot.slane %v3649, 2
      %v3683 = vsel %vm3141, %v3680, %v3682
      %v3684 = vrot.slane %v3650, 2
      %v3685 = vsel %vm3141, %v3682, %v3684
      %v3686 = vrot.slane %v3651, 2
      %v3687 = vsel %vm3141, %v3684, %v3686
      %v3688 = vrot.slane %v3652, 2
      %v3689 = vsel %vm3141, %v3686, %v3688
      %v3691 = vsel %vm446, %v3655, 0
      %v3694 = vsel %vm446, %v3657, 0
      %v3697 = vsel %vm446, %v3659, 0
      %v3700 = vsel %vm446, %v3661, 0
      %v3703 = vsel %vm446, %v3663, 0
      %v3706 = vsel %vm446, %v3665, 0
      %v3709 = vsel %vm446, %v3667, 0
      %v3712 = vsel %vm446, %v3669, 0
      %v3715 = vsel %vm446, %v3671, 0
      %v3718 = vsel %vm446, %v3673, 0
      %v3721 = vsel %vm446, %v3675, 0
      %v3724 = vsel %vm446, %v3677, 0
      %v3727 = vsel %vm446, %v3679, 0
      %v3730 = vsel %vm446, %v3681, 0
      %v3733 = vsel %vm446, %v3683, 0
      %v3736 = vsel %vm446, %v3685, 0
      %v3739 = vsel %vm446, %v3687, 0
      %v3742 = vsel %vm446, %v3689, 0
      %v3745 = vsel %vm501, %v3559, 0
      %3747 = vmatprep.subr.bf16.mxu0 0
      %3748 = vmatpush1.bf16.msra.mxu0 %v3745
      %3749 = vmatprep.subr.bf16.mxu0 0
      %3750 = vmatpush1.bf16.msra.mxu0 0
      %3751 = vmatprep.subr.bf16.mxu0 0
      %3752 = vmatpush1.bf16.msra.mxu0 0
      %3753 = vmatprep.subr.bf16.mxu0 0
      %3754 = vmatpush1.bf16.msra.mxu0 0
      %3755 = vmatprep.subr.bf16.mxu0 0
      %3756 = vmatpush1.bf16.msra.mxu0 0
      %3757 = vmatprep.subr.bf16.mxu0 0
      %3758 = vmatpush1.bf16.msra.mxu0 0
      %3759 = vmatprep.subr.bf16.mxu0 0
      %3760 = vmatpush1.bf16.msra.mxu0 0
      %3761 = vmatprep.subr.bf16.mxu0 0
      %3762 = vmatpush1.bf16.msra.mxu0 0
      %3763 = vmatprep.subr.bf16.mxu0 0
      %3764 = vmatpush1.bf16.msra.mxu0 0
      %3765 = vmatprep.subr.bf16.mxu0 0
      %3766 = vmatpush1.bf16.msra.mxu0 0
      %3767 = vmatprep.subr.bf16.mxu0 0
      %3768 = vmatpush1.bf16.msra.mxu0 0
      %3769 = vmatprep.subr.bf16.mxu0 0
      %3770 = vmatpush1.bf16.msra.mxu0 0
      %3771 = vmatprep.subr.bf16.mxu0 0
      %3772 = vmatpush1.bf16.msra.mxu0 0
      %3773 = vmatprep.subr.bf16.mxu0 0
      %3774 = vmatpush1.bf16.msra.mxu0 0
      %3775 = vmatprep.subr.bf16.mxu0 0
      %3776 = vmatpush1.bf16.msra.mxu0 0
      %3777 = vmatprep.subr.bf16.mxu0 0
      %3778 = vmatpush1.bf16.msra.mxu0 0
      %3779 = vmatprep.mubr.bf16.mxu0 0
      %3780 = vmatmul.mubr.bf16.gmra.mrb[0].mxu0 %v3691
      %v3781 = vpop.f32.mrb[0].mxu0
      %v3782 = vadd.f32 0.0, %v3781
      %v3783 = vpop.f32.mrb[0].mxu0
      %v3784 = vpop.f32.mrb[0].mxu0
      %v3785 = vadd.f32 0.0, %v3784
      %v3786 = vpop.f32.mrb[0].mxu0
      %3787 = vmatprep.mubr.bf16.mxu0 0
      %3788 = vmatmul.mubr.bf16.gmra.mrb[0].mxu0 %v3694
      %v3789 = vpop.f32.mrb[0].mxu0
      %v3790 = vadd.f32 0.0, %v3789
      %v3791 = vpop.f32.mrb[0].mxu0
      %v3792 = vpop.f32.mrb[0].mxu0
      %v3793 = vadd.f32 0.0, %v3792
      %v3794 = vpop.f32.mrb[0].mxu0
      %3795 = vmatprep.mubr.bf16.mxu0 0
      %3796 = vmatmul.mubr.bf16.gmra.mrb[0].mxu0 %v3697
      %v3797 = vpop.f32.mrb[0].mxu0
      %v3798 = vadd.f32 0.0, %v3797
      %v3799 = vpop.f32.mrb[0].mxu0
      %v3800 = vpop.f32.mrb[0].mxu0
      %v3801 = vadd.f32 0.0, %v3800
      %v3802 = vpop.f32.mrb[0].mxu0
      %3803 = vmatprep.mubr.bf16.mxu0 0
      %3804 = vmatmul.mubr.bf16.gmra.mrb[0].mxu0 %v3700
      %v3805 = vpop.f32.mrb[0].mxu0
      %v3806 = vadd.f32 0.0, %v3805
      %v3807 = vpop.f32.mrb[0].mxu0
      %v3808 = vpop.f32.mrb[0].mxu0
      %v3809 = vadd.f32 0.0, %v3808
      %v3810 = vpop.f32.mrb[0].mxu0
      %3811 = vmatprep.mubr.bf16.mxu0 0
      %3812 = vmatmul.mubr.bf16.gmra.mrb[0].mxu0 %v3703
      %v3813 = vpop.f32.mrb[0].mxu0
      %v3814 = vadd.f32 0.0, %v3813
      %v3815 = vpop.f32.mrb[0].mxu0
      %v3816 = vpop.f32.mrb[0].mxu0
      %v3817 = vadd.f32 0.0, %v3816
      %v3818 = vpop.f32.mrb[0].mxu0
      %3819 = vmatprep.mubr.bf16.mxu0 0
      %3820 = vmatmul.mubr.bf16.gmra.mrb[0].mxu0 %v3706
      %v3821 = vpop.f32.mrb[0].mxu0
      %v3822 = vadd.f32 0.0, %v3821
      %v3823 = vpop.f32.mrb[0].mxu0
      %v3824 = vpop.f32.mrb[0].mxu0
      %v3825 = vadd.f32 0.0, %v3824
      %v3826 = vpop.f32.mrb[0].mxu0
      %3827 = vmatprep.mubr.bf16.mxu0 0
      %3828 = vmatmul.mubr.bf16.gmra.mrb[0].mxu0 %v3709
      %v3829 = vpop.f32.mrb[0].mxu0
      %v3830 = vadd.f32 0.0, %v3829
      %v3831 = vpop.f32.mrb[0].mxu0
      %v3832 = vpop.f32.mrb[0].mxu0
      %v3833 = vadd.f32 0.0, %v3832
      %v3834 = vpop.f32.mrb[0].mxu0
      %3835 = vmatprep.mubr.bf16.mxu0 0
      %3836 = vmatmul.mubr.bf16.gmra.mrb[0].mxu0 %v3712
      %v3837 = vpop.f32.mrb[0].mxu0
      %v3838 = vadd.f32 0.0, %v3837
      %v3839 = vpop.f32.mrb[0].mxu0
      %v3840 = vpop.f32.mrb[0].mxu0
      %v3841 = vadd.f32 0.0, %v3840
      %v3842 = vpop.f32.mrb[0].mxu0
      %3843 = vmatprep.mubr.bf16.mxu0 0
      %3844 = vmatmul.mubr.bf16.gmra.mrb[0].mxu0 %v3715
      %v3845 = vpop.f32.mrb[0].mxu0
      %v3846 = vadd.f32 0.0, %v3845
      %v3847 = vpop.f32.mrb[0].mxu0
      %v3848 = vpop.f32.mrb[0].mxu0
      %v3849 = vadd.f32 0.0, %v3848
      %v3850 = vpop.f32.mrb[0].mxu0
      %3851 = vmatprep.mubr.bf16.mxu0 0
      %3852 = vmatmul.mubr.bf16.gmra.mrb[0].mxu0 %v3718
      %v3853 = vpop.f32.mrb[0].mxu0
      %v3854 = vadd.f32 0.0, %v3853
      %v3855 = vpop.f32.mrb[0].mxu0
      %v3856 = vpop.f32.mrb[0].mxu0
      %v3857 = vadd.f32 0.0, %v3856
      %v3858 = vpop.f32.mrb[0].mxu0
      %3859 = vmatprep.mubr.bf16.mxu0 0
      %3860 = vmatmul.mubr.bf16.gmra.mrb[0].mxu0 %v3721
      %v3861 = vpop.f32.mrb[0].mxu0
      %v3862 = vadd.f32 0.0, %v3861
      %v3863 = vpop.f32.mrb[0].mxu0
      %v3864 = vpop.f32.mrb[0].mxu0
      %v3865 = vadd.f32 0.0, %v3864
      %v3866 = vpop.f32.mrb[0].mxu0
      %3867 = vmatprep.mubr.bf16.mxu0 0
      %3868 = vmatmul.mubr.bf16.gmra.mrb[0].mxu0 %v3724
      %v3869 = vpop.f32.mrb[0].mxu0
      %v3870 = vadd.f32 0.0, %v3869
      %v3871 = vpop.f32.mrb[0].mxu0
      %v3872 = vpop.f32.mrb[0].mxu0
      %v3873 = vadd.f32 0.0, %v3872
      %v3874 = vpop.f32.mrb[0].mxu0
      %3875 = vmatprep.mubr.bf16.mxu0 0
      %3876 = vmatmul.mubr.bf16.gmra.mrb[0].mxu0 %v3727
      %v3877 = vpop.f32.mrb[0].mxu0
      %v3878 = vadd.f32 0.0, %v3877
      %v3879 = vpop.f32.mrb[0].mxu0
      %v3880 = vpop.f32.mrb[0].mxu0
      %v3881 = vadd.f32 0.0, %v3880
      %v3882 = vpop.f32.mrb[0].mxu0
      %3883 = vmatprep.mubr.bf16.mxu0 0
      %3884 = vmatmul.mubr.bf16.gmra.mrb[0].mxu0 %v3730
      %v3885 = vpop.f32.mrb[0].mxu0
      %v3886 = vadd.f32 0.0, %v3885
      %v3887 = vpop.f32.mrb[0].mxu0
      %v3888 = vpop.f32.mrb[0].mxu0
      %v3889 = vadd.f32 0.0, %v3888
      %v3890 = vpop.f32.mrb[0].mxu0
      %3891 = vmatprep.mubr.bf16.mxu0 0
      %3892 = vmatmul.mubr.bf16.gmra.mrb[0].mxu0 %v3733
      %v3893 = vpop.f32.mrb[0].mxu0
      %v3894 = vadd.f32 0.0, %v3893
      %v3895 = vpop.f32.mrb[0].mxu0
      %v3896 = vpop.f32.mrb[0].mxu0
      %v3897 = vadd.f32 0.0, %v3896
      %v3898 = vpop.f32.mrb[0].mxu0
      %3899 = vmatprep.mubr.bf16.mxu0 0
      %3900 = vmatmul.mubr.bf16.gmra.mrb[0].mxu0 %v3736
      %v3901 = vpop.f32.mrb[0].mxu0
      %v3902 = vadd.f32 0.0, %v3901
      %v3903 = vpop.f32.mrb[0].mxu0
      %v3904 = vpop.f32.mrb[0].mxu0
      %v3905 = vadd.f32 0.0, %v3904
      %v3906 = vpop.f32.mrb[0].mxu0
      %3907 = vmatprep.mubr.bf16.mxu0 0
      %3908 = vmatmul.mubr.bf16.gmra.mrb[0].mxu0 %v3739
      %v3909 = vpop.f32.mrb[0].mxu0
      %v3910 = vadd.f32 0.0, %v3909
      %v3911 = vpop.f32.mrb[0].mxu0
      %v3912 = vpop.f32.mrb[0].mxu0
      %v3913 = vadd.f32 0.0, %v3912
      %v3914 = vpop.f32.mrb[0].mxu0
      %3915 = vmatprep.mubr.bf16.mxu0 0
      %3916 = vmatmul.mubr.bf16.gmra.mrb[0].mxu0 %v3742
      %v3917 = vpop.f32.mrb[0].mxu0
      %v3918 = vadd.f32 0.0, %v3917
      %v3919 = vpop.f32.mrb[0].mxu0
      %v3920 = vpop.f32.mrb[0].mxu0
      %v3921 = vadd.f32 0.0, %v3920
      %v3922 = vpop.f32.mrb[0].mxu0
      %3923 = vdwg.mxu0
      %v3924 = vld [vmem:[#allocation2] sm:$0xff]
      %v3925 = vld [vmem:[#allocation2 + $0x8] sm:$0xff]
      %v3926 = vld [vmem:[#allocation2 + $0x10] sm:$0xff]
      %v3927 = vld [vmem:[#allocation2 + $0x18] sm:$0xff]
      %v3928 = vld [vmem:[#allocation2 + $0x20] sm:$0xff]
      %v3929 = vld [vmem:[#allocation2 + $0x28] sm:$0xff]
      %v3930 = vld [vmem:[#allocation2 + $0x30] sm:$0xff]
      %v3931 = vld [vmem:[#allocation2 + $0x38] sm:$0xff]
      %v3932 = vld [vmem:[#allocation2 + $0x40] sm:$0xff]
      %v3933 = vld [vmem:[#allocation2 + $0x48] sm:$0xff]
      %v3934 = vld [vmem:[#allocation2 + $0x50] sm:$0xff]
      %v3935 = vld [vmem:[#allocation2 + $0x58] sm:$0xff]
      %v3936 = vld [vmem:[#allocation2 + $0x60] sm:$0xff]
      %v3937 = vld [vmem:[#allocation2 + $0x68] sm:$0xff]
      %v3938 = vld [vmem:[#allocation2 + $0x70] sm:$0xff]
      %v3939 = vld [vmem:[#allocation2 + $0x78] sm:$0xff]
      %v3940 = vld [vmem:[#allocation2 + $0x80] sm:$0xff]
      %v3941 = vld [vmem:[#allocation2 + $0x88] sm:$0xff]
      %v3942 = vld [vmem:[#allocation2 + $0x90] sm:$0xff]
      %v3943 = vld [vmem:[#allocation2 + $0x98] sm:$0xff]
      %v3944 = vld [vmem:[#allocation2 + $0xa0] sm:$0xff]
      %v3945 = vld [vmem:[#allocation2 + $0xa8] sm:$0xff]
      %v3946 = vld [vmem:[#allocation2 + $0xb0] sm:$0xff]
      %v3947 = vld [vmem:[#allocation2 + $0xb8] sm:$0xff]
      %v3948 = vld [vmem:[#allocation2 + $0xc0] sm:$0xff]
      %v3949 = vld [vmem:[#allocation2 + $0xc8] sm:$0xff]
      %v3950 = vld [vmem:[#allocation2 + $0xd0] sm:$0xff]
      %v3951 = vld [vmem:[#allocation2 + $0xd8] sm:$0xff]
      %v3952 = vld [vmem:[#allocation2 + $0xe0] sm:$0xff]
      %v3953 = vld [vmem:[#allocation2 + $0xe8] sm:$0xff]
      %v3954 = vld [vmem:[#allocation2 + $0xf0] sm:$0xff]
      %v3955 = vld [vmem:[#allocation2 + $0xf8] sm:$0xff]
      %v3956 = vld [vmem:[#allocation2 + $0x100] sm:$0xff]
      %v3957 = vld [vmem:[#allocation2 + $0x108] sm:$0xff]
      %v3958 = vld [vmem:[#allocation2 + $0x110] sm:$0xff]
      %v3959 = vld [vmem:[#allocation2 + $0x118] sm:$0xff]
      %v3960 = vadd.f32 %v3924, %v3782
      %v3961 = vadd.f32 %v3925, %v3785
      %v3962 = vadd.f32 %v3926, %v3790
      %v3963 = vadd.f32 %v3927, %v3793
      %v3964 = vadd.f32 %v3928, %v3798
      %v3965 = vadd.f32 %v3929, %v3801
      %v3966 = vadd.f32 %v3930, %v3806
      %v3967 = vadd.f32 %v3931, %v3809
      %v3968 = vadd.f32 %v3932, %v3814
      %v3969 = vadd.f32 %v3933, %v3817
      %v3970 = vadd.f32 %v3934, %v3822
      %v3971 = vadd.f32 %v3935, %v3825
      %v3972 = vadd.f32 %v3936, %v3830
      %v3973 = vadd.f32 %v3937, %v3833
      %v3974 = vadd.f32 %v3938, %v3838
      %v3975 = vadd.f32 %v3939, %v3841
      %v3976 = vadd.f32 %v3940, %v3846
      %v3977 = vadd.f32 %v3941, %v3849
      %v3978 = vadd.f32 %v3942, %v3854
      %v3979 = vadd.f32 %v3943, %v3857
      %v3980 = vadd.f32 %v3944, %v3862
      %v3981 = vadd.f32 %v3945, %v3865
      %v3982 = vadd.f32 %v3946, %v3870
      %v3983 = vadd.f32 %v3947, %v3873
      %v3984 = vadd.f32 %v3948, %v3878
      %v3985 = vadd.f32 %v3949, %v3881
      %v3986 = vadd.f32 %v3950, %v3886
      %v3987 = vadd.f32 %v3951, %v3889
      %v3988 = vadd.f32 %v3952, %v3894
      %v3989 = vadd.f32 %v3953, %v3897
      %v3990 = vadd.f32 %v3954, %v3902
      %v3991 = vadd.f32 %v3955, %v3905
      %v3992 = vadd.f32 %v3956, %v3910
      %v3993 = vadd.f32 %v3957, %v3913
      %v3994 = vadd.f32 %v3958, %v3918
      %v3995 = vadd.f32 %v3959, %v3921
      %3996 = vst [vmem:[#allocation2] sm:$0xff] %v3960
      %3997 = vst [vmem:[#allocation2 + $0x8] sm:$0xff] %v3961
      %3998 = vst [vmem:[#allocation2 + $0x10] sm:$0xff] %v3962
      %3999 = vst [vmem:[#allocation2 + $0x18] sm:$0xff] %v3963
      %4000 = vst [vmem:[#allocation2 + $0x20] sm:$0xff] %v3964
      %4001 = vst [vmem:[#allocation2 + $0x28] sm:$0xff] %v3965
      %4002 = vst [vmem:[#allocation2 + $0x30] sm:$0xff] %v3966
      %4003 = vst [vmem:[#allocation2 + $0x38] sm:$0xff] %v3967
      %4004 = vst [vmem:[#allocation2 + $0x40] sm:$0xff] %v3968
      %4005 = vst [vmem:[#allocation2 + $0x48] sm:$0xff] %v3969
      %4006 = vst [vmem:[#allocation2 + $0x50] sm:$0xff] %v3970
      %4007 = vst [vmem:[#allocation2 + $0x58] sm:$0xff] %v3971
      %4008 = vst [vmem:[#allocation2 + $0x60] sm:$0xff] %v3972
      %4009 = vst [vmem:[#allocation2 + $0x68] sm:$0xff] %v3973
      %4010 = vst [vmem:[#allocation2 + $0x70] sm:$0xff] %v3974
      %4011 = vst [vmem:[#allocation2 + $0x78] sm:$0xff] %v3975
      %4012 = vst [vmem:[#allocation2 + $0x80] sm:$0xff] %v3976
      %4013 = vst [vmem:[#allocation2 + $0x88] sm:$0xff] %v3977
      %4014 = vst [vmem:[#allocation2 + $0x90] sm:$0xff] %v3978
      %4015 = vst [vmem:[#allocation2 + $0x98] sm:$0xff] %v3979
      %4016 = vst [vmem:[#allocation2 + $0xa0] sm:$0xff] %v3980
      %4017 = vst [vmem:[#allocation2 + $0xa8] sm:$0xff] %v3981
      %4018 = vst [vmem:[#allocation2 + $0xb0] sm:$0xff] %v3982
      %4019 = vst [vmem:[#allocation2 + $0xb8] sm:$0xff] %v3983
      %4020 = vst [vmem:[#allocation2 + $0xc0] sm:$0xff] %v3984
      %4021 = vst [vmem:[#allocation2 + $0xc8] sm:$0xff] %v3985
      %4022 = vst [vmem:[#allocation2 + $0xd0] sm:$0xff] %v3986
      %4023 = vst [vmem:[#allocation2 + $0xd8] sm:$0xff] %v3987
      %4024 = vst [vmem:[#allocation2 + $0xe0] sm:$0xff] %v3988
      %4025 = vst [vmem:[#allocation2 + $0xe8] sm:$0xff] %v3989
      %4026 = vst [vmem:[#allocation2 + $0xf0] sm:$0xff] %v3990
      %4027 = vst [vmem:[#allocation2 + $0xf8] sm:$0xff] %v3991
      %4028 = vst [vmem:[#allocation2 + $0x100] sm:$0xff] %v3992
      %4029 = vst [vmem:[#allocation2 + $0x108] sm:$0xff] %v3993
      %4030 = vst [vmem:[#allocation2 + $0x110] sm:$0xff] %v3994
      %4031 = vst [vmem:[#allocation2 + $0x118] sm:$0xff] %v3995
      %v4032 = vld [vmem:[%s289 + $0x10] sm:$0xc]
      %v4033 = vld [vmem:[%s289 + $0x14] sm:$0xf]
      %v4034 = vld [vmem:[%s289 + $0x18] sm:$0xf]
      %v4035 = vld [vmem:[%s289 + $0x1c] sm:$0xf]
      %v4036 = vld [vmem:[%s289 + $0x20] sm:$0xf]
      %v4037 = vld [vmem:[%s289 + $0x24] sm:$0xf]
      %v4038 = vld [vmem:[%s289 + $0x28] sm:$0xf]
      %v4039 = vld [vmem:[%s289 + $0x2c] sm:$0xf]
      %v4040 = vld [vmem:[%s289 + $0x30] sm:$0xf]
      %v4041 = vld [vmem:[%s289 + $0x34] sm:$0xf]
      %v4042 = vld [vmem:[%s289 + $0x38] sm:$0xf]
      %v4043 = vld [vmem:[%s289 + $0x3c] sm:$0xf]
      %v4044 = vld [vmem:[%s289 + $0x40] sm:$0xf]
      %v4045 = vld [vmem:[%s289 + $0x44] sm:$0xf]
      %v4046 = vld [vmem:[%s289 + $0x48] sm:$0xf]
      %v4047 = vld [vmem:[%s289 + $0x4c] sm:$0xf]
      %v4048 = vld [vmem:[%s289 + $0x50] sm:$0xf]
      %v4049 = vld [vmem:[%s289 + $0x54] sm:$0xf]
      %v4050 = vld [vmem:[%s289 + $0x58] sm:$0xf]
      %v4051 = vld [vmem:[%s289 + $0x5c] sm:$0xf]
      %v4052 = vld [vmem:[%s289 + $0x60] sm:$0xf]
      %v4053 = vld [vmem:[%s289 + $0x64] sm:$0xf]
      %v4054 = vld [vmem:[%s289 + $0x68] sm:$0xf]
      %v4055 = vld [vmem:[%s289 + $0x6c] sm:$0xf]
      %v4056 = vld [vmem:[%s289 + $0x70] sm:$0xf]
      %v4057 = vld [vmem:[%s289 + $0x74] sm:$0xf]
      %v4058 = vld [vmem:[%s289 + $0x78] sm:$0xf]
      %v4059 = vld [vmem:[%s289 + $0x7c] sm:$0xf]
      %v4060 = vld [vmem:[%s289 + $0x80] sm:$0xf]
      %v4061 = vld [vmem:[%s289 + $0x84] sm:$0xf]
      %v4062 = vld [vmem:[%s289 + $0x88] sm:$0xf]
      %v4063 = vld [vmem:[%s289 + $0x8c] sm:$0xf]
      %v4064 = vld [vmem:[%s289 + $0x90] sm:$0xf]
      %v4065 = vld [vmem:[%s289 + $0x94] sm:$0xf]
      %v4066 = vld [vmem:[%s289 + $0x98] sm:$0xf]
      %v4067 = vld [vmem:[%s289 + $0x9c] sm:$0xf]
      %v4068 = vld [vmem:[%s289 + $0xa0] sm:$0x7]
      %s4069 = scalar_lea.vmem %s294, 28
      %v4070 = vld [vmem:[%s4069] sm:$0xf]
      %v4108 = vunpack.c.l.b16 %v4032
      %v4109 = vunpack.c.l.b16 %v4033
      %v4110 = vunpack.c.l.b16 %v4034
      %v4111 = vunpack.c.l.b16 %v4035
      %v4112 = vunpack.c.l.b16 %v4036
      %v4113 = vunpack.c.l.b16 %v4037
      %v4114 = vunpack.c.l.b16 %v4038
      %v4115 = vunpack.c.l.b16 %v4039
      %v4116 = vunpack.c.l.b16 %v4040
      %v4117 = vunpack.c.l.b16 %v4041
      %v4118 = vunpack.c.l.b16 %v4042
      %v4119 = vunpack.c.l.b16 %v4043
      %v4120 = vunpack.c.l.b16 %v4044
      %v4121 = vunpack.c.l.b16 %v4045
      %v4122 = vunpack.c.l.b16 %v4046
      %v4123 = vunpack.c.l.b16 %v4047
      %v4124 = vunpack.c.l.b16 %v4048
      %v4125 = vunpack.c.l.b16 %v4049
      %v4126 = vunpack.c.l.b16 %v4050
      %v4127 = vunpack.c.l.b16 %v4051
      %v4128 = vunpack.c.l.b16 %v4052
      %v4129 = vunpack.c.l.b16 %v4053
      %v4130 = vunpack.c.l.b16 %v4054
      %v4131 = vunpack.c.l.b16 %v4055
      %v4132 = vunpack.c.l.b16 %v4056
      %v4133 = vunpack.c.l.b16 %v4057
      %v4134 = vunpack.c.l.b16 %v4058
      %v4135 = vunpack.c.l.b16 %v4059
      %v4136 = vunpack.c.l.b16 %v4060
      %v4137 = vunpack.c.l.b16 %v4061
      %v4138 = vunpack.c.l.b16 %v4062
      %v4139 = vunpack.c.l.b16 %v4063
      %v4140 = vunpack.c.l.b16 %v4064
      %v4141 = vunpack.c.l.b16 %v4065
      %v4142 = vunpack.c.l.b16 %v4066
      %v4143 = vunpack.c.l.b16 %v4067
      %v4144 = vunpack.c.l.b16 %v4068
      %v4145 = vpack.c.b16 %v4109, %v4108
      %v4146 = vpack.c.b16 %v4111, %v4110
      %v4147 = vpack.c.b16 %v4113, %v4112
      %v4148 = vpack.c.b16 %v4115, %v4114
      %v4149 = vpack.c.b16 %v4117, %v4116
      %v4150 = vpack.c.b16 %v4119, %v4118
      %v4151 = vpack.c.b16 %v4121, %v4120
      %v4152 = vpack.c.b16 %v4123, %v4122
      %v4153 = vpack.c.b16 %v4125, %v4124
      %v4154 = vpack.c.b16 %v4127, %v4126
      %v4155 = vpack.c.b16 %v4129, %v4128
      %v4156 = vpack.c.b16 %v4131, %v4130
      %v4157 = vpack.c.b16 %v4133, %v4132
      %v4158 = vpack.c.b16 %v4135, %v4134
      %v4159 = vpack.c.b16 %v4137, %v4136
      %v4160 = vpack.c.b16 %v4139, %v4138
      %v4161 = vpack.c.b16 %v4141, %v4140
      %v4162 = vpack.c.b16 %v4143, %v4142
      %v4163 = vpack.c.b16 %v4144, %v4144
      %vm4164 = vsmask.f32 5376
      %v4166 = vshrl.u32 %v4145, 16
      %v4168 = vrot.slane %v4166, 2
      %v4169 = vshll.u32 %v4145, 16
      %v4171 = vrot.slane %v4169, 3
      %v4172 = vor.u32 %v4168, %v4171
      %v4174 = vshrl.u32 %v4146, 16
      %v4176 = vrot.slane %v4174, 2
      %v4177 = vshll.u32 %v4146, 16
      %v4179 = vrot.slane %v4177, 3
      %v4180 = vor.u32 %v4176, %v4179
      %v4181 = vsel %vm4164, %v4172, %v4180
      %v4183 = vshrl.u32 %v4147, 16
      %v4185 = vrot.slane %v4183, 2
      %v4186 = vshll.u32 %v4147, 16
      %v4188 = vrot.slane %v4186, 3
      %v4189 = vor.u32 %v4185, %v4188
      %v4190 = vsel %vm4164, %v4180, %v4189
      %v4192 = vshrl.u32 %v4148, 16
      %v4194 = vrot.slane %v4192, 2
      %v4195 = vshll.u32 %v4148, 16
      %v4197 = vrot.slane %v4195, 3
      %v4198 = vor.u32 %v4194, %v4197
      %v4199 = vsel %vm4164, %v4189, %v4198
      %v4201 = vshrl.u32 %v4149, 16
      %v4203 = vrot.slane %v4201, 2
      %v4204 = vshll.u32 %v4149, 16
      %v4206 = vrot.slane %v4204, 3
      %v4207 = vor.u32 %v4203, %v4206
      %v4208 = vsel %vm4164, %v4198, %v4207
      %v4210 = vshrl.u32 %v4150, 16
      %v4212 = vrot.slane %v4210, 2
      %v4213 = vshll.u32 %v4150, 16
      %v4215 = vrot.slane %v4213, 3
      %v4216 = vor.u32 %v4212, %v4215
      %v4217 = vsel %vm4164, %v4207, %v4216
      %v4219 = vshrl.u32 %v4151, 16
      %v4221 = vrot.slane %v4219, 2
      %v4222 = vshll.u32 %v4151, 16
      %v4224 = vrot.slane %v4222, 3
      %v4225 = vor.u32 %v4221, %v4224
      %v4226 = vsel %vm4164, %v4216, %v4225
      %v4228 = vshrl.u32 %v4152, 16
      %v4230 = vrot.slane %v4228, 2
      %v4231 = vshll.u32 %v4152, 16
      %v4233 = vrot.slane %v4231, 3
      %v4234 = vor.u32 %v4230, %v4233
      %v4235 = vsel %vm4164, %v4225, %v4234
      %v4237 = vshrl.u32 %v4153, 16
      %v4239 = vrot.slane %v4237, 2
      %v4240 = vshll.u32 %v4153, 16
      %v4242 = vrot.slane %v4240, 3
      %v4243 = vor.u32 %v4239, %v4242
      %v4244 = vsel %vm4164, %v4234, %v4243
      %v4246 = vshrl.u32 %v4154, 16
      %v4248 = vrot.slane %v4246, 2
      %v4249 = vshll.u32 %v4154, 16
      %v4251 = vrot.slane %v4249, 3
      %v4252 = vor.u32 %v4248, %v4251
      %v4253 = vsel %vm4164, %v4243, %v4252
      %v4255 = vshrl.u32 %v4155, 16
      %v4257 = vrot.slane %v4255, 2
      %v4258 = vshll.u32 %v4155, 16
      %v4260 = vrot.slane %v4258, 3
      %v4261 = vor.u32 %v4257, %v4260
      %v4262 = vsel %vm4164, %v4252, %v4261
      %v4264 = vshrl.u32 %v4156, 16
      %v4266 = vrot.slane %v4264, 2
      %v4267 = vshll.u32 %v4156, 16
      %v4269 = vrot.slane %v4267, 3
      %v4270 = vor.u32 %v4266, %v4269
      %v4271 = vsel %vm4164, %v4261, %v4270
      %v4273 = vshrl.u32 %v4157, 16
      %v4275 = vrot.slane %v4273, 2
      %v4276 = vshll.u32 %v4157, 16
      %v4278 = vrot.slane %v4276, 3
      %v4279 = vor.u32 %v4275, %v4278
      %v4280 = vsel %vm4164, %v4270, %v4279
      %v4282 = vshrl.u32 %v4158, 16
      %v4284 = vrot.slane %v4282, 2
      %v4285 = vshll.u32 %v4158, 16
      %v4287 = vrot.slane %v4285, 3
      %v4288 = vor.u32 %v4284, %v4287
      %v4289 = vsel %vm4164, %v4279, %v4288
      %v4291 = vshrl.u32 %v4159, 16
      %v4293 = vrot.slane %v4291, 2
      %v4294 = vshll.u32 %v4159, 16
      %v4296 = vrot.slane %v4294, 3
      %v4297 = vor.u32 %v4293, %v4296
      %v4298 = vsel %vm4164, %v4288, %v4297
      %v4300 = vshrl.u32 %v4160, 16
      %v4302 = vrot.slane %v4300, 2
      %v4303 = vshll.u32 %v4160, 16
      %v4305 = vrot.slane %v4303, 3
      %v4306 = vor.u32 %v4302, %v4305
      %v4307 = vsel %vm4164, %v4297, %v4306
      %v4309 = vshrl.u32 %v4161, 16
      %v4311 = vrot.slane %v4309, 2
      %v4312 = vshll.u32 %v4161, 16
      %v4314 = vrot.slane %v4312, 3
      %v4315 = vor.u32 %v4311, %v4314
      %v4316 = vsel %vm4164, %v4306, %v4315
      %v4318 = vshrl.u32 %v4162, 16
      %v4320 = vrot.slane %v4318, 2
      %v4321 = vshll.u32 %v4162, 16
      %v4323 = vrot.slane %v4321, 3
      %v4324 = vor.u32 %v4320, %v4323
      %v4325 = vsel %vm4164, %v4315, %v4324
      %v4327 = vshrl.u32 %v4163, 16
      %v4329 = vrot.slane %v4327, 2
      %v4330 = vshll.u32 %v4163, 16
      %v4332 = vrot.slane %v4330, 3
      %v4333 = vor.u32 %v4329, %v4332
      %v4334 = vsel %vm4164, %v4324, %v4333
      %v4336 = vsel %vm446, %v4181, 0
      %v4339 = vsel %vm446, %v4190, 0
      %v4342 = vsel %vm446, %v4199, 0
      %v4345 = vsel %vm446, %v4208, 0
      %v4348 = vsel %vm446, %v4217, 0
      %v4351 = vsel %vm446, %v4226, 0
      %v4354 = vsel %vm446, %v4235, 0
      %v4357 = vsel %vm446, %v4244, 0
      %v4360 = vsel %vm446, %v4253, 0
      %v4363 = vsel %vm446, %v4262, 0
      %v4366 = vsel %vm446, %v4271, 0
      %v4369 = vsel %vm446, %v4280, 0
      %v4372 = vsel %vm446, %v4289, 0
      %v4375 = vsel %vm446, %v4298, 0
      %v4378 = vsel %vm446, %v4307, 0
      %v4381 = vsel %vm446, %v4316, 0
      %v4384 = vsel %vm446, %v4325, 0
      %v4387 = vsel %vm446, %v4334, 0
      %v4390 = vsel %vm501, %v4070, 0
      %4392 = vmatprep.subr.bf16.mxu0 0
      %4393 = vmatpush1.bf16.msra.mxu0 %v4390
      %4394 = vmatprep.subr.bf16.mxu0 0
      %4395 = vmatpush1.bf16.msra.mxu0 0
      %4396 = vmatprep.subr.bf16.mxu0 0
      %4397 = vmatpush1.bf16.msra.mxu0 0
      %4398 = vmatprep.subr.bf16.mxu0 0
      %4399 = vmatpush1.bf16.msra.mxu0 0
      %4400 = vmatprep.subr.bf16.mxu0 0
      %4401 = vmatpush1.bf16.msra.mxu0 0
      %4402 = vmatprep.subr.bf16.mxu0 0
      %4403 = vmatpush1.bf16.msra.mxu0 0
      %4404 = vmatprep.subr.bf16.mxu0 0
      %4405 = vmatpush1.bf16.msra.mxu0 0
      %4406 = vmatprep.subr.bf16.mxu0 0
      %4407 = vmatpush1.bf16.msra.mxu0 0
      %4408 = vmatprep.subr.bf16.mxu0 0
      %4409 = vmatpush1.bf16.msra.mxu0 0
      %4410 = vmatprep.subr.bf16.mxu0 0
      %4411 = vmatpush1.bf16.msra.mxu0 0
      %4412 = vmatprep.subr.bf16.mxu0 0
      %4413 = vmatpush1.bf16.msra.mxu0 0
      %4414 = vmatprep.subr.bf16.mxu0 0
      %4415 = vmatpush1.bf16.msra.mxu0 0
      %4416 = vmatprep.subr.bf16.mxu0 0
      %4417 = vmatpush1.bf16.msra.mxu0 0
      %4418 = vmatprep.subr.bf16.mxu0 0
      %4419 = vmatpush1.bf16.msra.mxu0 0
      %4420 = vmatprep.subr.bf16.mxu0 0
      %4421 = vmatpush1.bf16.msra.mxu0 0
      %4422 = vmatprep.subr.bf16.mxu0 0
      %4423 = vmatpush1.bf16.msra.mxu0 0
      %4424 = vmatprep.mubr.bf16.mxu0 0
      %4425 = vmatmul.mubr.bf16.gmra.mrb[0].mxu0 %v4336
      %v4426 = vpop.f32.mrb[0].mxu0
      %v4427 = vadd.f32 0.0, %v4426
      %v4428 = vpop.f32.mrb[0].mxu0
      %v4429 = vpop.f32.mrb[0].mxu0
      %v4430 = vadd.f32 0.0, %v4429
      %v4431 = vpop.f32.mrb[0].mxu0
      %4432 = vmatprep.mubr.bf16.mxu0 0
      %4433 = vmatmul.mubr.bf16.gmra.mrb[0].mxu0 %v4339
      %v4434 = vpop.f32.mrb[0].mxu0
      %v4435 = vadd.f32 0.0, %v4434
      %v4436 = vpop.f32.mrb[0].mxu0
      %v4437 = vpop.f32.mrb[0].mxu0
      %v4438 = vadd.f32 0.0, %v4437
      %v4439 = vpop.f32.mrb[0].mxu0
      %4440 = vmatprep.mubr.bf16.mxu0 0
      %4441 = vmatmul.mubr.bf16.gmra.mrb[0].mxu0 %v4342
      %v4442 = vpop.f32.mrb[0].mxu0
      %v4443 = vadd.f32 0.0, %v4442
      %v4444 = vpop.f32.mrb[0].mxu0
      %v4445 = vpop.f32.mrb[0].mxu0
      %v4446 = vadd.f32 0.0, %v4445
      %v4447 = vpop.f32.mrb[0].mxu0
      %4448 = vmatprep.mubr.bf16.mxu0 0
      %4449 = vmatmul.mubr.bf16.gmra.mrb[0].mxu0 %v4345
      %v4450 = vpop.f32.mrb[0].mxu0
      %v4451 = vadd.f32 0.0, %v4450
      %v4452 = vpop.f32.mrb[0].mxu0
      %v4453 = vpop.f32.mrb[0].mxu0
      %v4454 = vadd.f32 0.0, %v4453
      %v4455 = vpop.f32.mrb[0].mxu0
      %4456 = vmatprep.mubr.bf16.mxu0 0
      %4457 = vmatmul.mubr.bf16.gmra.mrb[0].mxu0 %v4348
      %v4458 = vpop.f32.mrb[0].mxu0
      %v4459 = vadd.f32 0.0, %v4458
      %v4460 = vpop.f32.mrb[0].mxu0
      %v4461 = vpop.f32.mrb[0].mxu0
      %v4462 = vadd.f32 0.0, %v4461
      %v4463 = vpop.f32.mrb[0].mxu0
      %4464 = vmatprep.mubr.bf16.mxu0 0
      %4465 = vmatmul.mubr.bf16.gmra.mrb[0].mxu0 %v4351
      %v4466 = vpop.f32.mrb[0].mxu0
      %v4467 = vadd.f32 0.0, %v4466
      %v4468 = vpop.f32.mrb[0].mxu0
      %v4469 = vpop.f32.mrb[0].mxu0
      %v4470 = vadd.f32 0.0, %v4469
      %v4471 = vpop.f32.mrb[0].mxu0
      %4472 = vmatprep.mubr.bf16.mxu0 0
      %4473 = vmatmul.mubr.bf16.gmra.mrb[0].mxu0 %v4354
      %v4474 = vpop.f32.mrb[0].mxu0
      %v4475 = vadd.f32 0.0, %v4474
      %v4476 = vpop.f32.mrb[0].mxu0
      %v4477 = vpop.f32.mrb[0].mxu0
      %v4478 = vadd.f32 0.0, %v4477
      %v4479 = vpop.f32.mrb[0].mxu0
      %4480 = vmatprep.mubr.bf16.mxu0 0
      %4481 = vmatmul.mubr.bf16.gmra.mrb[0].mxu0 %v4357
      %v4482 = vpop.f32.mrb[0].mxu0
      %v4483 = vadd.f32 0.0, %v4482
      %v4484 = vpop.f32.mrb[0].mxu0
      %v4485 = vpop.f32.mrb[0].mxu0
      %v4486 = vadd.f32 0.0, %v4485
      %v4487 = vpop.f32.mrb[0].mxu0
      %4488 = vmatprep.mubr.bf16.mxu0 0
      %4489 = vmatmul.mubr.bf16.gmra.mrb[0].mxu0 %v4360
      %v4490 = vpop.f32.mrb[0].mxu0
      %v4491 = vadd.f32 0.0, %v4490
      %v4492 = vpop.f32.mrb[0].mxu0
      %v4493 = vpop.f32.mrb[0].mxu0
      %v4494 = vadd.f32 0.0, %v4493
      %v4495 = vpop.f32.mrb[0].mxu0
      %4496 = vmatprep.mubr.bf16.mxu0 0
      %4497 = vmatmul.mubr.bf16.gmra.mrb[0].mxu0 %v4363
      %v4498 = vpop.f32.mrb[0].mxu0
      %v4499 = vadd.f32 0.0, %v4498
      %v4500 = vpop.f32.mrb[0].mxu0
      %v4501 = vpop.f32.mrb[0].mxu0
      %v4502 = vadd.f32 0.0, %v4501
      %v4503 = vpop.f32.mrb[0].mxu0
      %4504 = vmatprep.mubr.bf16.mxu0 0
      %4505 = vmatmul.mubr.bf16.gmra.mrb[0].mxu0 %v4366
      %v4506 = vpop.f32.mrb[0].mxu0
      %v4507 = vadd.f32 0.0, %v4506
      %v4508 = vpop.f32.mrb[0].mxu0
      %v4509 = vpop.f32.mrb[0].mxu0
      %v4510 = vadd.f32 0.0, %v4509
      %v4511 = vpop.f32.mrb[0].mxu0
      %4512 = vmatprep.mubr.bf16.mxu0 0
      %4513 = vmatmul.mubr.bf16.gmra.mrb[0].mxu0 %v4369
      %v4514 = vpop.f32.mrb[0].mxu0
      %v4515 = vadd.f32 0.0, %v4514
      %v4516 = vpop.f32.mrb[0].mxu0
      %v4517 = vpop.f32.mrb[0].mxu0
      %v4518 = vadd.f32 0.0, %v4517
      %v4519 = vpop.f32.mrb[0].mxu0
      %4520 = vmatprep.mubr.bf16.mxu0 0
      %4521 = vmatmul.mubr.bf16.gmra.mrb[0].mxu0 %v4372
      %v4522 = vpop.f32.mrb[0].mxu0
      %v4523 = vadd.f32 0.0, %v4522
      %v4524 = vpop.f32.mrb[0].mxu0
      %v4525 = vpop.f32.mrb[0].mxu0
      %v4526 = vadd.f32 0.0, %v4525
      %v4527 = vpop.f32.mrb[0].mxu0
      %4528 = vmatprep.mubr.bf16.mxu0 0
      %4529 = vmatmul.mubr.bf16.gmra.mrb[0].mxu0 %v4375
      %v4530 = vpop.f32.mrb[0].mxu0
      %v4531 = vadd.f32 0.0, %v4530
      %v4532 = vpop.f32.mrb[0].mxu0
      %v4533 = vpop.f32.mrb[0].mxu0
      %v4534 = vadd.f32 0.0, %v4533
      %v4535 = vpop.f32.mrb[0].mxu0
      %4536 = vmatprep.mubr.bf16.mxu0 0
      %4537 = vmatmul.mubr.bf16.gmra.mrb[0].mxu0 %v4378
      %v4538 = vpop.f32.mrb[0].mxu0
      %v4539 = vadd.f32 0.0, %v4538
      %v4540 = vpop.f32.mrb[0].mxu0
      %v4541 = vpop.f32.mrb[0].mxu0
      %v4542 = vadd.f32 0.0, %v4541
      %v4543 = vpop.f32.mrb[0].mxu0
      %4544 = vmatprep.mubr.bf16.mxu0 0
      %4545 = vmatmul.mubr.bf16.gmra.mrb[0].mxu0 %v4381
      %v4546 = vpop.f32.mrb[0].mxu0
      %v4547 = vadd.f32 0.0, %v4546
      %v4548 = vpop.f32.mrb[0].mxu0
      %v4549 = vpop.f32.mrb[0].mxu0
      %v4550 = vadd.f32 0.0, %v4549
      %v4551 = vpop.f32.mrb[0].mxu0
      %4552 = vmatprep.mubr.bf16.mxu0 0
      %4553 = vmatmul.mubr.bf16.gmra.mrb[0].mxu0 %v4384
      %v4554 = vpop.f32.mrb[0].mxu0
      %v4555 = vadd.f32 0.0, %v4554
      %v4556 = vpop.f32.mrb[0].mxu0
      %v4557 = vpop.f32.mrb[0].mxu0
      %v4558 = vadd.f32 0.0, %v4557
      %v4559 = vpop.f32.mrb[0].mxu0
      %4560 = vmatprep.mubr.bf16.mxu0 0
      %4561 = vmatmul.mubr.bf16.gmra.mrb[0].mxu0 %v4387
      %v4562 = vpop.f32.mrb[0].mxu0
      %v4563 = vadd.f32 0.0, %v4562
      %v4564 = vpop.f32.mrb[0].mxu0
      %v4565 = vpop.f32.mrb[0].mxu0
      %v4566 = vadd.f32 0.0, %v4565
      %v4567 = vpop.f32.mrb[0].mxu0
      %4568 = vdwg.mxu0
      %v4569 = vld [vmem:[#allocation2] sm:$0xff]
      %v4570 = vld [vmem:[#allocation2 + $0x8] sm:$0xff]
      %v4571 = vld [vmem:[#allocation2 + $0x10] sm:$0xff]
      %v4572 = vld [vmem:[#allocation2 + $0x18] sm:$0xff]
      %v4573 = vld [vmem:[#allocation2 + $0x20] sm:$0xff]
      %v4574 = vld [vmem:[#allocation2 + $0x28] sm:$0xff]
      %v4575 = vld [vmem:[#allocation2 + $0x30] sm:$0xff]
      %v4576 = vld [vmem:[#allocation2 + $0x38] sm:$0xff]
      %v4577 = vld [vmem:[#allocation2 + $0x40] sm:$0xff]
      %v4578 = vld [vmem:[#allocation2 + $0x48] sm:$0xff]
      %v4579 = vld [vmem:[#allocation2 + $0x50] sm:$0xff]
      %v4580 = vld [vmem:[#allocation2 + $0x58] sm:$0xff]
      %v4581 = vld [vmem:[#allocation2 + $0x60] sm:$0xff]
      %v4582 = vld [vmem:[#allocation2 + $0x68] sm:$0xff]
      %v4583 = vld [vmem:[#allocation2 + $0x70] sm:$0xff]
      %v4584 = vld [vmem:[#allocation2 + $0x78] sm:$0xff]
      %v4585 = vld [vmem:[#allocation2 + $0x80] sm:$0xff]
      %v4586 = vld [vmem:[#allocation2 + $0x88] sm:$0xff]
      %v4587 = vld [vmem:[#allocation2 + $0x90] sm:$0xff]
      %v4588 = vld [vmem:[#allocation2 + $0x98] sm:$0xff]
      %v4589 = vld [vmem:[#allocation2 + $0xa0] sm:$0xff]
      %v4590 = vld [vmem:[#allocation2 + $0xa8] sm:$0xff]
      %v4591 = vld [vmem:[#allocation2 + $0xb0] sm:$0xff]
      %v4592 = vld [vmem:[#allocation2 + $0xb8] sm:$0xff]
      %v4593 = vld [vmem:[#allocation2 + $0xc0] sm:$0xff]
      %v4594 = vld [vmem:[#allocation2 + $0xc8] sm:$0xff]
      %v4595 = vld [vmem:[#allocation2 + $0xd0] sm:$0xff]
      %v4596 = vld [vmem:[#allocation2 + $0xd8] sm:$0xff]
      %v4597 = vld [vmem:[#allocation2 + $0xe0] sm:$0xff]
      %v4598 = vld [vmem:[#allocation2 + $0xe8] sm:$0xff]
      %v4599 = vld [vmem:[#allocation2 + $0xf0] sm:$0xff]
      %v4600 = vld [vmem:[#allocation2 + $0xf8] sm:$0xff]
      %v4601 = vld [vmem:[#allocation2 + $0x100] sm:$0xff]
      %v4602 = vld [vmem:[#allocation2 + $0x108] sm:$0xff]
      %v4603 = vld [vmem:[#allocation2 + $0x110] sm:$0xff]
      %v4604 = vld [vmem:[#allocation2 + $0x118] sm:$0xff]
      %v4605 = vadd.f32 %v4569, %v4427
      %v4606 = vadd.f32 %v4570, %v4430
      %v4607 = vadd.f32 %v4571, %v4435
      %v4608 = vadd.f32 %v4572, %v4438
      %v4609 = vadd.f32 %v4573, %v4443
      %v4610 = vadd.f32 %v4574, %v4446
      %v4611 = vadd.f32 %v4575, %v4451
      %v4612 = vadd.f32 %v4576, %v4454
      %v4613 = vadd.f32 %v4577, %v4459
      %v4614 = vadd.f32 %v4578, %v4462
      %v4615 = vadd.f32 %v4579, %v4467
      %v4616 = vadd.f32 %v4580, %v4470
      %v4617 = vadd.f32 %v4581, %v4475
      %v4618 = vadd.f32 %v4582, %v4478
      %v4619 = vadd.f32 %v4583, %v4483
      %v4620 = vadd.f32 %v4584, %v4486
      %v4621 = vadd.f32 %v4585, %v4491
      %v4622 = vadd.f32 %v4586, %v4494
      %v4623 = vadd.f32 %v4587, %v4499
      %v4624 = vadd.f32 %v4588, %v4502
      %v4625 = vadd.f32 %v4589, %v4507
      %v4626 = vadd.f32 %v4590, %v4510
      %v4627 = vadd.f32 %v4591, %v4515
      %v4628 = vadd.f32 %v4592, %v4518
      %v4629 = vadd.f32 %v4593, %v4523
      %v4630 = vadd.f32 %v4594, %v4526
      %v4631 = vadd.f32 %v4595, %v4531
      %v4632 = vadd.f32 %v4596, %v4534
      %v4633 = vadd.f32 %v4597, %v4539
      %v4634 = vadd.f32 %v4598, %v4542
      %v4635 = vadd.f32 %v4599, %v4547
      %v4636 = vadd.f32 %v4600, %v4550
      %v4637 = vadd.f32 %v4601, %v4555
      %v4638 = vadd.f32 %v4602, %v4558
      %v4639 = vadd.f32 %v4603, %v4563
      %v4640 = vadd.f32 %v4604, %v4566
      %4641 = vst [vmem:[#allocation2] sm:$0xff] %v4605
      %4642 = vst [vmem:[#allocation2 + $0x8] sm:$0xff] %v4606
      %4643 = vst [vmem:[#allocation2 + $0x10] sm:$0xff] %v4607
      %4644 = vst [vmem:[#allocation2 + $0x18] sm:$0xff] %v4608
      %4645 = vst [vmem:[#allocation2 + $0x20] sm:$0xff] %v4609
      %4646 = vst [vmem:[#allocation2 + $0x28] sm:$0xff] %v4610
      %4647 = vst [vmem:[#allocation2 + $0x30] sm:$0xff] %v4611
      %4648 = vst [vmem:[#allocation2 + $0x38] sm:$0xff] %v4612
      %4649 = vst [vmem:[#allocation2 + $0x40] sm:$0xff] %v4613
      %4650 = vst [vmem:[#allocation2 + $0x48] sm:$0xff] %v4614
      %4651 = vst [vmem:[#allocation2 + $0x50] sm:$0xff] %v4615
      %4652 = vst [vmem:[#allocation2 + $0x58] sm:$0xff] %v4616
      %4653 = vst [vmem:[#allocation2 + $0x60] sm:$0xff] %v4617
      %4654 = vst [vmem:[#allocation2 + $0x68] sm:$0xff] %v4618
      %4655 = vst [vmem:[#allocation2 + $0x70] sm:$0xff] %v4619
      %4656 = vst [vmem:[#allocation2 + $0x78] sm:$0xff] %v4620
      %4657 = vst [vmem:[#allocation2 + $0x80] sm:$0xff] %v4621
      %4658 = vst [vmem:[#allocation2 + $0x88] sm:$0xff] %v4622
      %4659 = vst [vmem:[#allocation2 + $0x90] sm:$0xff] %v4623
      %4660 = vst [vmem:[#allocation2 + $0x98] sm:$0xff] %v4624
      %4661 = vst [vmem:[#allocation2 + $0xa0] sm:$0xff] %v4625
      %4662 = vst [vmem:[#allocation2 + $0xa8] sm:$0xff] %v4626
      %4663 = vst [vmem:[#allocation2 + $0xb0] sm:$0xff] %v4627
      %4664 = vst [vmem:[#allocation2 + $0xb8] sm:$0xff] %v4628
      %4665 = vst [vmem:[#allocation2 + $0xc0] sm:$0xff] %v4629
      %4666 = vst [vmem:[#allocation2 + $0xc8] sm:$0xff] %v4630
      %4667 = vst [vmem:[#allocation2 + $0xd0] sm:$0xff] %v4631
      %4668 = vst [vmem:[#allocation2 + $0xd8] sm:$0xff] %v4632
      %4669 = vst [vmem:[#allocation2 + $0xe0] sm:$0xff] %v4633
      %4670 = vst [vmem:[#allocation2 + $0xe8] sm:$0xff] %v4634
      %4671 = vst [vmem:[#allocation2 + $0xf0] sm:$0xff] %v4635
      %4672 = vst [vmem:[#allocation2 + $0xf8] sm:$0xff] %v4636
      %4673 = vst [vmem:[#allocation2 + $0x100] sm:$0xff] %v4637
      %4674 = vst [vmem:[#allocation2 + $0x108] sm:$0xff] %v4638
      %4675 = vst [vmem:[#allocation2 + $0x110] sm:$0xff] %v4639
      %4676 = vst [vmem:[#allocation2 + $0x118] sm:$0xff] %v4640
      %v4677 = vld [vmem:[%s289 + $0x10] sm:$0x8]
      %v4678 = vld [vmem:[%s289 + $0x14] sm:$0xf]
      %v4679 = vld [vmem:[%s289 + $0x18] sm:$0xf]
      %v4680 = vld [vmem:[%s289 + $0x1c] sm:$0xf]
      %v4681 = vld [vmem:[%s289 + $0x20] sm:$0xf]
      %v4682 = vld [vmem:[%s289 + $0x24] sm:$0xf]
      %v4683 = vld [vmem:[%s289 + $0x28] sm:$0xf]
      %v4684 = vld [vmem:[%s289 + $0x2c] sm:$0xf]
      %v4685 = vld [vmem:[%s289 + $0x30] sm:$0xf]
      %v4686 = vld [vmem:[%s289 + $0x34] sm:$0xf]
      %v4687 = vld [vmem:[%s289 + $0x38] sm:$0xf]
      %v4688 = vld [vmem:[%s289 + $0x3c] sm:$0xf]
      %v4689 = vld [vmem:[%s289 + $0x40] sm:$0xf]
      %v4690 = vld [vmem:[%s289 + $0x44] sm:$0xf]
      %v4691 = vld [vmem:[%s289 + $0x48] sm:$0xf]
      %v4692 = vld [vmem:[%s289 + $0x4c] sm:$0xf]
      %v4693 = vld [vmem:[%s289 + $0x50] sm:$0xf]
      %v4694 = vld [vmem:[%s289 + $0x54] sm:$0xf]
      %v4695 = vld [vmem:[%s289 + $0x58] sm:$0xf]
      %v4696 = vld [vmem:[%s289 + $0x5c] sm:$0xf]
      %v4697 = vld [vmem:[%s289 + $0x60] sm:$0xf]
      %v4698 = vld [vmem:[%s289 + $0x64] sm:$0xf]
      %v4699 = vld [vmem:[%s289 + $0x68] sm:$0xf]
      %v4700 = vld [vmem:[%s289 + $0x6c] sm:$0xf]
      %v4701 = vld [vmem:[%s289 + $0x70] sm:$0xf]
      %v4702 = vld [vmem:[%s289 + $0x74] sm:$0xf]
      %v4703 = vld [vmem:[%s289 + $0x78] sm:$0xf]
      %v4704 = vld [vmem:[%s289 + $0x7c] sm:$0xf]
      %v4705 = vld [vmem:[%s289 + $0x80] sm:$0xf]
      %v4706 = vld [vmem:[%s289 + $0x84] sm:$0xf]
      %v4707 = vld [vmem:[%s289 + $0x88] sm:$0xf]
      %v4708 = vld [vmem:[%s289 + $0x8c] sm:$0xf]
      %v4709 = vld [vmem:[%s289 + $0x90] sm:$0xf]
      %v4710 = vld [vmem:[%s289 + $0x94] sm:$0xf]
      %v4711 = vld [vmem:[%s289 + $0x98] sm:$0xf]
      %v4712 = vld [vmem:[%s289 + $0x9c] sm:$0xf]
      %v4713 = vld [vmem:[%s289 + $0xa0] sm:$0x7]
      %s4714 = scalar_lea.vmem %s294, 32
      %v4715 = vld [vmem:[%s4714] sm:$0xf]
      %v4753 = vunpack.c.l.b16 %v4677
      %v4754 = vunpack.c.l.b16 %v4678
      %v4755 = vunpack.c.l.b16 %v4679
      %v4756 = vunpack.c.l.b16 %v4680
      %v4757 = vunpack.c.l.b16 %v4681
      %v4758 = vunpack.c.l.b16 %v4682
      %v4759 = vunpack.c.l.b16 %v4683
      %v4760 = vunpack.c.l.b16 %v4684
      %v4761 = vunpack.c.l.b16 %v4685
      %v4762 = vunpack.c.l.b16 %v4686
      %v4763 = vunpack.c.l.b16 %v4687
      %v4764 = vunpack.c.l.b16 %v4688
      %v4765 = vunpack.c.l.b16 %v4689
      %v4766 = vunpack.c.l.b16 %v4690
      %v4767 = vunpack.c.l.b16 %v4691
      %v4768 = vunpack.c.l.b16 %v4692
      %v4769 = vunpack.c.l.b16 %v4693
      %v4770 = vunpack.c.l.b16 %v4694
      %v4771 = vunpack.c.l.b16 %v4695
      %v4772 = vunpack.c.l.b16 %v4696
      %v4773 = vunpack.c.l.b16 %v4697
      %v4774 = vunpack.c.l.b16 %v4698
      %v4775 = vunpack.c.l.b16 %v4699
      %v4776 = vunpack.c.l.b16 %v4700
      %v4777 = vunpack.c.l.b16 %v4701
      %v4778 = vunpack.c.l.b16 %v4702
      %v4779 = vunpack.c.l.b16 %v4703
      %v4780 = vunpack.c.l.b16 %v4704
      %v4781 = vunpack.c.l.b16 %v4705
      %v4782 = vunpack.c.l.b16 %v4706
      %v4783 = vunpack.c.l.b16 %v4707
      %v4784 = vunpack.c.l.b16 %v4708
      %v4785 = vunpack.c.l.b16 %v4709
      %v4786 = vunpack.c.l.b16 %v4710
      %v4787 = vunpack.c.l.b16 %v4711
      %v4788 = vunpack.c.l.b16 %v4712
      %v4789 = vunpack.c.l.b16 %v4713
      %v4790 = vpack.c.b16 %v4754, %v4753
      %v4791 = vpack.c.b16 %v4756, %v4755
      %v4792 = vpack.c.b16 %v4758, %v4757
      %v4793 = vpack.c.b16 %v4760, %v4759
      %v4794 = vpack.c.b16 %v4762, %v4761
      %v4795 = vpack.c.b16 %v4764, %v4763
      %v4796 = vpack.c.b16 %v4766, %v4765
      %v4797 = vpack.c.b16 %v4768, %v4767
      %v4798 = vpack.c.b16 %v4770, %v4769
      %v4799 = vpack.c.b16 %v4772, %v4771
      %v4800 = vpack.c.b16 %v4774, %v4773
      %v4801 = vpack.c.b16 %v4776, %v4775
      %v4802 = vpack.c.b16 %v4778, %v4777
      %v4803 = vpack.c.b16 %v4780, %v4779
      %v4804 = vpack.c.b16 %v4782, %v4781
      %v4805 = vpack.c.b16 %v4784, %v4783
      %v4806 = vpack.c.b16 %v4786, %v4785
      %v4807 = vpack.c.b16 %v4788, %v4787
      %v4808 = vpack.c.b16 %v4789, %v4789
      %vm4809 = vcmask 1044480
      %v4810 = vrot.slane %v4790, 3
      %v4811 = vrot.slane %v4791, 3
      %v4812 = vsel %vm4809, %v4810, %v4811
      %v4813 = vrot.slane %v4792, 3
      %v4814 = vsel %vm4809, %v4811, %v4813
      %v4815 = vrot.slane %v4793, 3
      %v4816 = vsel %vm4809, %v4813, %v4815
      %v4817 = vrot.slane %v4794, 3
      %v4818 = vsel %vm4809, %v4815, %v4817
      %v4819 = vrot.slane %v4795, 3
      %v4820 = vsel %vm4809, %v4817, %v4819
      %v4821 = vrot.slane %v4796, 3
      %v4822 = vsel %vm4809, %v4819, %v4821
      %v4823 = vrot.slane %v4797, 3
      %v4824 = vsel %vm4809, %v4821, %v4823
      %v4825 = vrot.slane %v4798, 3
      %v4826 = vsel %vm4809, %v4823, %v4825
      %v4827 = vrot.slane %v4799, 3
      %v4828 = vsel %vm4809, %v4825, %v4827
      %v4829 = vrot.slane %v4800, 3
      %v4830 = vsel %vm4809, %v4827, %v4829
      %v4831 = vrot.slane %v4801, 3
      %v4832 = vsel %vm4809, %v4829, %v4831
      %v4833 = vrot.slane %v4802, 3
      %v4834 = vsel %vm4809, %v4831, %v4833
      %v4835 = vrot.slane %v4803, 3
      %v4836 = vsel %vm4809, %v4833, %v4835
      %v4837 = vrot.slane %v4804, 3
      %v4838 = vsel %vm4809, %v4835, %v4837
      %v4839 = vrot.slane %v4805, 3
      %v4840 = vsel %vm4809, %v4837, %v4839
      %v4841 = vrot.slane %v4806, 3
      %v4842 = vsel %vm4809, %v4839, %v4841
      %v4843 = vrot.slane %v4807, 3
      %v4844 = vsel %vm4809, %v4841, %v4843
      %v4845 = vrot.slane %v4808, 3
      %v4846 = vsel %vm4809, %v4843, %v4845
      %v4848 = vsel %vm446, %v4812, 0
      %v4851 = vsel %vm446, %v4814, 0
      %v4854 = vsel %vm446, %v4816, 0
      %v4857 = vsel %vm446, %v4818, 0
      %v4860 = vsel %vm446, %v4820, 0
      %v4863 = vsel %vm446, %v4822, 0
      %v4866 = vsel %vm446, %v4824, 0
      %v4869 = vsel %vm446, %v4826, 0
      %v4872 = vsel %vm446, %v4828, 0
      %v4875 = vsel %vm446, %v4830, 0
      %v4878 = vsel %vm446, %v4832, 0
      %v4881 = vsel %vm446, %v4834, 0
      %v4884 = vsel %vm446, %v4836, 0
      %v4887 = vsel %vm446, %v4838, 0
      %v4890 = vsel %vm446, %v4840, 0
      %v4893 = vsel %vm446, %v4842, 0
      %v4896 = vsel %vm446, %v4844, 0
      %v4899 = vsel %vm446, %v4846, 0
      %v4902 = vsel %vm501, %v4715, 0
      %4904 = vmatprep.subr.bf16.mxu0 0
      %4905 = vmatpush1.bf16.msra.mxu0 %v4902
      %4906 = vmatprep.subr.bf16.mxu0 0
      %4907 = vmatpush1.bf16.msra.mxu0 0
      %4908 = vmatprep.subr.bf16.mxu0 0
      %4909 = vmatpush1.bf16.msra.mxu0 0
      %4910 = vmatprep.subr.bf16.mxu0 0
      %4911 = vmatpush1.bf16.msra.mxu0 0
      %4912 = vmatprep.subr.bf16.mxu0 0
      %4913 = vmatpush1.bf16.msra.mxu0 0
      %4914 = vmatprep.subr.bf16.mxu0 0
      %4915 = vmatpush1.bf16.msra.mxu0 0
      %4916 = vmatprep.subr.bf16.mxu0 0
      %4917 = vmatpush1.bf16.msra.mxu0 0
      %4918 = vmatprep.subr.bf16.mxu0 0
      %4919 = vmatpush1.bf16.msra.mxu0 0
      %4920 = vmatprep.subr.bf16.mxu0 0
      %4921 = vmatpush1.bf16.msra.mxu0 0
      %4922 = vmatprep.subr.bf16.mxu0 0
      %4923 = vmatpush1.bf16.msra.mxu0 0
      %4924 = vmatprep.subr.bf16.mxu0 0
      %4925 = vmatpush1.bf16.msra.mxu0 0
      %4926 = vmatprep.subr.bf16.mxu0 0
      %4927 = vmatpush1.bf16.msra.mxu0 0
      %4928 = vmatprep.subr.bf16.mxu0 0
      %4929 = vmatpush1.bf16.msra.mxu0 0
      %4930 = vmatprep.subr.bf16.mxu0 0
      %4931 = vmatpush1.bf16.msra.mxu0 0
      %4932 = vmatprep.subr.bf16.mxu0 0
      %4933 = vmatpush1.bf16.msra.mxu0 0
      %4934 = vmatprep.subr.bf16.mxu0 0
      %4935 = vmatpush1.bf16.msra.mxu0 0
      %4936 = vmatprep.mubr.bf16.mxu0 0
      %4937 = vmatmul.mubr.bf16.gmra.mrb[0].mxu0 %v4848
      %v4938 = vpop.f32.mrb[0].mxu0
      %v4939 = vadd.f32 0.0, %v4938
      %v4940 = vpop.f32.mrb[0].mxu0
      %v4941 = vpop.f32.mrb[0].mxu0
      %v4942 = vadd.f32 0.0, %v4941
      %v4943 = vpop.f32.mrb[0].mxu0
      %4944 = vmatprep.mubr.bf16.mxu0 0
      %4945 = vmatmul.mubr.bf16.gmra.mrb[0].mxu0 %v4851
      %v4946 = vpop.f32.mrb[0].mxu0
      %v4947 = vadd.f32 0.0, %v4946
      %v4948 = vpop.f32.mrb[0].mxu0
      %v4949 = vpop.f32.mrb[0].mxu0
      %v4950 = vadd.f32 0.0, %v4949
      %v4951 = vpop.f32.mrb[0].mxu0
      %4952 = vmatprep.mubr.bf16.mxu0 0
      %4953 = vmatmul.mubr.bf16.gmra.mrb[0].mxu0 %v4854
      %v4954 = vpop.f32.mrb[0].mxu0
      %v4955 = vadd.f32 0.0, %v4954
      %v4956 = vpop.f32.mrb[0].mxu0
      %v4957 = vpop.f32.mrb[0].mxu0
      %v4958 = vadd.f32 0.0, %v4957
      %v4959 = vpop.f32.mrb[0].mxu0
      %4960 = vmatprep.mubr.bf16.mxu0 0
      %4961 = vmatmul.mubr.bf16.gmra.mrb[0].mxu0 %v4857
      %v4962 = vpop.f32.mrb[0].mxu0
      %v4963 = vadd.f32 0.0, %v4962
      %v4964 = vpop.f32.mrb[0].mxu0
      %v4965 = vpop.f32.mrb[0].mxu0
      %v4966 = vadd.f32 0.0, %v4965
      %v4967 = vpop.f32.mrb[0].mxu0
      %4968 = vmatprep.mubr.bf16.mxu0 0
      %4969 = vmatmul.mubr.bf16.gmra.mrb[0].mxu0 %v4860
      %v4970 = vpop.f32.mrb[0].mxu0
      %v4971 = vadd.f32 0.0, %v4970
      %v4972 = vpop.f32.mrb[0].mxu0
      %v4973 = vpop.f32.mrb[0].mxu0
      %v4974 = vadd.f32 0.0, %v4973
      %v4975 = vpop.f32.mrb[0].mxu0
      %4976 = vmatprep.mubr.bf16.mxu0 0
      %4977 = vmatmul.mubr.bf16.gmra.mrb[0].mxu0 %v4863
      %v4978 = vpop.f32.mrb[0].mxu0
      %v4979 = vadd.f32 0.0, %v4978
      %v4980 = vpop.f32.mrb[0].mxu0
      %v4981 = vpop.f32.mrb[0].mxu0
      %v4982 = vadd.f32 0.0, %v4981
      %v4983 = vpop.f32.mrb[0].mxu0
      %4984 = vmatprep.mubr.bf16.mxu0 0
      %4985 = vmatmul.mubr.bf16.gmra.mrb[0].mxu0 %v4866
      %v4986 = vpop.f32.mrb[0].mxu0
      %v4987 = vadd.f32 0.0, %v4986
      %v4988 = vpop.f32.mrb[0].mxu0
      %v4989 = vpop.f32.mrb[0].mxu0
      %v4990 = vadd.f32 0.0, %v4989
      %v4991 = vpop.f32.mrb[0].mxu0
      %4992 = vmatprep.mubr.bf16.mxu0 0
      %4993 = vmatmul.mubr.bf16.gmra.mrb[0].mxu0 %v4869
      %v4994 = vpop.f32.mrb[0].mxu0
      %v4995 = vadd.f32 0.0, %v4994
      %v4996 = vpop.f32.mrb[0].mxu0
      %v4997 = vpop.f32.mrb[0].mxu0
      %v4998 = vadd.f32 0.0, %v4997
      %v4999 = vpop.f32.mrb[0].mxu0
      %5000 = vmatprep.mubr.bf16.mxu0 0
      %5001 = vmatmul.mubr.bf16.gmra.mrb[0].mxu0 %v4872
      %v5002 = vpop.f32.mrb[0].mxu0
      %v5003 = vadd.f32 0.0, %v5002
      %v5004 = vpop.f32.mrb[0].mxu0
      %v5005 = vpop.f32.mrb[0].mxu0
      %v5006 = vadd.f32 0.0, %v5005
      %v5007 = vpop.f32.mrb[0].mxu0
      %5008 = vmatprep.mubr.bf16.mxu0 0
      %5009 = vmatmul.mubr.bf16.gmra.mrb[0].mxu0 %v4875
      %v5010 = vpop.f32.mrb[0].mxu0
      %v5011 = vadd.f32 0.0, %v5010
      %v5012 = vpop.f32.mrb[0].mxu0
      %v5013 = vpop.f32.mrb[0].mxu0
      %v5014 = vadd.f32 0.0, %v5013
      %v5015 = vpop.f32.mrb[0].mxu0
      %5016 = vmatprep.mubr.bf16.mxu0 0
      %5017 = vmatmul.mubr.bf16.gmra.mrb[0].mxu0 %v4878
      %v5018 = vpop.f32.mrb[0].mxu0
      %v5019 = vadd.f32 0.0, %v5018
      %v5020 = vpop.f32.mrb[0].mxu0
      %v5021 = vpop.f32.mrb[0].mxu0
      %v5022 = vadd.f32 0.0, %v5021
      %v5023 = vpop.f32.mrb[0].mxu0
      %5024 = vmatprep.mubr.bf16.mxu0 0
      %5025 = vmatmul.mubr.bf16.gmra.mrb[0].mxu0 %v4881
      %v5026 = vpop.f32.mrb[0].mxu0
      %v5027 = vadd.f32 0.0, %v5026
      %v5028 = vpop.f32.mrb[0].mxu0
      %v5029 = vpop.f32.mrb[0].mxu0
      %v5030 = vadd.f32 0.0, %v5029
      %v5031 = vpop.f32.mrb[0].mxu0
      %5032 = vmatprep.mubr.bf16.mxu0 0
      %5033 = vmatmul.mubr.bf16.gmra.mrb[0].mxu0 %v4884
      %v5034 = vpop.f32.mrb[0].mxu0
      %v5035 = vadd.f32 0.0, %v5034
      %v5036 = vpop.f32.mrb[0].mxu0
      %v5037 = vpop.f32.mrb[0].mxu0
      %v5038 = vadd.f32 0.0, %v5037
      %v5039 = vpop.f32.mrb[0].mxu0
      %5040 = vmatprep.mubr.bf16.mxu0 0
      %5041 = vmatmul.mubr.bf16.gmra.mrb[0].mxu0 %v4887
      %v5042 = vpop.f32.mrb[0].mxu0
      %v5043 = vadd.f32 0.0, %v5042
      %v5044 = vpop.f32.mrb[0].mxu0
      %v5045 = vpop.f32.mrb[0].mxu0
      %v5046 = vadd.f32 0.0, %v5045
      %v5047 = vpop.f32.mrb[0].mxu0
      %5048 = vmatprep.mubr.bf16.mxu0 0
      %5049 = vmatmul.mubr.bf16.gmra.mrb[0].mxu0 %v4890
      %v5050 = vpop.f32.mrb[0].mxu0
      %v5051 = vadd.f32 0.0, %v5050
      %v5052 = vpop.f32.mrb[0].mxu0
      %v5053 = vpop.f32.mrb[0].mxu0
      %v5054 = vadd.f32 0.0, %v5053
      %v5055 = vpop.f32.mrb[0].mxu0
      %5056 = vmatprep.mubr.bf16.mxu0 0
      %5057 = vmatmul.mubr.bf16.gmra.mrb[0].mxu0 %v4893
      %v5058 = vpop.f32.mrb[0].mxu0
      %v5059 = vadd.f32 0.0, %v5058
      %v5060 = vpop.f32.mrb[0].mxu0
      %v5061 = vpop.f32.mrb[0].mxu0
      %v5062 = vadd.f32 0.0, %v5061
      %v5063 = vpop.f32.mrb[0].mxu0
      %5064 = vmatprep.mubr.bf16.mxu0 0
      %5065 = vmatmul.mubr.bf16.gmra.mrb[0].mxu0 %v4896
      %v5066 = vpop.f32.mrb[0].mxu0
      %v5067 = vadd.f32 0.0, %v5066
      %v5068 = vpop.f32.mrb[0].mxu0
      %v5069 = vpop.f32.mrb[0].mxu0
      %v5070 = vadd.f32 0.0, %v5069
      %v5071 = vpop.f32.mrb[0].mxu0
      %5072 = vmatprep.mubr.bf16.mxu0 0
      %5073 = vmatmul.mubr.bf16.gmra.mrb[0].mxu0 %v4899
      %v5074 = vpop.f32.mrb[0].mxu0
      %v5075 = vadd.f32 0.0, %v5074
      %v5076 = vpop.f32.mrb[0].mxu0
      %v5077 = vpop.f32.mrb[0].mxu0
      %v5078 = vadd.f32 0.0, %v5077
      %v5079 = vpop.f32.mrb[0].mxu0
      %5080 = vdwg.mxu0
      %v5081 = vld [vmem:[#allocation2] sm:$0xff]
      %v5082 = vld [vmem:[#allocation2 + $0x8] sm:$0xff]
      %v5083 = vld [vmem:[#allocation2 + $0x10] sm:$0xff]
      %v5084 = vld [vmem:[#allocation2 + $0x18] sm:$0xff]
      %v5085 = vld [vmem:[#allocation2 + $0x20] sm:$0xff]
      %v5086 = vld [vmem:[#allocation2 + $0x28] sm:$0xff]
      %v5087 = vld [vmem:[#allocation2 + $0x30] sm:$0xff]
      %v5088 = vld [vmem:[#allocation2 + $0x38] sm:$0xff]
      %v5089 = vld [vmem:[#allocation2 + $0x40] sm:$0xff]
      %v5090 = vld [vmem:[#allocation2 + $0x48] sm:$0xff]
      %v5091 = vld [vmem:[#allocation2 + $0x50] sm:$0xff]
      %v5092 = vld [vmem:[#allocation2 + $0x58] sm:$0xff]
      %v5093 = vld [vmem:[#allocation2 + $0x60] sm:$0xff]
      %v5094 = vld [vmem:[#allocation2 + $0x68] sm:$0xff]
      %v5095 = vld [vmem:[#allocation2 + $0x70] sm:$0xff]
      %v5096 = vld [vmem:[#allocation2 + $0x78] sm:$0xff]
      %v5097 = vld [vmem:[#allocation2 + $0x80] sm:$0xff]
      %v5098 = vld [vmem:[#allocation2 + $0x88] sm:$0xff]
      %v5099 = vld [vmem:[#allocation2 + $0x90] sm:$0xff]
      %v5100 = vld [vmem:[#allocation2 + $0x98] sm:$0xff]
      %v5101 = vld [vmem:[#allocation2 + $0xa0] sm:$0xff]
      %v5102 = vld [vmem:[#allocation2 + $0xa8] sm:$0xff]
      %v5103 = vld [vmem:[#allocation2 + $0xb0] sm:$0xff]
      %v5104 = vld [vmem:[#allocation2 + $0xb8] sm:$0xff]
      %v5105 = vld [vmem:[#allocation2 + $0xc0] sm:$0xff]
      %v5106 = vld [vmem:[#allocation2 + $0xc8] sm:$0xff]
      %v5107 = vld [vmem:[#allocation2 + $0xd0] sm:$0xff]
      %v5108 = vld [vmem:[#allocation2 + $0xd8] sm:$0xff]
      %v5109 = vld [vmem:[#allocation2 + $0xe0] sm:$0xff]
      %v5110 = vld [vmem:[#allocation2 + $0xe8] sm:$0xff]
      %v5111 = vld [vmem:[#allocation2 + $0xf0] sm:$0xff]
      %v5112 = vld [vmem:[#allocation2 + $0xf8] sm:$0xff]
      %v5113 = vld [vmem:[#allocation2 + $0x100] sm:$0xff]
      %v5114 = vld [vmem:[#allocation2 + $0x108] sm:$0xff]
      %v5115 = vld [vmem:[#allocation2 + $0x110] sm:$0xff]
      %v5116 = vld [vmem:[#allocation2 + $0x118] sm:$0xff]
      %v5117 = vadd.f32 %v5081, %v4939
      %v5118 = vadd.f32 %v5082, %v4942
      %v5119 = vadd.f32 %v5083, %v4947
      %v5120 = vadd.f32 %v5084, %v4950
      %v5121 = vadd.f32 %v5085, %v4955
      %v5122 = vadd.f32 %v5086, %v4958
      %v5123 = vadd.f32 %v5087, %v4963
      %v5124 = vadd.f32 %v5088, %v4966
      %v5125 = vadd.f32 %v5089, %v4971
      %v5126 = vadd.f32 %v5090, %v4974
      %v5127 = vadd.f32 %v5091, %v4979
      %v5128 = vadd.f32 %v5092, %v4982
      %v5129 = vadd.f32 %v5093, %v4987
      %v5130 = vadd.f32 %v5094, %v4990
      %v5131 = vadd.f32 %v5095, %v4995
      %v5132 = vadd.f32 %v5096, %v4998
      %v5133 = vadd.f32 %v5097, %v5003
      %v5134 = vadd.f32 %v5098, %v5006
      %v5135 = vadd.f32 %v5099, %v5011
      %v5136 = vadd.f32 %v5100, %v5014
      %v5137 = vadd.f32 %v5101, %v5019
      %v5138 = vadd.f32 %v5102, %v5022
      %v5139 = vadd.f32 %v5103, %v5027
      %v5140 = vadd.f32 %v5104, %v5030
      %v5141 = vadd.f32 %v5105, %v5035
      %v5142 = vadd.f32 %v5106, %v5038
      %v5143 = vadd.f32 %v5107, %v5043
      %v5144 = vadd.f32 %v5108, %v5046
      %v5145 = vadd.f32 %v5109, %v5051
      %v5146 = vadd.f32 %v5110, %v5054
      %v5147 = vadd.f32 %v5111, %v5059
      %v5148 = vadd.f32 %v5112, %v5062
      %v5149 = vadd.f32 %v5113, %v5067
      %v5150 = vadd.f32 %v5114, %v5070
      %v5151 = vadd.f32 %v5115, %v5075
      %v5152 = vadd.f32 %v5116, %v5078
      %5153 = vst [vmem:[#allocation2] sm:$0xff] %v5117
      %5154 = vst [vmem:[#allocation2 + $0x8] sm:$0xff] %v5118
      %5155 = vst [vmem:[#allocation2 + $0x10] sm:$0xff] %v5119
      %5156 = vst [vmem:[#allocation2 + $0x18] sm:$0xff] %v5120
      %5157 = vst [vmem:[#allocation2 + $0x20] sm:$0xff] %v5121
      %5158 = vst [vmem:[#allocation2 + $0x28] sm:$0xff] %v5122
      %5159 = vst [vmem:[#allocation2 + $0x30] sm:$0xff] %v5123
      %5160 = vst [vmem:[#allocation2 + $0x38] sm:$0xff] %v5124
      %5161 = vst [vmem:[#allocation2 + $0x40] sm:$0xff] %v5125
      %5162 = vst [vmem:[#allocation2 + $0x48] sm:$0xff] %v5126
      %5163 = vst [vmem:[#allocation2 + $0x50] sm:$0xff] %v5127
      %5164 = vst [vmem:[#allocation2 + $0x58] sm:$0xff] %v5128
      %5165 = vst [vmem:[#allocation2 + $0x60] sm:$0xff] %v5129
      %5166 = vst [vmem:[#allocation2 + $0x68] sm:$0xff] %v5130
      %5167 = vst [vmem:[#allocation2 + $0x70] sm:$0xff] %v5131
      %5168 = vst [vmem:[#allocation2 + $0x78] sm:$0xff] %v5132
      %5169 = vst [vmem:[#allocation2 + $0x80] sm:$0xff] %v5133
      %5170 = vst [vmem:[#allocation2 + $0x88] sm:$0xff] %v5134
      %5171 = vst [vmem:[#allocation2 + $0x90] sm:$0xff] %v5135
      %5172 = vst [vmem:[#allocation2 + $0x98] sm:$0xff] %v5136
      %5173 = vst [vmem:[#allocation2 + $0xa0] sm:$0xff] %v5137
      %5174 = vst [vmem:[#allocation2 + $0xa8] sm:$0xff] %v5138
      %5175 = vst [vmem:[#allocation2 + $0xb0] sm:$0xff] %v5139
      %5176 = vst [vmem:[#allocation2 + $0xb8] sm:$0xff] %v5140
      %5177 = vst [vmem:[#allocation2 + $0xc0] sm:$0xff] %v5141
      %5178 = vst [vmem:[#allocation2 + $0xc8] sm:$0xff] %v5142
      %5179 = vst [vmem:[#allocation2 + $0xd0] sm:$0xff] %v5143
      %5180 = vst [vmem:[#allocation2 + $0xd8] sm:$0xff] %v5144
      %5181 = vst [vmem:[#allocation2 + $0xe0] sm:$0xff] %v5145
      %5182 = vst [vmem:[#allocation2 + $0xe8] sm:$0xff] %v5146
      %5183 = vst [vmem:[#allocation2 + $0xf0] sm:$0xff] %v5147
      %5184 = vst [vmem:[#allocation2 + $0xf8] sm:$0xff] %v5148
      %5185 = vst [vmem:[#allocation2 + $0x100] sm:$0xff] %v5149
      %5186 = vst [vmem:[#allocation2 + $0x108] sm:$0xff] %v5150
      %5187 = vst [vmem:[#allocation2 + $0x110] sm:$0xff] %v5151
      %5188 = vst [vmem:[#allocation2 + $0x118] sm:$0xff] %v5152
      %v5189 = vld [vmem:[#allocation2] sm:$0xff]
      %v5190 = vld [vmem:[#allocation2 + $0x8] sm:$0xff]
      %v5191 = vld [vmem:[#allocation2 + $0x10] sm:$0xff]
      %v5192 = vld [vmem:[#allocation2 + $0x18] sm:$0xff]
      %v5193 = vld [vmem:[#allocation2 + $0x20] sm:$0xff]
      %v5194 = vld [vmem:[#allocation2 + $0x28] sm:$0xff]
      %v5195 = vld [vmem:[#allocation2 + $0x30] sm:$0xff]
      %v5196 = vld [vmem:[#allocation2 + $0x38] sm:$0xff]
      %v5197 = vld [vmem:[#allocation2 + $0x40] sm:$0xff]
      %v5198 = vld [vmem:[#allocation2 + $0x48] sm:$0xff]
      %v5199 = vld [vmem:[#allocation2 + $0x50] sm:$0xff]
      %v5200 = vld [vmem:[#allocation2 + $0x58] sm:$0xff]
      %v5201 = vld [vmem:[#allocation2 + $0x60] sm:$0xff]
      %v5202 = vld [vmem:[#allocation2 + $0x68] sm:$0xff]
      %v5203 = vld [vmem:[#allocation2 + $0x70] sm:$0xff]
      %v5204 = vld [vmem:[#allocation2 + $0x78] sm:$0xff]
      %v5205 = vld [vmem:[#allocation2 + $0x80] sm:$0xff]
      %v5206 = vld [vmem:[#allocation2 + $0x88] sm:$0xff]
      %v5207 = vld [vmem:[#allocation2 + $0x90] sm:$0xff]
      %v5208 = vld [vmem:[#allocation2 + $0x98] sm:$0xff]
      %v5209 = vld [vmem:[#allocation2 + $0xa0] sm:$0xff]
      %v5210 = vld [vmem:[#allocation2 + $0xa8] sm:$0xff]
      %v5211 = vld [vmem:[#allocation2 + $0xb0] sm:$0xff]
      %v5212 = vld [vmem:[#allocation2 + $0xb8] sm:$0xff]
      %v5213 = vld [vmem:[#allocation2 + $0xc0] sm:$0xff]
      %v5214 = vld [vmem:[#allocation2 + $0xc8] sm:$0xff]
      %v5215 = vld [vmem:[#allocation2 + $0xd0] sm:$0xff]
      %v5216 = vld [vmem:[#allocation2 + $0xd8] sm:$0xff]
      %v5217 = vld [vmem:[#allocation2 + $0xe0] sm:$0xff]
      %v5218 = vld [vmem:[#allocation2 + $0xe8] sm:$0xff]
      %v5219 = vld [vmem:[#allocation2 + $0xf0] sm:$0xff]
      %v5220 = vld [vmem:[#allocation2 + $0xf8] sm:$0xff]
      %v5221 = vld [vmem:[#allocation2 + $0x100] sm:$0xff]
      %v5222 = vld [vmem:[#allocation2 + $0x108] sm:$0xff]
      %v5223 = vld [vmem:[#allocation2 + $0x110] sm:$0xff]
      %v5224 = vld [vmem:[#allocation2 + $0x118] sm:$0xff]
      %v5225 = vpack.c.bf16 %v5190, %v5189
      %v5226 = vpack.c.bf16 %v5192, %v5191
      %v5227 = vpack.c.bf16 %v5194, %v5193
      %v5228 = vpack.c.bf16 %v5196, %v5195
      %v5229 = vpack.c.bf16 %v5198, %v5197
      %v5230 = vpack.c.bf16 %v5200, %v5199
      %v5231 = vpack.c.bf16 %v5202, %v5201
      %v5232 = vpack.c.bf16 %v5204, %v5203
      %v5233 = vpack.c.bf16 %v5206, %v5205
      %v5234 = vpack.c.bf16 %v5208, %v5207
      %v5235 = vpack.c.bf16 %v5210, %v5209
      %v5236 = vpack.c.bf16 %v5212, %v5211
      %v5237 = vpack.c.bf16 %v5214, %v5213
      %v5238 = vpack.c.bf16 %v5216, %v5215
      %v5239 = vpack.c.bf16 %v5218, %v5217
      %v5240 = vpack.c.bf16 %v5220, %v5219
      %v5241 = vpack.c.bf16 %v5222, %v5221
      %v5242 = vpack.c.bf16 %v5224, %v5223
      %v5261 = vunpack.c.l.b16 %v5225
      %v5262 = vunpack.c.h.b16 %v5225
      %v5263 = vunpack.c.l.b16 %v5226
      %v5264 = vunpack.c.h.b16 %v5226
      %v5265 = vunpack.c.l.b16 %v5227
      %v5266 = vunpack.c.h.b16 %v5227
      %v5267 = vunpack.c.l.b16 %v5228
      %v5268 = vunpack.c.h.b16 %v5228
      %v5269 = vunpack.c.l.b16 %v5229
      %v5270 = vunpack.c.h.b16 %v5229
      %v5271 = vunpack.c.l.b16 %v5230
      %v5272 = vunpack.c.h.b16 %v5230
      %v5273 = vunpack.c.l.b16 %v5231
      %v5274 = vunpack.c.h.b16 %v5231
      %v5275 = vunpack.c.l.b16 %v5232
      %v5276 = vunpack.c.h.b16 %v5232
      %v5277 = vunpack.c.l.b16 %v5233
      %v5278 = vunpack.c.h.b16 %v5233
      %v5279 = vunpack.c.l.b16 %v5234
      %v5280 = vunpack.c.h.b16 %v5234
      %v5281 = vunpack.c.l.b16 %v5235
      %v5282 = vunpack.c.h.b16 %v5235
      %v5283 = vunpack.c.l.b16 %v5236
      %v5284 = vunpack.c.h.b16 %v5236
      %v5285 = vunpack.c.l.b16 %v5237
      %v5286 = vunpack.c.h.b16 %v5237
      %v5287 = vunpack.c.l.b16 %v5238
      %v5288 = vunpack.c.h.b16 %v5238
      %v5289 = vunpack.c.l.b16 %v5239
      %v5290 = vunpack.c.h.b16 %v5239
      %v5291 = vunpack.c.l.b16 %v5240
      %v5292 = vunpack.c.h.b16 %v5240
      %v5293 = vunpack.c.l.b16 %v5241
      %v5294 = vunpack.c.h.b16 %v5241
      %v5295 = vunpack.c.l.b16 %v5242
      %v5296 = vunpack.c.h.b16 %v5242
      %v5297 = vpack.c.b16 %v5261, %v5261
      %v5298 = vpack.c.b16 %v5262, %v5262
      %v5299 = vpack.c.b16 %v5263, %v5263
      %v5300 = vpack.c.b16 %v5264, %v5264
      %v5301 = vpack.c.b16 %v5265, %v5265
      %v5302 = vpack.c.b16 %v5266, %v5266
      %v5303 = vpack.c.b16 %v5267, %v5267
      %v5304 = vpack.c.b16 %v5268, %v5268
      %v5305 = vpack.c.b16 %v5269, %v5269
      %v5306 = vpack.c.b16 %v5270, %v5270
      %v5307 = vpack.c.b16 %v5271, %v5271
      %v5308 = vpack.c.b16 %v5272, %v5272
      %v5309 = vpack.c.b16 %v5273, %v5273
      %v5310 = vpack.c.b16 %v5274, %v5274
      %v5311 = vpack.c.b16 %v5275, %v5275
      %v5312 = vpack.c.b16 %v5276, %v5276
      %v5313 = vpack.c.b16 %v5277, %v5277
      %v5314 = vpack.c.b16 %v5278, %v5278
      %v5315 = vpack.c.b16 %v5279, %v5279
      %v5316 = vpack.c.b16 %v5280, %v5280
      %v5317 = vpack.c.b16 %v5281, %v5281
      %v5318 = vpack.c.b16 %v5282, %v5282
      %v5319 = vpack.c.b16 %v5283, %v5283
      %v5320 = vpack.c.b16 %v5284, %v5284
      %v5321 = vpack.c.b16 %v5285, %v5285
      %v5322 = vpack.c.b16 %v5286, %v5286
      %v5323 = vpack.c.b16 %v5287, %v5287
      %v5324 = vpack.c.b16 %v5288, %v5288
      %v5325 = vpack.c.b16 %v5289, %v5289
      %v5326 = vpack.c.b16 %v5290, %v5290
      %v5327 = vpack.c.b16 %v5291, %v5291
      %v5328 = vpack.c.b16 %v5292, %v5292
      %v5329 = vpack.c.b16 %v5293, %v5293
      %v5330 = vpack.c.b16 %v5294, %v5294
      %v5331 = vpack.c.b16 %v5295, %v5295
      %v5332 = vpack.c.b16 %v5296, %v5296
      %vm5369 = vcmask 60416
      %5370 = vst.msk [vmem:[%s303] sm:$0xf] %vm5369, %v5297
      %5371 = vst.msk [vmem:[%s303 + $0x4] sm:$0xf] %vm5369, %v5298
      %5372 = vst.msk [vmem:[%s303 + $0x8] sm:$0xf] %vm5369, %v5299
      %5373 = vst.msk [vmem:[%s303 + $0xc] sm:$0xf] %vm5369, %v5300
      %5374 = vst.msk [vmem:[%s303 + $0x10] sm:$0xf] %vm5369, %v5301
      %5375 = vst.msk [vmem:[%s303 + $0x14] sm:$0xf] %vm5369, %v5302
      %5376 = vst.msk [vmem:[%s303 + $0x18] sm:$0xf] %vm5369, %v5303
      %5377 = vst.msk [vmem:[%s303 + $0x1c] sm:$0xf] %vm5369, %v5304
      %5378 = vst.msk [vmem:[%s303 + $0x20] sm:$0xf] %vm5369, %v5305
      %5379 = vst.msk [vmem:[%s303 + $0x24] sm:$0xf] %vm5369, %v5306
      %5380 = vst.msk [vmem:[%s303 + $0x28] sm:$0xf] %vm5369, %v5307
      %5381 = vst.msk [vmem:[%s303 + $0x2c] sm:$0xf] %vm5369, %v5308
      %5382 = vst.msk [vmem:[%s303 + $0x30] sm:$0xf] %vm5369, %v5309
      %5383 = vst.msk [vmem:[%s303 + $0x34] sm:$0xf] %vm5369, %v5310
      %5384 = vst.msk [vmem:[%s303 + $0x38] sm:$0xf] %vm5369, %v5311
      %5385 = vst.msk [vmem:[%s303 + $0x3c] sm:$0xf] %vm5369, %v5312
      %5386 = vst.msk [vmem:[%s303 + $0x40] sm:$0xf] %vm5369, %v5313
      %5387 = vst.msk [vmem:[%s303 + $0x44] sm:$0xf] %vm5369, %v5314
      %5388 = vst.msk [vmem:[%s303 + $0x48] sm:$0xf] %vm5369, %v5315
      %5389 = vst.msk [vmem:[%s303 + $0x4c] sm:$0xf] %vm5369, %v5316
      %5390 = vst.msk [vmem:[%s303 + $0x50] sm:$0xf] %vm5369, %v5317
      %5391 = vst.msk [vmem:[%s303 + $0x54] sm:$0xf] %vm5369, %v5318
      %5392 = vst.msk [vmem:[%s303 + $0x58] sm:$0xf] %vm5369, %v5319
      %5393 = vst.msk [vmem:[%s303 + $0x5c] sm:$0xf] %vm5369, %v5320
      %5394 = vst.msk [vmem:[%s303 + $0x60] sm:$0xf] %vm5369, %v5321
      %5395 = vst.msk [vmem:[%s303 + $0x64] sm:$0xf] %vm5369, %v5322
      %5396 = vst.msk [vmem:[%s303 + $0x68] sm:$0xf] %vm5369, %v5323
      %5397 = vst.msk [vmem:[%s303 + $0x6c] sm:$0xf] %vm5369, %v5324
      %5398 = vst.msk [vmem:[%s303 + $0x70] sm:$0xf] %vm5369, %v5325
      %5399 = vst.msk [vmem:[%s303 + $0x74] sm:$0xf] %vm5369, %v5326
      %5400 = vst.msk [vmem:[%s303 + $0x78] sm:$0xf] %vm5369, %v5327
      %5401 = vst.msk [vmem:[%s303 + $0x7c] sm:$0xf] %vm5369, %v5328
      %5402 = vst.msk [vmem:[%s303 + $0x80] sm:$0xf] %vm5369, %v5329
      %5403 = vst.msk [vmem:[%s303 + $0x84] sm:$0xf] %vm5369, %v5330
      %5404 = vst.msk [vmem:[%s303 + $0x88] sm:$0xf] %vm5369, %v5331
      %5405 = vst.msk [vmem:[%s303 + $0x8c] sm:$0xf] %vm5369, %v5332
      %v5406 = vunpack.c.l.bf16 %v5225
      %v5407 = vunpack.c.h.bf16 %v5225
      %v5408 = vunpack.c.l.bf16 %v5226
      %v5409 = vunpack.c.h.bf16 %v5226
      %v5410 = vunpack.c.l.bf16 %v5227
      %v5411 = vunpack.c.h.bf16 %v5227
      %v5412 = vunpack.c.l.bf16 %v5228
      %v5413 = vunpack.c.h.bf16 %v5228
      %v5414 = vunpack.c.l.bf16 %v5229
      %v5415 = vunpack.c.h.bf16 %v5229
      %v5416 = vunpack.c.l.bf16 %v5230
      %v5417 = vunpack.c.h.bf16 %v5230
      %v5418 = vunpack.c.l.bf16 %v5231
      %v5419 = vunpack.c.h.bf16 %v5231
      %v5420 = vunpack.c.l.bf16 %v5232
      %v5421 = vunpack.c.h.bf16 %v5232
      %v5422 = vunpack.c.l.bf16 %v5233
      %v5423 = vunpack.c.h.bf16 %v5233
      %v5424 = vunpack.c.l.bf16 %v5234
      %v5425 = vunpack.c.h.bf16 %v5234
      %v5426 = vunpack.c.l.bf16 %v5235
      %v5427 = vunpack.c.h.bf16 %v5235
      %v5428 = vunpack.c.l.bf16 %v5236
      %v5429 = vunpack.c.h.bf16 %v5236
      %v5430 = vunpack.c.l.bf16 %v5237
      %v5431 = vunpack.c.h.bf16 %v5237
      %v5432 = vunpack.c.l.bf16 %v5238
      %v5433 = vunpack.c.h.bf16 %v5238
      %v5434 = vunpack.c.l.bf16 %v5239
      %v5435 = vunpack.c.h.bf16 %v5239
      %v5436 = vunpack.c.l.bf16 %v5240
      %v5437 = vunpack.c.h.bf16 %v5240
      %v5438 = vunpack.c.l.bf16 %v5241
      %v5439 = vunpack.c.h.bf16 %v5241
      %v5440 = vunpack.c.l.bf16 %v5242
      %v5441 = vunpack.c.h.bf16 %v5242
      %v5442 = vld [vmem:[%s2] sm:$0xff]
      %v5443 = vld [vmem:[%s2 + $0x8] sm:$0xff]
      %v5444 = vld [vmem:[%s2 + $0x10] sm:$0xff]
      %v5445 = vld [vmem:[%s2 + $0x18] sm:$0xff]
      %v5446 = vld [vmem:[%s2 + $0x20] sm:$0xff]
      %v5447 = vld [vmem:[%s2 + $0x28] sm:$0xff]
      %v5448 = vld [vmem:[%s2 + $0x30] sm:$0xff]
      %v5449 = vld [vmem:[%s2 + $0x38] sm:$0xff]
      %v5450 = vld [vmem:[%s2 + $0x40] sm:$0xff]
      %v5451 = vld [vmem:[%s2 + $0x48] sm:$0xff]
      %v5452 = vld [vmem:[%s2 + $0x50] sm:$0xff]
      %v5453 = vld [vmem:[%s2 + $0x58] sm:$0xff]
      %v5454 = vld [vmem:[%s2 + $0x60] sm:$0xff]
      %v5455 = vld [vmem:[%s2 + $0x68] sm:$0xff]
      %v5456 = vld [vmem:[%s2 + $0x70] sm:$0xff]
      %v5457 = vld [vmem:[%s2 + $0x78] sm:$0xff]
      %v5458 = vld [vmem:[%s2 + $0x80] sm:$0xff]
      %v5459 = vld [vmem:[%s2 + $0x88] sm:$0xff]
      %v5460 = vld [vmem:[%s2 + $0x90] sm:$0xff]
      %v5461 = vld [vmem:[%s2 + $0x98] sm:$0xff]
      %v5462 = vld [vmem:[%s2 + $0xa0] sm:$0xff]
      %v5463 = vld [vmem:[%s2 + $0xa8] sm:$0xff]
      %v5464 = vld [vmem:[%s2 + $0xb0] sm:$0xff]
      %v5465 = vld [vmem:[%s2 + $0xb8] sm:$0xff]
      %v5466 = vld [vmem:[%s2 + $0xc0] sm:$0xff]
      %v5467 = vld [vmem:[%s2 + $0xc8] sm:$0xff]
      %v5468 = vld [vmem:[%s2 + $0xd0] sm:$0xff]
      %v5469 = vld [vmem:[%s2 + $0xd8] sm:$0xff]
      %v5470 = vld [vmem:[%s2 + $0xe0] sm:$0xff]
      %v5471 = vld [vmem:[%s2 + $0xe8] sm:$0xff]
      %v5472 = vld [vmem:[%s2 + $0xf0] sm:$0xff]
      %v5473 = vld [vmem:[%s2 + $0xf8] sm:$0xff]
      %v5474 = vld [vmem:[%s2 + $0x100] sm:$0xff]
      %v5475 = vld [vmem:[%s2 + $0x108] sm:$0xff]
      %v5476 = vld [vmem:[%s2 + $0x110] sm:$0xff]
      %v5477 = vld [vmem:[%s2 + $0x118] sm:$0xff]
      %5479 = vset.pattern.permute.xlu0 0
      %5480 = vperm.xlu0 %5479, %v5442
      %v5481 = vpop.permute.xlu0 %5480
      %5484 = vset.pattern.permute.xlu0 0
      %5485 = vperm.xlu0 %5484, %v5443
      %v5486 = vpop.permute.xlu0 %5485
      %5489 = vset.pattern.permute.xlu0 0
      %5490 = vperm.xlu0 %5489, %v5444
      %v5491 = vpop.permute.xlu0 %5490
      %5494 = vset.pattern.permute.xlu0 0
      %5495 = vperm.xlu0 %5494, %v5445
      %v5496 = vpop.permute.xlu0 %5495
      %5499 = vset.pattern.permute.xlu0 0
      %5500 = vperm.xlu0 %5499, %v5446
      %v5501 = vpop.permute.xlu0 %5500
      %5504 = vset.pattern.permute.xlu0 0
      %5505 = vperm.xlu0 %5504, %v5447
      %v5506 = vpop.permute.xlu0 %5505
      %5509 = vset.pattern.permute.xlu0 0
      %5510 = vperm.xlu0 %5509, %v5448
      %v5511 = vpop.permute.xlu0 %5510
      %5514 = vset.pattern.permute.xlu0 0
      %5515 = vperm.xlu0 %5514, %v5449
      %v5516 = vpop.permute.xlu0 %5515
      %5519 = vset.pattern.permute.xlu0 0
      %5520 = vperm.xlu0 %5519, %v5450
      %v5521 = vpop.permute.xlu0 %5520
      %5524 = vset.pattern.permute.xlu0 0
      %5525 = vperm.xlu0 %5524, %v5451
      %v5526 = vpop.permute.xlu0 %5525
      %5529 = vset.pattern.permute.xlu0 0
      %5530 = vperm.xlu0 %5529, %v5452
      %v5531 = vpop.permute.xlu0 %5530
      %5534 = vset.pattern.permute.xlu0 0
      %5535 = vperm.xlu0 %5534, %v5453
      %v5536 = vpop.permute.xlu0 %5535
      %5539 = vset.pattern.permute.xlu0 0
      %5540 = vperm.xlu0 %5539, %v5454
      %v5541 = vpop.permute.xlu0 %5540
      %5544 = vset.pattern.permute.xlu0 0
      %5545 = vperm.xlu0 %5544, %v5455
      %v5546 = vpop.permute.xlu0 %5545
      %5549 = vset.pattern.permute.xlu0 0
      %5550 = vperm.xlu0 %5549, %v5456
      %v5551 = vpop.permute.xlu0 %5550
      %5554 = vset.pattern.permute.xlu0 0
      %5555 = vperm.xlu0 %5554, %v5457
      %v5556 = vpop.permute.xlu0 %5555
      %5559 = vset.pattern.permute.xlu0 0
      %5560 = vperm.xlu0 %5559, %v5458
      %v5561 = vpop.permute.xlu0 %5560
      %5564 = vset.pattern.permute.xlu0 0
      %5565 = vperm.xlu0 %5564, %v5459
      %v5566 = vpop.permute.xlu0 %5565
      %5569 = vset.pattern.permute.xlu0 0
      %5570 = vperm.xlu0 %5569, %v5460
      %v5571 = vpop.permute.xlu0 %5570
      %5574 = vset.pattern.permute.xlu0 0
      %5575 = vperm.xlu0 %5574, %v5461
      %v5576 = vpop.permute.xlu0 %5575
      %5579 = vset.pattern.permute.xlu0 0
      %5580 = vperm.xlu0 %5579, %v5462
      %v5581 = vpop.permute.xlu0 %5580
      %5584 = vset.pattern.permute.xlu0 0
      %5585 = vperm.xlu0 %5584, %v5463
      %v5586 = vpop.permute.xlu0 %5585
      %5589 = vset.pattern.permute.xlu0 0
      %5590 = vperm.xlu0 %5589, %v5464
      %v5591 = vpop.permute.xlu0 %5590
      %5594 = vset.pattern.permute.xlu0 0
      %5595 = vperm.xlu0 %5594, %v5465
      %v5596 = vpop.permute.xlu0 %5595
      %5599 = vset.pattern.permute.xlu0 0
      %5600 = vperm.xlu0 %5599, %v5466
      %v5601 = vpop.permute.xlu0 %5600
      %5604 = vset.pattern.permute.xlu0 0
      %5605 = vperm.xlu0 %5604, %v5467
      %v5606 = vpop.permute.xlu0 %5605
      %5609 = vset.pattern.permute.xlu0 0
      %5610 = vperm.xlu0 %5609, %v5468
      %v5611 = vpop.permute.xlu0 %5610
      %5614 = vset.pattern.permute.xlu0 0
      %5615 = vperm.xlu0 %5614, %v5469
      %v5616 = vpop.permute.xlu0 %5615
      %5619 = vset.pattern.permute.xlu0 0
      %5620 = vperm.xlu0 %5619, %v5470
      %v5621 = vpop.permute.xlu0 %5620
      %5624 = vset.pattern.permute.xlu0 0
      %5625 = vperm.xlu0 %5624, %v5471
      %v5626 = vpop.permute.xlu0 %5625
      %5629 = vset.pattern.permute.xlu0 0
      %5630 = vperm.xlu0 %5629, %v5472
      %v5631 = vpop.permute.xlu0 %5630
      %5634 = vset.pattern.permute.xlu0 0
      %5635 = vperm.xlu0 %5634, %v5473
      %v5636 = vpop.permute.xlu0 %5635
      %5639 = vset.pattern.permute.xlu0 0
      %5640 = vperm.xlu0 %5639, %v5474
      %v5641 = vpop.permute.xlu0 %5640
      %5644 = vset.pattern.permute.xlu0 0
      %5645 = vperm.xlu0 %5644, %v5475
      %v5646 = vpop.permute.xlu0 %5645
      %5649 = vset.pattern.permute.xlu0 0
      %5650 = vperm.xlu0 %5649, %v5476
      %v5651 = vpop.permute.xlu0 %5650
      %5654 = vset.pattern.permute.xlu0 0
      %5655 = vperm.xlu0 %5654, %v5477
      %v5656 = vpop.permute.xlu0 %5655
      %v5658 = vmul.f32 %v5406, %v5481
      %v5659 = vmul.f32 %v5407, %v5486
      %v5660 = vmul.f32 %v5408, %v5491
      %v5661 = vmul.f32 %v5409, %v5496
      %v5662 = vmul.f32 %v5410, %v5501
      %v5663 = vmul.f32 %v5411, %v5506
      %v5664 = vmul.f32 %v5412, %v5511
      %v5665 = vmul.f32 %v5413, %v5516
      %v5666 = vmul.f32 %v5414, %v5521
      %v5667 = vmul.f32 %v5415, %v5526
      %v5668 = vmul.f32 %v5416, %v5531
      %v5669 = vmul.f32 %v5417, %v5536
      %v5670 = vmul.f32 %v5418, %v5541
      %v5671 = vmul.f32 %v5419, %v5546
      %v5672 = vmul.f32 %v5420, %v5551
      %v5673 = vmul.f32 %v5421, %v5556
      %v5674 = vmul.f32 %v5422, %v5561
      %v5675 = vmul.f32 %v5423, %v5566
      %v5676 = vmul.f32 %v5424, %v5571
      %v5677 = vmul.f32 %v5425, %v5576
      %v5678 = vmul.f32 %v5426, %v5581
      %v5679 = vmul.f32 %v5427, %v5586
      %v5680 = vmul.f32 %v5428, %v5591
      %v5681 = vmul.f32 %v5429, %v5596
      %v5682 = vmul.f32 %v5430, %v5601
      %v5683 = vmul.f32 %v5431, %v5606
      %v5684 = vmul.f32 %v5432, %v5611
      %v5685 = vmul.f32 %v5433, %v5616
      %v5686 = vmul.f32 %v5434, %v5621
      %v5687 = vmul.f32 %v5435, %v5626
      %v5688 = vmul.f32 %v5436, %v5631
      %v5689 = vmul.f32 %v5437, %v5636
      %v5690 = vmul.f32 %v5438, %v5641
      %v5691 = vmul.f32 %v5439, %v5646
      %v5692 = vmul.f32 %v5440, %v5651
      %v5693 = vmul.f32 %v5441, %v5656
      %v5694 = vadd.f32 %v5658, %v5659
      %v5695 = vadd.f32 %v5694, %v5660
      %v5696 = vadd.f32 %v5695, %v5661
      %v5697 = vadd.f32 %v5696, %v5662
      %v5698 = vadd.f32 %v5697, %v5663
      %v5699 = vadd.f32 %v5698, %v5664
      %v5700 = vadd.f32 %v5699, %v5665
      %v5701 = vadd.f32 %v5700, %v5666
      %v5702 = vadd.f32 %v5701, %v5667
      %v5703 = vadd.f32 %v5702, %v5668
      %v5704 = vadd.f32 %v5703, %v5669
      %v5705 = vadd.f32 %v5704, %v5670
      %v5706 = vadd.f32 %v5705, %v5671
      %v5707 = vadd.f32 %v5706, %v5672
      %v5708 = vadd.f32 %v5707, %v5673
      %v5709 = vadd.f32 %v5708, %v5674
      %v5710 = vadd.f32 %v5709, %v5675
      %v5711 = vadd.f32 %v5710, %v5676
      %v5712 = vadd.f32 %v5711, %v5677
      %v5713 = vadd.f32 %v5712, %v5678
      %v5714 = vadd.f32 %v5713, %v5679
      %v5715 = vadd.f32 %v5714, %v5680
      %v5716 = vadd.f32 %v5715, %v5681
      %v5717 = vadd.f32 %v5716, %v5682
      %v5718 = vadd.f32 %v5717, %v5683
      %v5719 = vadd.f32 %v5718, %v5684
      %v5720 = vadd.f32 %v5719, %v5685
      %v5721 = vadd.f32 %v5720, %v5686
      %v5722 = vadd.f32 %v5721, %v5687
      %v5723 = vadd.f32 %v5722, %v5688
      %v5724 = vadd.f32 %v5723, %v5689
      %v5725 = vadd.f32 %v5724, %v5690
      %v5726 = vadd.f32 %v5725, %v5691
      %v5727 = vadd.f32 %v5726, %v5692
      %v5728 = vadd.f32 %v5727, %v5693
      %v5729 = vrot.slane %v5728, 4
      %v5730 = vadd.f32 %v5728, %v5729
      %v5731 = vrot.slane %v5730, 2
      %v5732 = vadd.f32 %v5730, %v5731
      %v5733 = vrot.slane %v5732, 1
      %v5734 = vadd.f32 %v5732, %v5733
      %5735 = vst [vmem:[%s310] sm:$0x1] %v5734
      %v5736 = vmul.f32 %v5658, %v5658
      %v5737 = vmul.f32 %v5659, %v5659
      %v5738 = vmul.f32 %v5660, %v5660
      %v5739 = vmul.f32 %v5661, %v5661
      %v5740 = vmul.f32 %v5662, %v5662
      %v5741 = vmul.f32 %v5663, %v5663
      %v5742 = vmul.f32 %v5664, %v5664
      %v5743 = vmul.f32 %v5665, %v5665
      %v5744 = vmul.f32 %v5666, %v5666
      %v5745 = vmul.f32 %v5667, %v5667
      %v5746 = vmul.f32 %v5668, %v5668
      %v5747 = vmul.f32 %v5669, %v5669
      %v5748 = vmul.f32 %v5670, %v5670
      %v5749 = vmul.f32 %v5671, %v5671
      %v5750 = vmul.f32 %v5672, %v5672
      %v5751 = vmul.f32 %v5673, %v5673
      %v5752 = vmul.f32 %v5674, %v5674
      %v5753 = vmul.f32 %v5675, %v5675
      %v5754 = vmul.f32 %v5676, %v5676
      %v5755 = vmul.f32 %v5677, %v5677
      %v5756 = vmul.f32 %v5678, %v5678
      %v5757 = vmul.f32 %v5679, %v5679
      %v5758 = vmul.f32 %v5680, %v5680
      %v5759 = vmul.f32 %v5681, %v5681
      %v5760 = vmul.f32 %v5682, %v5682
      %v5761 = vmul.f32 %v5683, %v5683
      %v5762 = vmul.f32 %v5684, %v5684
      %v5763 = vmul.f32 %v5685, %v5685
      %v5764 = vmul.f32 %v5686, %v5686
      %v5765 = vmul.f32 %v5687, %v5687
      %v5766 = vmul.f32 %v5688, %v5688
      %v5767 = vmul.f32 %v5689, %v5689
      %v5768 = vmul.f32 %v5690, %v5690
      %v5769 = vmul.f32 %v5691, %v5691
      %v5770 = vmul.f32 %v5692, %v5692
      %v5771 = vmul.f32 %v5693, %v5693
      %v5772 = vadd.f32 %v5736, %v5737
      %v5773 = vadd.f32 %v5772, %v5738
      %v5774 = vadd.f32 %v5773, %v5739
      %v5775 = vadd.f32 %v5774, %v5740
      %v5776 = vadd.f32 %v5775, %v5741
      %v5777 = vadd.f32 %v5776, %v5742
      %v5778 = vadd.f32 %v5777, %v5743
      %v5779 = vadd.f32 %v5778, %v5744
      %v5780 = vadd.f32 %v5779, %v5745
      %v5781 = vadd.f32 %v5780, %v5746
      %v5782 = vadd.f32 %v5781, %v5747
      %v5783 = vadd.f32 %v5782, %v5748
      %v5784 = vadd.f32 %v5783, %v5749
      %v5785 = vadd.f32 %v5784, %v5750
      %v5786 = vadd.f32 %v5785, %v5751
      %v5787 = vadd.f32 %v5786, %v5752
      %v5788 = vadd.f32 %v5787, %v5753
      %v5789 = vadd.f32 %v5788, %v5754
      %v5790 = vadd.f32 %v5789, %v5755
      %v5791 = vadd.f32 %v5790, %v5756
      %v5792 = vadd.f32 %v5791, %v5757
      %v5793 = vadd.f32 %v5792, %v5758
      %v5794 = vadd.f32 %v5793, %v5759
      %v5795 = vadd.f32 %v5794, %v5760
      %v5796 = vadd.f32 %v5795, %v5761
      %v5797 = vadd.f32 %v5796, %v5762
      %v5798 = vadd.f32 %v5797, %v5763
      %v5799 = vadd.f32 %v5798, %v5764
      %v5800 = vadd.f32 %v5799, %v5765
      %v5801 = vadd.f32 %v5800, %v5766
      %v5802 = vadd.f32 %v5801, %v5767
      %v5803 = vadd.f32 %v5802, %v5768
      %v5804 = vadd.f32 %v5803, %v5769
      %v5805 = vadd.f32 %v5804, %v5770
      %v5806 = vadd.f32 %v5805, %v5771
      %v5807 = vrot.slane %v5806, 4
      %v5808 = vadd.f32 %v5806, %v5807
      %v5809 = vrot.slane %v5808, 2
      %v5810 = vadd.f32 %v5808, %v5809
      %v5811 = vrot.slane %v5810, 1
      %v5812 = vadd.f32 %v5810, %v5811
      %5813 = vst [vmem:[%s317] sm:$0x1] %v5812
      %p5814 = scmp.lt.s32.totalorder %s21, 0
      %s5815 = scalar_select %p5814, %s21, 0
      %p5816 = scmp.lt.s32.totalorder %s22, 1
      %s5817 = scalar_select %p5816, %s22, 1
      %s5818 = smul.addr %s5817, 36
      %s5819 = smul.addr %s5815, 72
      %s5820 = sadd.s32 %s5818, %s5819
      %s5821 = smul.addr %s5820, 4
      %s5822 = scalar_lea.vmem %s3, %s5821
      %p5823 = scmp.lt.s32.totalorder %s21, 0
      %s5824 = scalar_select %p5823, %s21, 0
      %p5825 = scmp.lt.s32.totalorder %s22, 1
      %s5826 = scalar_select %p5825, %s22, 1
      %s5827 = smul.addr %s5824, 2
      %s5828 = sadd.s32 %s5826, %s5827
      %s5829 = scalar_lea.vmem %s4, %s5828
      %p5830 = scmp.lt.s32.totalorder %s21, 0
      %s5831 = scalar_select %p5830, %s21, 0
      %p5832 = scmp.lt.s32.totalorder %s22, 1
      %s5833 = scalar_select %p5832, %s22, 1
      %s5834 = smul.addr %s5831, 2
      %s5835 = sadd.s32 %s5833, %s5834
      %s5836 = scalar_lea.vmem %s5, %s5835
      // Predicated region
      $region33: #{conv_block.1} parent=31 // pred_check
        %p5837 = pneg %p124
      $region34: #{conv_block.1} parent=31 // pred_check_branch
        %5839 = sbr.rel (%p5837) target = $region36
      $region35: #{conv_block.1} parent=31 // pred_region
        _
      $region36: #{conv_block.1} parent=31 // pred_fallthru
        _
      // Predicated region
      $region37: #{conv_block.1} parent=31 // pred_check
        %p5840 = pneg %p152
      $region38: #{conv_block.1} parent=31 // pred_check_branch
        %5842 = sbr.rel (%p5840) target = $region40
      $region39: #{conv_block.1} parent=31 // pred_region
        _
      $region40: #{conv_block.1} parent=31 // pred_fallthru
        _
      // Predicated region
      $region41: #{conv_block.1} parent=31 // pred_check
        %p5843 = pneg %p180
      $region42: #{conv_block.1} parent=31 // pred_check_branch
        %5845 = sbr.rel (%p5843) target = $region44
      $region43: #{conv_block.1} parent=31 // pred_region
        _
      $region44: #{conv_block.1} parent=31 // pred_fallthru
        _
    $region32: #{conv_block.1} parent=5 // pred_fallthru
      _
    %p5846 = scmp.le.s32.totalorder 2, %s12
    // Predicated region
    $region45: #{conv_block.1} parent=5 // pred_check
      %p5847 = pneg %p5846
    $region46: #{conv_block.1} parent=5 // pred_check_branch
      %5849 = sbr.rel (%p5847) target = $region48
    $region47: #{conv_block.1} parent=5 // pred_region
      %s5850 = ssub.s32 %s12, 2
      // Predicated region
      $region49: #{conv_block.1} parent=47 // pred_check
        %p5851 = pneg %p130
      $region50: #{conv_block.1} parent=47 // pred_check_branch
        %5853 = sbr.rel (%p5851) target = $region52
      $region51: #{conv_block.1} parent=47 // pred_region
        %p5854 = scmp.lt.s32.totalorder %s23, 0
        %s5855 = scalar_select %p5854, %s23, 0
        %p5856 = scmp.lt.s32.totalorder %s24, 1
        %s5857 = scalar_select %p5856, %s24, 1
        %s5858 = smul.addr %s5857, 36
        %s5859 = smul.addr %s5855, 72
        %s5860 = sadd.s32 %s5858, %s5859
        %s5861 = smul.addr %s5860, 4
        %s5862 = scalar_lea.vmem %s3, %s5861
      $region52: #{conv_block.1} parent=47 // pred_fallthru
        _
      // Predicated region
      $region53: #{conv_block.1} parent=47 // pred_check
        %p5863 = pneg %p158
      $region54: #{conv_block.1} parent=47 // pred_check_branch
        %5865 = sbr.rel (%p5863) target = $region56
      $region55: #{conv_block.1} parent=47 // pred_region
        %p5866 = scmp.lt.s32.totalorder %s23, 0
        %s5867 = scalar_select %p5866, %s23, 0
        %p5868 = scmp.lt.s32.totalorder %s24, 1
        %s5869 = scalar_select %p5868, %s24, 1
        %s5870 = smul.addr %s5867, 2
        %s5871 = sadd.s32 %s5869, %s5870
        %s5872 = scalar_lea.vmem %s4, %s5871
      $region56: #{conv_block.1} parent=47 // pred_fallthru
        _
      // Predicated region
      $region57: #{conv_block.1} parent=47 // pred_check
        %p5873 = pneg %p186
      $region58: #{conv_block.1} parent=47 // pred_check_branch
        %5875 = sbr.rel (%p5873) target = $region60
      $region59: #{conv_block.1} parent=47 // pred_region
        %p5876 = scmp.lt.s32.totalorder %s23, 0
        %s5877 = scalar_select %p5876, %s23, 0
        %p5878 = scmp.lt.s32.totalorder %s24, 1
        %s5879 = scalar_select %p5878, %s24, 1
        %s5880 = smul.addr %s5877, 2
        %s5881 = sadd.s32 %s5879, %s5880
        %s5882 = scalar_lea.vmem %s5, %s5881
      $region60: #{conv_block.1} parent=47 // pred_fallthru
        _
    $region48: #{conv_block.1} parent=5 // pred_fallthru
      _
  $region6: #{conv_block.1} parent=0 // loop_footer
    %s16 = sadd.s32 1, %s12
  $region7: #{conv_block.1} parent=0 // loop_footer_branch
    %11 = sbr.rel target = $region3
  $region8: #{conv_block.1} parent=0 // loop_exit
    _

</llo_original>
